<compile_context>
chip_gen: v7x
topology: tpu7x:2x2x1
jax: 0.10.0
libtpu: 0.0.40
codegen_flags: <defaults>
</compile_context>

<pallas_src>
import functools
import math

import jax
import jax.numpy as jnp
from jax.experimental import pallas as pl
from jax.experimental.pallas import tpu as pltpu


# ---------------------------------------------------------------------------
# Tiled linear:  out[b, i] = x[b, i] @ W + bias
# grid = (B, M tiles); W and bias use grid-invariant index maps (one DMA, then
# resident in VMEM), full K and full N per step -> single MXU dot, no f32
# accumulator round-trip through VMEM scratch.
# ---------------------------------------------------------------------------
def _linear_kernel(x_ref, w_ref, b_ref, o_ref):
    o_ref[0] = (jnp.dot(x_ref[0], w_ref[...], preferred_element_type=jnp.float32)
                + b_ref[...]).astype(o_ref.dtype)


def _linear(x_bf16, w_bf16, bias_f32, *, out_dtype, block_m=256):
    B, T, K = x_bf16.shape
    K2, N = w_bf16.shape
    assert K == K2
    bm = min(block_m, T)
    assert T % bm == 0, "T must divide the linear M tile"

    bias2 = bias_f32.reshape(1, N).astype(jnp.float32)

    flops = 2 * B * T * K * N
    bytes_accessed = (B * T * K * 2 + K * N * 2 + N * 4
                      + B * T * N * jnp.dtype(out_dtype).itemsize)

    return pl.pallas_call(
        _linear_kernel,
        out_shape=jax.ShapeDtypeStruct((B, T, N), out_dtype),
        grid_spec=pltpu.PrefetchScalarGridSpec(
            num_scalar_prefetch=0,
            grid=(B, T // bm),
            in_specs=[
                pl.BlockSpec((1, bm, K), lambda b, i: (b, i, 0)),
                # Full-K x full-N weight, index map ignores (b, i): DMA'd once, resident.
                pl.BlockSpec((K, N), lambda b, i: (0, 0)),
                pl.BlockSpec((1, N), lambda b, i: (0, 0)),
            ],
            out_specs=pl.BlockSpec((1, bm, N), lambda b, i: (b, i, 0)),
        ),
        compiler_params=pltpu.CompilerParams(
            dimension_semantics=("parallel", "parallel"),
            vmem_limit_bytes=32 * 1024 * 1024),
        cost_estimate=pl.CostEstimate(flops=flops, transcendentals=0,
                                      bytes_accessed=bytes_accessed),
    )(x_bf16, w_bf16, bias2)


# ---------------------------------------------------------------------------
# Flash attention over the packed (B, T, 3C) qkv tensor.
# grid = (B, n_head, step) where step enumerates only the (q-tile, kv-tile)
# pairs at/below the diagonal (all pairs when non-causal) via scalar-prefetch
# lookup tables.  K/V are full-T blocks per head, resident across all steps.
# ---------------------------------------------------------------------------
def _build_step_tables(n_q, n_k, block_q, block_k, is_causal):
    qi_l, ki_l, last_l = [], [], []
    for qi in range(n_q):
        if is_causal:
            last_row = qi * block_q + block_q - 1
            nk_q = min(n_k, last_row // block_k + 1)
        else:
            nk_q = n_k
        for ki in range(nk_q):
            qi_l.append(qi)
            ki_l.append(ki)
            last_l.append(1 if ki == nk_q - 1 else 0)
    return (jnp.asarray(qi_l, jnp.int32),
            jnp.asarray(ki_l, jnp.int32),
            jnp.asarray(last_l, jnp.int32))


def _flash_attn_kernel(qi_tab, ki_tab, last_tab, q_ref, k_ref, v_ref, o_ref,
                       m_sc, l_sc, acc_sc, *, is_causal, block_q, block_k):
    step = pl.program_id(2)
    qi = qi_tab[step]
    ki = ki_tab[step]

    @pl.when(ki == 0)
    def _():
        m_sc[...] = jnp.full_like(m_sc, -jnp.inf)
        l_sc[...] = jnp.zeros_like(l_sc)
        acc_sc[...] = jnp.zeros_like(acc_sc)

    q_start = qi * block_q
    k_start = pl.multiple_of(ki * block_k, block_k)

    # q is already scaled by 1/sqrt(hd) (folded into the QKV projection weights).
    q = q_ref[0]                                  # (bq, hd) bf16
    k = k_ref[0, pl.ds(k_start, block_k), :]      # (bk, hd) bf16, sliced from resident full-T
    v = v_ref[0, pl.ds(k_start, block_k), :]      # (bk, hd) bf16

    def _tile(masked):
        s = jax.lax.dot_general(q, k, (((1,), (1,)), ((), ())),
                                preferred_element_type=jnp.float32)
        if masked:
            # Tile-local mask from offset iotas (only on diagonal-straddling tiles).
            row = q_start + jax.lax.broadcasted_iota(jnp.int32, (block_q, block_k), 0)
            col = k_start + jax.lax.broadcasted_iota(jnp.int32, (block_q, block_k), 1)
            s = jnp.where(col <= row, s, jnp.float32(-1e30))
        m_prev = m_sc[...]
        m_new = jnp.maximum(m_prev, jnp.max(s, axis=-1, keepdims=True))
        alpha = jnp.exp(m_prev - m_new)           # f32 softmax math
        p = jnp.exp(s - m_new)
        l_sc[...] = alpha * l_sc[...] + jnp.sum(p, axis=-1, keepdims=True)
        acc_sc[...] = alpha * acc_sc[...] + jax.lax.dot_general(
            p.astype(jnp.bfloat16), v, (((1,), (0,)), ((), ())),
            preferred_element_type=jnp.float32)
        m_sc[...] = m_new

    if is_causal:
        # Tiles entirely above the diagonal never reach the kernel (step tables),
        # so the only split needed is straddling (mask) vs fully-below (no mask).
        straddles = (k_start + block_k - 1) > q_start

        @pl.when(straddles)
        def _():
            _tile(masked=True)

        @pl.when(jnp.logical_not(straddles))
        def _():
            _tile(masked=False)
    else:
        _tile(masked=False)

    @pl.when(last_tab[step] == 1)
    def _():
        # Normalize once per query tile; approx reciprocal uses the idle EUP slot.
        o_ref[0] = (acc_sc[...] * pl.reciprocal(l_sc[...], approx=True)
                    ).astype(o_ref.dtype)


def _flash_attention(qkv, *, n_head, is_causal, out_dtype,
                     block_q=256, block_k=512):
    B, T, C3 = qkv.shape
    C = C3 // 3
    assert C % n_head == 0
    hd = C // n_head
    # Head slices are addressed as whole lane blocks of the (T, 3C) qkv tensor.
    assert hd % 128 == 0, "head_dim must be a multiple of 128"
    # TODO(synk): support head_dim=64 by packing two heads per 128-lane block.
    bq = min(block_q, T)
    bk = min(block_k, T)
    assert T % bq == 0 and T % bk == 0, "T must divide the attention tile sizes"

    n_q, n_k = T // bq, T // bk
    qi_tab, ki_tab, last_tab = _build_step_tables(n_q, n_k, bq, bk, is_causal)
    n_steps = int(qi_tab.shape[0])

    kernel = functools.partial(_flash_attn_kernel, is_causal=is_causal,
                               block_q=bq, block_k=bk)

    flops = 4 * B * n_head * n_steps * bq * bk * hd        # only tiles actually computed
    transcendentals = B * n_head * n_steps * bq * bk
    # Q + K + V read once (K/V resident per head), output written once, all bf16.
    bytes_accessed = (B * T * 3 * C + B * T * C) * 2

    return pl.pallas_call(
        kernel,
        out_shape=jax.ShapeDtypeStruct((B, T, C), out_dtype),
        grid_spec=pltpu.PrefetchScalarGridSpec(
            num_scalar_prefetch=3,
            grid=(B, n_head, n_steps),
            in_specs=[
                # q of head h -> lane block h of (T, 3C); changes only when the q tile changes.
                pl.BlockSpec((1, bq, hd), lambda b, h, s, qt, kt, lt: (b, qt[s], h)),
                # k / v of head h -> full-T lane blocks n_head+h / 2*n_head+h; step-invariant
                # index maps => DMA'd once per (b, h) and kept resident in VMEM.
                pl.BlockSpec((1, T, hd), lambda b, h, s, qt, kt, lt: (b, 0, n_head + h)),
                pl.BlockSpec((1, T, hd), lambda b, h, s, qt, kt, lt: (b, 0, 2 * n_head + h)),
            ],
            out_specs=pl.BlockSpec((1, bq, hd), lambda b, h, s, qt, kt, lt: (b, qt[s], h)),
            scratch_shapes=[
                pltpu.VMEM((bq, 1), jnp.float32),    # running max
                pltpu.VMEM((bq, 1), jnp.float32),    # running denominator
                pltpu.VMEM((bq, hd), jnp.float32),   # running accumulator
            ],
        ),
        compiler_params=pltpu.CompilerParams(
            dimension_semantics=("parallel", "parallel", "arbitrary"),
            vmem_limit_bytes=32 * 1024 * 1024),
        cost_estimate=pl.CostEstimate(flops=flops,
                                      transcendentals=transcendentals,
                                      bytes_accessed=bytes_accessed),
    )(qi_tab, ki_tab, last_tab, qkv, qkv, qkv)


# ---------------------------------------------------------------------------
# Full SelfAttention forward (dropout = identity).
# x: (B, T, C); w_qkv: (C, 3C); b_qkv: (3C,); w_proj: (C, C); b_proj: (C,)
# ---------------------------------------------------------------------------
def self_attention(x, w_qkv, b_qkv, w_proj, b_proj, *, n_head, is_causal,
                   block_q=256, block_k=512):
    # TODO(synk): attn_dropout / resid_dropout omitted (eval-mode identity).
    # TODO(synk): explicit attn_mask argument not supported (is_causal path only).
    B, T, C = x.shape
    hd = C // n_head
    scale = 1.0 / math.sqrt(hd)

    # Fold 1/sqrt(head_dim) into the Q projection so the kernel never scales scores.
    w_qkv_s = w_qkv.at[:, :C].multiply(scale)
    b_qkv_s = b_qkv.at[:C].multiply(scale)

    x_bf = x.astype(jnp.bfloat16)                 # cast once; halves the x HBM read
    w_qkv_bf = w_qkv_s.astype(jnp.bfloat16)
    w_proj_bf = w_proj.astype(jnp.bfloat16)

    qkv = _linear(x_bf, w_qkv_bf, b_qkv_s, out_dtype=jnp.bfloat16)
    y = _flash_attention(qkv, n_head=n_head, is_causal=is_causal,
                         out_dtype=jnp.bfloat16,
                         block_q=block_q, block_k=block_k)
    return _linear(y, w_proj_bf, b_proj, out_dtype=x.dtype)


def self_attention_ref(x, w_qkv, b_qkv, w_proj, b_proj, *, n_head, is_causal):
    """Pure-JAX f32 reference matching the PyTorch forward (dropout = identity)."""
    B, T, C = x.shape
    hd = C // n_head
    qkv = x @ w_qkv + b_qkv
    q, k, v = jnp.split(qkv, 3, axis=-1)
    q = q.reshape(B, T, n_head, hd).transpose(0, 2, 1, 3)
    k = k.reshape(B, T, n_head, hd).transpose(0, 2, 1, 3)
    v = v.reshape(B, T, n_head, hd).transpose(0, 2, 1, 3)
    s = jnp.einsum('bhtd,bhsd->bhts', q, k) / math.sqrt(hd)
    if is_causal:
        mask = jnp.tril(jnp.ones((T, T), dtype=bool))
        s = jnp.where(mask[None, None], s, -1e30)
    p = jax.nn.softmax(s, axis=-1)
    y = jnp.einsum('bhts,bhsd->bhtd', p, v)
    y = y.transpose(0, 2, 1, 3).reshape(B, T, C)
    return y @ w_proj + b_proj


if __name__ == "__main__":
    # Sizes consistent with the module's Decoder/EncoderConfig: n_embd=512, n_head=4
    # (head_dim=128); modest sequence length for the demo.
    B, T, C, n_head = 2, 512, 512, 4

    key = jax.random.PRNGKey(0)
    kx, k1, k2, k3, k4 = jax.random.split(key, 5)

    x = jax.random.normal(kx, (B, T, C), dtype=jnp.float32)
    w_qkv = jax.random.normal(k1, (C, 3 * C), dtype=jnp.float32) * 0.02
    b_qkv = jax.random.normal(k2, (3 * C,), dtype=jnp.float32) * 0.02
    w_proj = jax.random.normal(k3, (C, C), dtype=jnp.float32) * 0.02
    b_proj = jax.random.normal(k4, (C,), dtype=jnp.float32) * 0.02

    # Exercise the causal (decoder self-attn) and non-causal (encoder) paths, with
    # both the v6e/v7x default tiles and smaller (v5e-style) tiles that hit the
    # multi-kv-tile accumulation + masked/unmasked split paths.
    for is_causal in (True, False):
        ref = self_attention_ref(x, w_qkv, b_qkv, w_proj, b_proj,
                                 n_head=n_head, is_causal=is_causal)
        for bq, bk in ((256, 512), (128, 256)):
            out = self_attention(x, w_qkv, b_qkv, w_proj, b_proj,
                                 n_head=n_head, is_causal=is_causal,
                                 block_q=bq, block_k=bk)
            out = jax.block_until_ready(out)
            assert out.shape == (B, T, C)
            max_err = float(jnp.max(jnp.abs(out.astype(jnp.float32) - ref)))
            assert jnp.allclose(out.astype(jnp.float32), ref, atol=2e-2, rtol=2e-2), (
                f"mismatch vs reference (is_causal={is_causal}, bq={bq}, bk={bk}, "
                f"max_abs_err={max_err})")

    print("KERNEL_OK")
</pallas_src>

<mosaic_0001>
module attributes {stable_mosaic.version = 11 : i64} {
  func.func @_linear_kernel(%arg0: i32, %arg1: i32, %arg2: memref<1x256x512xbf16, #tpu.memory_space<vmem>>, %arg3: memref<512x1536xbf16, #tpu.memory_space<vmem>>, %arg4: memref<1x1536xf32, #tpu.memory_space<vmem>>, %arg5: memref<1x256x1536xbf16, #tpu.memory_space<vmem>>) attributes {dimension_semantics = [#tpu.dimension_semantics<parallel>, #tpu.dimension_semantics<parallel>], iteration_bounds = array<i64: 2, 2>, scalar_prefetch = 0 : i64, scratch_operands = 0 : i64, tpu.core_type = #tpu.core_type<tc>, window_params = [{transform_indices = @transform_0, window_bounds = array<i64: 1, 256, 512>}, {pipeline_mode = #tpu.pipeline_mode<synchronous>, transform_indices = @transform_1, window_bounds = array<i64: 512, 1536>}, {pipeline_mode = #tpu.pipeline_mode<synchronous>, transform_indices = @transform_2, window_bounds = array<i64: 1, 1536>}, {transform_indices = @transform_3, window_bounds = array<i64: 1, 256, 1536>}]} {
    %c0 = arith.constant 0 : index
    %c0_0 = arith.constant 0 : index
    %c0_1 = arith.constant 0 : index
    %0 = vector.load %arg2[%c0, %c0_0, %c0_1] : memref<1x256x512xbf16, #tpu.memory_space<vmem>>, vector<1x256x512xbf16>
    %1 = vector.shape_cast %0 : vector<1x256x512xbf16> to vector<256x512xbf16>
    %c0_2 = arith.constant 0 : index
    %c0_3 = arith.constant 0 : index
    %2 = vector.load %arg3[%c0_2, %c0_3] : memref<512x1536xbf16, #tpu.memory_space<vmem>>, vector<512x1536xbf16>
    %cst = arith.constant dense<0.000000e+00> : vector<256x1536xf32>
    %3 = tpu.matmul %1, %2, %cst {dimension_numbers = #tpu.dot_dimension_numbers<[1], [0], [0], [1], [0, 0, 1, 1], [], []>} : vector<256x512xbf16>, vector<512x1536xbf16>, vector<256x1536xf32> -> vector<256x1536xf32>
    %c0_4 = arith.constant 0 : index
    %c0_5 = arith.constant 0 : index
    %4 = vector.load %arg4[%c0_4, %c0_5] : memref<1x1536xf32, #tpu.memory_space<vmem>>, vector<1x1536xf32>
    %5 = vector.broadcast %4 : vector<1x1536xf32> to vector<256x1536xf32>
    %6 = arith.addf %3, %5 : vector<256x1536xf32>
    %7 = arith.truncf %6 : vector<256x1536xf32> to vector<256x1536xbf16>
    %c0_6 = arith.constant 0 : index
    %c0_7 = arith.constant 0 : index
    %c0_8 = arith.constant 0 : index
    %8 = vector.load %arg5[%c0_6, %c0_7, %c0_8] : memref<1x256x1536xbf16, #tpu.memory_space<vmem>>, vector<1x256x1536xbf16>
    %9 = vector.shape_cast %8 : vector<1x256x1536xbf16> to vector<256x1536xbf16>
    %10 = vector.shape_cast %7 : vector<256x1536xbf16> to vector<1x256x1536xbf16>
    tpu.vector_store %arg5[%c0_6, %c0_7, %c0_8], %10 {strides = array<i32>} : memref<1x256x1536xbf16, #tpu.memory_space<vmem>>, vector<1x256x1536xbf16>,
    return
  }
  func.func @transform_0(%arg0: i32, %arg1: i32) -> (i32, i32, i32) {
    %c0_i32 = arith.constant 0 : i32
    %c0_i32_0 = arith.constant 0 : i32
    return %arg0, %arg1, %c0_i32 : i32, i32, i32
  }
  func.func @transform_1(%arg0: i32, %arg1: i32) -> (i32, i32) {
    %c0_i32 = arith.constant 0 : i32
    %c0_i32_0 = arith.constant 0 : i32
    %c0_i32_1 = arith.constant 0 : i32
    return %c0_i32, %c0_i32_0 : i32, i32
  }
  func.func @transform_2(%arg0: i32, %arg1: i32) -> (i32, i32) {
    %c0_i32 = arith.constant 0 : i32
    %c0_i32_0 = arith.constant 0 : i32
    %c0_i32_1 = arith.constant 0 : i32
    return %c0_i32, %c0_i32_0 : i32, i32
  }
  func.func @transform_3(%arg0: i32, %arg1: i32) -> (i32, i32, i32) {
    %c0_i32 = arith.constant 0 : i32
    %c0_i32_0 = arith.constant 0 : i32
    return %arg0, %arg1, %c0_i32 : i32, i32, i32
  }
}

</mosaic_0001>

<llo_original>
// kernel: tpu_custom_call.1
$region0: #{tpu_custom_call.1}
  #allocation0 [shape = 'u32[]', space=smem, size = 0x4, offset = 0x4, fixed_abs, tag = 'smem constant byte address 0x4 - core index']
  #allocation1 [shape = 'u32[144,128]{1,0:T(1,128)}', space=vmem, size = 0x12000, scoped, tag = 'internal scratch']
  %s0 = inlined_call_operand.hbm [shape: bf16[2,512,512], index: 0, kind: input, shape index: {}]
  %s1 = inlined_call_operand.hbm [shape: bf16[512,1536], index: 1, kind: input, shape index: {}]
  %s2 = inlined_call_operand.hbm [shape: f32[1,1536], index: 2, kind: input, shape index: {}]
  %s3 = inlined_call_operand.hbm [shape: bf16[2,512,1536], index: 3, kind: output, shape index: {}]
  %s4 = sld [smem:[#allocation0]]
  $region57: #{tpu_custom_call.1} parent=0
    _
  %s6 = ssub.s32 1, %s4
  %s7 = scalar_select 0, %s6, %s4
  $region1: #{tpu_custom_call.1} parent=0
    #allocation2 [shape = 'u8[524288]{0}', space=vmem, size = 0x80000, scoped, tag = 'input window, operand 0']
    #allocation3 [shape = 's32[2]{0}', space=sflag, size = 0x8, scoped, tag = 'scoped memory for tpu_custom_call.1']
    #allocation4 [shape = 's32[2]{0}', space=sflag, size = 0x8, scoped, tag = 'scoped memory for tpu_custom_call.1']
    #allocation5 [shape = 'u8[1572864]{0}', space=vmem, size = 0x180000, scoped, tag = 'input window, operand 1, single buffered']
    #allocation6 [shape = 's32[1]{0}', space=sflag, size = 0x4, scoped, tag = 'scoped memory for tpu_custom_call.1']
    #allocation7 [shape = 'u8[6144]{0}', space=vmem, size = 0x1800, scoped, tag = 'input window, operand 2, single buffered']
    #allocation8 [shape = 'u8[1572864]{0}', space=vmem, size = 0x180000, scoped, tag = 'output window, operand 0']
    %8 = vsyncpa [#allocation3], 0
    %s9 = scalar_lea.sflag [#allocation3], 1
    %10 = vsyncpa %s9, 0
    %11 = vsyncpa [#allocation6], 0
    %12 = vsyncpa [#allocation4], 0
    %s13 = scalar_lea.sflag [#allocation4], 1
    %14 = vsyncpa %s13, 0
    loop: start=0, step=1, limit=6
    $region2: #{tpu_custom_call.1} parent=1 // loop_pre_header
      _
    $region3: #{tpu_custom_call.1} parent=1 // loop_header
      %s16 = sphi 0, %s20
      %p17 = scmp.ge.s32.totalorder %s16, 6
      %s23 = sphi 0, %s35
      %s24 = sphi 0, %s31
      %s25 = sphi 0, %s23
      %s26 = sphi 0, %s24
      %s27 = sphi 0, %s25
      %s28 = sphi 0, %s26
      %s40 = sphi 0, %s42
      %s43 = sphi 0, %s40
      %s44 = sphi 0, %s43
      %s60 = sphi 0, %s44
      %s64 = sphi 0, %s64
      %s66 = sphi 0, %s64
      %s67 = sphi 0, %s66
      %s81 = sphi 0, %s67
      %s85 = sphi 0, %s85
      %s87 = sphi 0, %s85
      %s88 = sphi 0, %s87
      %s102 = sphi 0, %s88
      %s110 = sphi 0, %s112
      %s113 = sphi 0, %s110
      %s114 = sphi 0, %s113
      %s130 = sphi 0, %s114
    $region4: #{tpu_custom_call.1} parent=1 // loop_header_branch
      %19 = sbr.rel (%p17) target = $region8
    $region5: #{tpu_custom_call.1} parent=1 // loop_body
      %s21 = ssub.s32 %s16, 1
      %s22 = ssub.s32 %s16, 2
      %s29 = sadd.s32 1, %s24
      %p30 = scmp.ge.s32.totalorder %s29, 2
      %s31 = scalar_select %p30, 0, %s29
      %s32 = sadd.s32 1, %s23
      %s33 = scalar_select %p30, %s32, %s23
      %p34 = scmp.ge.s32.totalorder %s33, 2
      %s35 = scalar_select %p34, 0, %s33
      %s36 = ssub.s32 %s23, %s35
      %s37 = ssub.s32 %s24, %s31
      %s38 = sor.u32 %s36, %s37
      %p39 = scmp.eq.s32.totalorder %s38, 0
      %s41 = sadd.s32 %s40, 1
      %s42 = scalar_select %p39, %s40, %s41
      %p45 = pneg %p39
      %p46 = scmp.eq.s32.totalorder %s16, 3
      %p47 = por %p45, %p46
      %p48 = scmp.ne.s32.totalorder %s40, %s43
      %p49 = scmp.eq.s32.totalorder %s16, 0
      %p50 = por %p48, %p49
      %p51 = scmp.ne.s32.totalorder %s40, %s43
      %p52 = scmp.eq.s32.totalorder %s21, 3
      %p53 = por %p51, %p52
      %p54 = scmp.ne.s32.totalorder %s43, %s44
      %p55 = scmp.eq.s32.totalorder %s21, 0
      %p56 = por %p54, %p55
      %p57 = scmp.ne.s32.totalorder %s43, %s44
      %p58 = scmp.eq.s32.totalorder %s22, 3
      %p59 = por %p57, %p58
      %p61 = scmp.ne.s32.totalorder %s44, %s60
      %p62 = scmp.eq.s32.totalorder %s22, 0
      %p63 = por %p61, %p62
      %s65 = sadd.s32 %s64, 1
      %p68 = scmp.eq.s32.totalorder %s16, 3
      %p69 = scmp.ne.s32.totalorder %s64, %s66
      %p70 = scmp.eq.s32.totalorder %s16, 0
      %p71 = por %p69, %p70
      %p72 = scmp.ne.s32.totalorder %s64, %s66
      %p73 = scmp.eq.s32.totalorder %s21, 3
      %p74 = por %p72, %p73
      %p75 = scmp.ne.s32.totalorder %s66, %s67
      %p76 = scmp.eq.s32.totalorder %s21, 0
      %p77 = por %p75, %p76
      %p78 = scmp.ne.s32.totalorder %s66, %s67
      %p79 = scmp.eq.s32.totalorder %s22, 3
      %p80 = por %p78, %p79
      %p82 = scmp.ne.s32.totalorder %s67, %s81
      %p83 = scmp.eq.s32.totalorder %s22, 0
      %p84 = por %p82, %p83
      %s86 = sadd.s32 %s85, 1
      %p89 = scmp.eq.s32.totalorder %s16, 3
      %p90 = scmp.ne.s32.totalorder %s85, %s87
      %p91 = scmp.eq.s32.totalorder %s16, 0
      %p92 = por %p90, %p91
      %p93 = scmp.ne.s32.totalorder %s85, %s87
      %p94 = scmp.eq.s32.totalorder %s21, 3
      %p95 = por %p93, %p94
      %p96 = scmp.ne.s32.totalorder %s87, %s88
      %p97 = scmp.eq.s32.totalorder %s21, 0
      %p98 = por %p96, %p97
      %p99 = scmp.ne.s32.totalorder %s87, %s88
      %p100 = scmp.eq.s32.totalorder %s22, 3
      %p101 = por %p99, %p100
      %p103 = scmp.ne.s32.totalorder %s88, %s102
      %p104 = scmp.eq.s32.totalorder %s22, 0
      %p105 = por %p103, %p104
      %s106 = ssub.s32 %s23, %s35
      %s107 = ssub.s32 %s24, %s31
      %s108 = sor.u32 %s106, %s107
      %p109 = scmp.eq.s32.totalorder %s108, 0
      %s111 = sadd.s32 %s110, 1
      %s112 = scalar_select %p109, %s110, %s111
      %p115 = pneg %p109
      %p116 = scmp.eq.s32.totalorder %s16, 3
      %p117 = por %p115, %p116
      %p118 = scmp.ne.s32.totalorder %s110, %s113
      %p119 = scmp.eq.s32.totalorder %s16, 0
      %p120 = por %p118, %p119
      %p121 = scmp.ne.s32.totalorder %s110, %s113
      %p122 = scmp.eq.s32.totalorder %s21, 3
      %p123 = por %p121, %p122
      %p124 = scmp.ne.s32.totalorder %s113, %s114
      %p125 = scmp.eq.s32.totalorder %s21, 0
      %p126 = por %p124, %p125
      %p127 = scmp.ne.s32.totalorder %s113, %s114
      %p128 = scmp.eq.s32.totalorder %s22, 3
      %p129 = por %p127, %p128
      %p131 = scmp.ne.s32.totalorder %s114, %s130
      %p132 = scmp.eq.s32.totalorder %s22, 0
      %p133 = por %p131, %p132
      %p134 = scmp.le.s32.totalorder 1, %s16
      %p135 = scmp.lt.s32.totalorder %s16, 5
      %p136 = pnand %p134, %p135
      %p137 = pneg %p136
      // Predicated region
      $region9: #{tpu_custom_call.1} parent=5 // pred_check
        _
      $region10: #{tpu_custom_call.1} parent=5 // pred_check_branch
        %139 = sbr.rel (%p136) target = $region12
      $region11: #{tpu_custom_call.1} parent=5 // pred_region
        %s140 = ssub.s32 %s16, 1
        // Predicated region
        $region13: #{tpu_custom_call.1} parent=11 // pred_check
          %p141 = pneg %p77
        $region14: #{tpu_custom_call.1} parent=11 // pred_check_branch
          %143 = sbr.rel (%p141) target = $region16
        $region15: #{tpu_custom_call.1} parent=11 // pred_region
          %s145 = ssub.s32 49152, 49152
          %146 = vsyncadd [#allocation6], %s145
          %s147 = sshll.u32 [#allocation5], 4
          %s148 = int_to_ptr.vmem [resolvable:$true] %s147
          %153 = dma.hbm_to_vmem [thread:$0]  %s1, 49152, %s148, [#allocation6], 768, 768, 48
        $region16: #{tpu_custom_call.1} parent=11 // pred_fallthru
          _
        // Predicated region
        $region17: #{tpu_custom_call.1} parent=11 // pred_check
          %p154 = pneg %p98
        $region18: #{tpu_custom_call.1} parent=11 // pred_check_branch
          %156 = sbr.rel (%p154) target = $region20
        $region19: #{tpu_custom_call.1} parent=11 // pred_region
          %s158 = ssub.s32 192, 192
          %159 = vsyncadd [#allocation6], %s158
          %s161 = sshll.u32 [#allocation7], 4
          %s162 = int_to_ptr.vmem [resolvable:$true] %s161
          %164 = dma.hbm_to_vmem [thread:$0]  %s2, 192, %s162, [#allocation6]
        $region20: #{tpu_custom_call.1} parent=11 // pred_fallthru
          _
      $region12: #{tpu_custom_call.1} parent=5 // pred_fallthru
        _
      %p165 = scmp.lt.s32.totalorder %s16, 4
      // Predicated region
      $region21: #{tpu_custom_call.1} parent=5 // pred_check
        %p166 = pneg %p165
      $region22: #{tpu_custom_call.1} parent=5 // pred_check_branch
        %168 = sbr.rel (%p166) target = $region24
      $region23: #{tpu_custom_call.1} parent=5 // pred_region
        // Predicated region
        $region25: #{tpu_custom_call.1} parent=23 // pred_check
          %p169 = pneg %p50
        $region26: #{tpu_custom_call.1} parent=23 // pred_check_branch
          %171 = sbr.rel (%p169) target = $region28
        $region27: #{tpu_custom_call.1} parent=23 // pred_region
          %s172 = sand.u32 %s40, 1
          %s173 = scalar_lea.sflag [#allocation3], %s172
          %s174 = sand.u32 %s40, 1
          %s175 = smul.addr %s174, 512
          %s176 = scalar_lea.vmem [#allocation2], %s175
          %s177 = smul.u32 32, %s24
          %s179 = ssub.s32 8192, 8192
          %180 = vsyncadd %s173, %s179
          %s181 = smul.addr %s177, 4
          %s182 = smul.addr %s23, 256
          %s183 = sadd.s32 %s181, %s182
          %s184 = smul.addr %s183, 64
          %s185 = scalar_lea.hbm %s0, %s184
          %s186 = sshll.u32 %s176, 4
          %s187 = int_to_ptr.vmem [resolvable:$true] %s186
          %192 = dma.hbm_to_vmem [thread:$0]  %s185, 8192, %s187, %s173, 256, 256, 16
        $region28: #{tpu_custom_call.1} parent=23 // pred_fallthru
          _
      $region24: #{tpu_custom_call.1} parent=5 // pred_fallthru
        _
      %p193 = scmp.le.s32.totalorder 1, %s16
      %p194 = scmp.lt.s32.totalorder %s16, 5
      %p195 = pnand %p193, %p194
      %p196 = pneg %p195
      // Predicated region
      $region29: #{tpu_custom_call.1} parent=5 // pred_check
        _
      $region30: #{tpu_custom_call.1} parent=5 // pred_check_branch
        %198 = sbr.rel (%p195) target = $region32
      $region31: #{tpu_custom_call.1} parent=5 // pred_region
        %s199 = ssub.s32 %s16, 1
        %s200 = sand.u32 %s43, 1
        %s201 = scalar_lea.sflag [#allocation3], %s200
        %s202 = sand.u32 %s43, 1
        %s203 = smul.addr %s202, 512
        %s204 = scalar_lea.vmem [#allocation2], %s203
        // Predicated region
        $region33: #{tpu_custom_call.1} parent=31 // pred_check
          %p205 = pneg %p56
        $region34: #{tpu_custom_call.1} parent=31 // pred_check_branch
          %207 = sbr.rel (%p205) target = $region36
        $region35: #{tpu_custom_call.1} parent=31 // pred_region
          %208 = dma.done %s201, 8192
        $region36: #{tpu_custom_call.1} parent=31 // pred_fallthru
          _
        // Predicated region
        $region37: #{tpu_custom_call.1} parent=31 // pred_check
          %p209 = pneg %p77
        $region38: #{tpu_custom_call.1} parent=31 // pred_check_branch
          %211 = sbr.rel (%p209) target = $region40
        $region39: #{tpu_custom_call.1} parent=31 // pred_region
          %212 = dma.done [#allocation6], 49152
        $region40: #{tpu_custom_call.1} parent=31 // pred_fallthru
          _
        // Predicated region
        $region41: #{tpu_custom_call.1} parent=31 // pred_check
          %p213 = pneg %p98
        $region42: #{tpu_custom_call.1} parent=31 // pred_check_branch
          %215 = sbr.rel (%p213) target = $region44
        $region43: #{tpu_custom_call.1} parent=31 // pred_region
          %216 = dma.done [#allocation6], 192
        $region44: #{tpu_custom_call.1} parent=31 // pred_fallthru
          _
        %s217 = sand.u32 %s43, 1
        %s218 = scalar_lea.sflag [#allocation3], %s217
        %s219 = sand.u32 %s43, 1
        %s220 = smul.addr %s219, 512
        %s221 = scalar_lea.vmem [#allocation2], %s220
        %p222 = pneg %p56
        %p223 = pneg %p53
        %p224 = pneg %p77
        %p225 = pneg %p74
        %p226 = pneg %p98
        %p227 = pneg %p95
        %p228 = pneg %p126
        %p229 = pneg %p123
        %s230 = sand.u32 %s113, 1
        %s231 = scalar_lea.sflag [#allocation4], %s230
        %s232 = sand.u32 %s113, 1
        %s233 = smul.addr %s232, 1536
        %s234 = scalar_lea.vmem [#allocation8], %s233
        %s235 = smul.u32 32, %s26
        %s236 = smul.u32 32, %s26
        %v237 = vld [vmem:[%s204] sm:$0xff]
        %v238 = vld [vmem:[%s204 + $0x8] sm:$0xff]
        %v239 = vld [vmem:[%s204 + $0x10] sm:$0xff]
        %v240 = vld [vmem:[%s204 + $0x18] sm:$0xff]
        %v241 = vld [vmem:[%s204 + $0x20] sm:$0xff]
        %v242 = vld [vmem:[%s204 + $0x28] sm:$0xff]
        %v243 = vld [vmem:[%s204 + $0x30] sm:$0xff]
        %v244 = vld [vmem:[%s204 + $0x38] sm:$0xff]
        %v245 = vld [vmem:[%s204 + $0x40] sm:$0xff]
        %v246 = vld [vmem:[%s204 + $0x48] sm:$0xff]
        %v247 = vld [vmem:[%s204 + $0x50] sm:$0xff]
        %v248 = vld [vmem:[%s204 + $0x58] sm:$0xff]
        %v249 = vld [vmem:[%s204 + $0x60] sm:$0xff]
        %v250 = vld [vmem:[%s204 + $0x68] sm:$0xff]
        %v251 = vld [vmem:[%s204 + $0x70] sm:$0xff]
        %v252 = vld [vmem:[%s204 + $0x78] sm:$0xff]
        %v253 = vld [vmem:[%s204 + $0x80] sm:$0xff]
        %v254 = vld [vmem:[%s204 + $0x88] sm:$0xff]
        %v255 = vld [vmem:[%s204 + $0x90] sm:$0xff]
        %v256 = vld [vmem:[%s204 + $0x98] sm:$0xff]
        %v257 = vld [vmem:[%s204 + $0xa0] sm:$0xff]
        %v258 = vld [vmem:[%s204 + $0xa8] sm:$0xff]
        %v259 = vld [vmem:[%s204 + $0xb0] sm:$0xff]
        %v260 = vld [vmem:[%s204 + $0xb8] sm:$0xff]
        %v261 = vld [vmem:[%s204 + $0xc0] sm:$0xff]
        %v262 = vld [vmem:[%s204 + $0xc8] sm:$0xff]
        %v263 = vld [vmem:[%s204 + $0xd0] sm:$0xff]
        %v264 = vld [vmem:[%s204 + $0xd8] sm:$0xff]
        %v265 = vld [vmem:[%s204 + $0xe0] sm:$0xff]
        %v266 = vld [vmem:[%s204 + $0xe8] sm:$0xff]
        %v267 = vld [vmem:[%s204 + $0xf0] sm:$0xff]
        %v268 = vld [vmem:[%s204 + $0xf8] sm:$0xff]
        %v269 = vld [vmem:[%s204 + $0x100] sm:$0xff]
        %v270 = vld [vmem:[%s204 + $0x108] sm:$0xff]
        %v271 = vld [vmem:[%s204 + $0x110] sm:$0xff]
        %v272 = vld [vmem:[%s204 + $0x118] sm:$0xff]
        %v273 = vld [vmem:[%s204 + $0x120] sm:$0xff]
        %v274 = vld [vmem:[%s204 + $0x128] sm:$0xff]
        %v275 = vld [vmem:[%s204 + $0x130] sm:$0xff]
        %v276 = vld [vmem:[%s204 + $0x138] sm:$0xff]
        %v277 = vld [vmem:[%s204 + $0x140] sm:$0xff]
        %v278 = vld [vmem:[%s204 + $0x148] sm:$0xff]
        %v279 = vld [vmem:[%s204 + $0x150] sm:$0xff]
        %v280 = vld [vmem:[%s204 + $0x158] sm:$0xff]
        %v281 = vld [vmem:[%s204 + $0x160] sm:$0xff]
        %v282 = vld [vmem:[%s204 + $0x168] sm:$0xff]
        %v283 = vld [vmem:[%s204 + $0x170] sm:$0xff]
        %v284 = vld [vmem:[%s204 + $0x178] sm:$0xff]
        %v285 = vld [vmem:[%s204 + $0x180] sm:$0xff]
        %v286 = vld [vmem:[%s204 + $0x188] sm:$0xff]
        %v287 = vld [vmem:[%s204 + $0x190] sm:$0xff]
        %v288 = vld [vmem:[%s204 + $0x198] sm:$0xff]
        %v289 = vld [vmem:[%s204 + $0x1a0] sm:$0xff]
        %v290 = vld [vmem:[%s204 + $0x1a8] sm:$0xff]
        %v291 = vld [vmem:[%s204 + $0x1b0] sm:$0xff]
        %v292 = vld [vmem:[%s204 + $0x1b8] sm:$0xff]
        %v293 = vld [vmem:[%s204 + $0x1c0] sm:$0xff]
        %v294 = vld [vmem:[%s204 + $0x1c8] sm:$0xff]
        %v295 = vld [vmem:[%s204 + $0x1d0] sm:$0xff]
        %v296 = vld [vmem:[%s204 + $0x1d8] sm:$0xff]
        %v297 = vld [vmem:[%s204 + $0x1e0] sm:$0xff]
        %v298 = vld [vmem:[%s204 + $0x1e8] sm:$0xff]
        %v299 = vld [vmem:[%s204 + $0x1f0] sm:$0xff]
        %v300 = vld [vmem:[%s204 + $0x1f8] sm:$0xff]
        %v301 = vld [vmem:[#allocation5] sm:$0xff]
        %v302 = vld [vmem:[#allocation5 + $0x8] sm:$0xff]
        %v303 = vld [vmem:[#allocation5 + $0x10] sm:$0xff]
        %v304 = vld [vmem:[#allocation5 + $0x18] sm:$0xff]
        %v305 = vld [vmem:[#allocation5 + $0x20] sm:$0xff]
        %v306 = vld [vmem:[#allocation5 + $0x28] sm:$0xff]
        %v307 = vld [vmem:[#allocation5 + $0x30] sm:$0xff]
        %v308 = vld [vmem:[#allocation5 + $0x38] sm:$0xff]
        %v309 = vld [vmem:[#allocation5 + $0x40] sm:$0xff]
        %v310 = vld [vmem:[#allocation5 + $0x48] sm:$0xff]
        %v311 = vld [vmem:[#allocation5 + $0x50] sm:$0xff]
        %v312 = vld [vmem:[#allocation5 + $0x58] sm:$0xff]
        %v313 = vld [vmem:[#allocation5 + $0x60] sm:$0xff]
        %v314 = vld [vmem:[#allocation5 + $0x68] sm:$0xff]
        %v315 = vld [vmem:[#allocation5 + $0x70] sm:$0xff]
        %v316 = vld [vmem:[#allocation5 + $0x78] sm:$0xff]
        %v317 = vld [vmem:[#allocation5 + $0x80] sm:$0xff]
        %v318 = vld [vmem:[#allocation5 + $0x88] sm:$0xff]
        %v319 = vld [vmem:[#allocation5 + $0x90] sm:$0xff]
        %v320 = vld [vmem:[#allocation5 + $0x98] sm:$0xff]
        %v321 = vld [vmem:[#allocation5 + $0xa0] sm:$0xff]
        %v322 = vld [vmem:[#allocation5 + $0xa8] sm:$0xff]
        %v323 = vld [vmem:[#allocation5 + $0xb0] sm:$0xff]
        %v324 = vld [vmem:[#allocation5 + $0xb8] sm:$0xff]
        %v325 = vld [vmem:[#allocation5 + $0xc0] sm:$0xff]
        %v326 = vld [vmem:[#allocation5 + $0xc8] sm:$0xff]
        %v327 = vld [vmem:[#allocation5 + $0xd0] sm:$0xff]
        %v328 = vld [vmem:[#allocation5 + $0xd8] sm:$0xff]
        %v329 = vld [vmem:[#allocation5 + $0xe0] sm:$0xff]
        %v330 = vld [vmem:[#allocation5 + $0xe8] sm:$0xff]
        %v331 = vld [vmem:[#allocation5 + $0xf0] sm:$0xff]
        %v332 = vld [vmem:[#allocation5 + $0xf8] sm:$0xff]
        %v333 = vld [vmem:[#allocation5 + $0x100] sm:$0xff]
        %v334 = vld [vmem:[#allocation5 + $0x108] sm:$0xff]
        %v335 = vld [vmem:[#allocation5 + $0x110] sm:$0xff]
        %v336 = vld [vmem:[#allocation5 + $0x118] sm:$0xff]
        %v337 = vld [vmem:[#allocation5 + $0x120] sm:$0xff]
        %v338 = vld [vmem:[#allocation5 + $0x128] sm:$0xff]
        %v339 = vld [vmem:[#allocation5 + $0x130] sm:$0xff]
        %v340 = vld [vmem:[#allocation5 + $0x138] sm:$0xff]
        %v341 = vld [vmem:[#allocation5 + $0x140] sm:$0xff]
        %v342 = vld [vmem:[#allocation5 + $0x148] sm:$0xff]
        %v343 = vld [vmem:[#allocation5 + $0x150] sm:$0xff]
        %v344 = vld [vmem:[#allocation5 + $0x158] sm:$0xff]
        %v345 = vld [vmem:[#allocation5 + $0x160] sm:$0xff]
        %v346 = vld [vmem:[#allocation5 + $0x168] sm:$0xff]
        %v347 = vld [vmem:[#allocation5 + $0x170] sm:$0xff]
        %v348 = vld [vmem:[#allocation5 + $0x178] sm:$0xff]
        %v349 = vld [vmem:[#allocation5 + $0x180] sm:$0xff]
        %v350 = vld [vmem:[#allocation5 + $0x188] sm:$0xff]
        %v351 = vld [vmem:[#allocation5 + $0x190] sm:$0xff]
        %v352 = vld [vmem:[#allocation5 + $0x198] sm:$0xff]
        %v353 = vld [vmem:[#allocation5 + $0x1a0] sm:$0xff]
        %v354 = vld [vmem:[#allocation5 + $0x1a8] sm:$0xff]
        %v355 = vld [vmem:[#allocation5 + $0x1b0] sm:$0xff]
        %v356 = vld [vmem:[#allocation5 + $0x1b8] sm:$0xff]
        %v357 = vld [vmem:[#allocation5 + $0x1c0] sm:$0xff]
        %v358 = vld [vmem:[#allocation5 + $0x1c8] sm:$0xff]
        %v359 = vld [vmem:[#allocation5 + $0x1d0] sm:$0xff]
        %v360 = vld [vmem:[#allocation5 + $0x1d8] sm:$0xff]
        %v361 = vld [vmem:[#allocation5 + $0x1e0] sm:$0xff]
        %v362 = vld [vmem:[#allocation5 + $0x1e8] sm:$0xff]
        %v363 = vld [vmem:[#allocation5 + $0x1f0] sm:$0xff]
        %v364 = vld [vmem:[#allocation5 + $0x1f8] sm:$0xff]
        %v365 = vld [vmem:[#allocation5 + $0x200] sm:$0xff]
        %v366 = vld [vmem:[#allocation5 + $0x208] sm:$0xff]
        %v367 = vld [vmem:[#allocation5 + $0x210] sm:$0xff]
        %v368 = vld [vmem:[#allocation5 + $0x218] sm:$0xff]
        %v369 = vld [vmem:[#allocation5 + $0x220] sm:$0xff]
        %v370 = vld [vmem:[#allocation5 + $0x228] sm:$0xff]
        %v371 = vld [vmem:[#allocation5 + $0x230] sm:$0xff]
        %v372 = vld [vmem:[#allocation5 + $0x238] sm:$0xff]
        %v373 = vld [vmem:[#allocation5 + $0x240] sm:$0xff]
        %v374 = vld [vmem:[#allocation5 + $0x248] sm:$0xff]
        %v375 = vld [vmem:[#allocation5 + $0x250] sm:$0xff]
        %v376 = vld [vmem:[#allocation5 + $0x258] sm:$0xff]
        %v377 = vld [vmem:[#allocation5 + $0x260] sm:$0xff]
        %v378 = vld [vmem:[#allocation5 + $0x268] sm:$0xff]
        %v379 = vld [vmem:[#allocation5 + $0x270] sm:$0xff]
        %v380 = vld [vmem:[#allocation5 + $0x278] sm:$0xff]
        %v381 = vld [vmem:[#allocation5 + $0x280] sm:$0xff]
        %v382 = vld [vmem:[#allocation5 + $0x288] sm:$0xff]
        %v383 = vld [vmem:[#allocation5 + $0x290] sm:$0xff]
        %v384 = vld [vmem:[#allocation5 + $0x298] sm:$0xff]
        %v385 = vld [vmem:[#allocation5 + $0x2a0] sm:$0xff]
        %v386 = vld [vmem:[#allocation5 + $0x2a8] sm:$0xff]
        %v387 = vld [vmem:[#allocation5 + $0x2b0] sm:$0xff]
        %v388 = vld [vmem:[#allocation5 + $0x2b8] sm:$0xff]
        %v389 = vld [vmem:[#allocation5 + $0x2c0] sm:$0xff]
        %v390 = vld [vmem:[#allocation5 + $0x2c8] sm:$0xff]
        %v391 = vld [vmem:[#allocation5 + $0x2d0] sm:$0xff]
        %v392 = vld [vmem:[#allocation5 + $0x2d8] sm:$0xff]
        %v393 = vld [vmem:[#allocation5 + $0x2e0] sm:$0xff]
        %v394 = vld [vmem:[#allocation5 + $0x2e8] sm:$0xff]
        %v395 = vld [vmem:[#allocation5 + $0x2f0] sm:$0xff]
        %v396 = vld [vmem:[#allocation5 + $0x2f8] sm:$0xff]
        %v397 = vld [vmem:[#allocation5 + $0x300] sm:$0xff]
        %v398 = vld [vmem:[#allocation5 + $0x308] sm:$0xff]
        %v399 = vld [vmem:[#allocation5 + $0x310] sm:$0xff]
        %v400 = vld [vmem:[#allocation5 + $0x318] sm:$0xff]
        %v401 = vld [vmem:[#allocation5 + $0x320] sm:$0xff]
        %v402 = vld [vmem:[#allocation5 + $0x328] sm:$0xff]
        %v403 = vld [vmem:[#allocation5 + $0x330] sm:$0xff]
        %v404 = vld [vmem:[#allocation5 + $0x338] sm:$0xff]
        %v405 = vld [vmem:[#allocation5 + $0x340] sm:$0xff]
        %v406 = vld [vmem:[#allocation5 + $0x348] sm:$0xff]
        %v407 = vld [vmem:[#allocation5 + $0x350] sm:$0xff]
        %v408 = vld [vmem:[#allocation5 + $0x358] sm:$0xff]
        %v409 = vld [vmem:[#allocation5 + $0x360] sm:$0xff]
        %v410 = vld [vmem:[#allocation5 + $0x368] sm:$0xff]
        %v411 = vld [vmem:[#allocation5 + $0x370] sm:$0xff]
        %v412 = vld [vmem:[#allocation5 + $0x378] sm:$0xff]
        %v413 = vld [vmem:[#allocation5 + $0x380] sm:$0xff]
        %v414 = vld [vmem:[#allocation5 + $0x388] sm:$0xff]
        %v415 = vld [vmem:[#allocation5 + $0x390] sm:$0xff]
        %v416 = vld [vmem:[#allocation5 + $0x398] sm:$0xff]
        %v417 = vld [vmem:[#allocation5 + $0x3a0] sm:$0xff]
        %v418 = vld [vmem:[#allocation5 + $0x3a8] sm:$0xff]
        %v419 = vld [vmem:[#allocation5 + $0x3b0] sm:$0xff]
        %v420 = vld [vmem:[#allocation5 + $0x3b8] sm:$0xff]
        %v421 = vld [vmem:[#allocation5 + $0x3c0] sm:$0xff]
        %v422 = vld [vmem:[#allocation5 + $0x3c8] sm:$0xff]
        %v423 = vld [vmem:[#allocation5 + $0x3d0] sm:$0xff]
        %v424 = vld [vmem:[#allocation5 + $0x3d8] sm:$0xff]
        %v425 = vld [vmem:[#allocation5 + $0x3e0] sm:$0xff]
        %v426 = vld [vmem:[#allocation5 + $0x3e8] sm:$0xff]
        %v427 = vld [vmem:[#allocation5 + $0x3f0] sm:$0xff]
        %v428 = vld [vmem:[#allocation5 + $0x3f8] sm:$0xff]
        %v429 = vld [vmem:[#allocation5 + $0x400] sm:$0xff]
        %v430 = vld [vmem:[#allocation5 + $0x408] sm:$0xff]
        %v431 = vld [vmem:[#allocation5 + $0x410] sm:$0xff]
        %v432 = vld [vmem:[#allocation5 + $0x418] sm:$0xff]
        %v433 = vld [vmem:[#allocation5 + $0x420] sm:$0xff]
        %v434 = vld [vmem:[#allocation5 + $0x428] sm:$0xff]
        %v435 = vld [vmem:[#allocation5 + $0x430] sm:$0xff]
        %v436 = vld [vmem:[#allocation5 + $0x438] sm:$0xff]
        %v437 = vld [vmem:[#allocation5 + $0x440] sm:$0xff]
        %v438 = vld [vmem:[#allocation5 + $0x448] sm:$0xff]
        %v439 = vld [vmem:[#allocation5 + $0x450] sm:$0xff]
        %v440 = vld [vmem:[#allocation5 + $0x458] sm:$0xff]
        %v441 = vld [vmem:[#allocation5 + $0x460] sm:$0xff]
        %v442 = vld [vmem:[#allocation5 + $0x468] sm:$0xff]
        %v443 = vld [vmem:[#allocation5 + $0x470] sm:$0xff]
        %v444 = vld [vmem:[#allocation5 + $0x478] sm:$0xff]
        %v445 = vld [vmem:[#allocation5 + $0x480] sm:$0xff]
        %v446 = vld [vmem:[#allocation5 + $0x488] sm:$0xff]
        %v447 = vld [vmem:[#allocation5 + $0x490] sm:$0xff]
        %v448 = vld [vmem:[#allocation5 + $0x498] sm:$0xff]
        %v449 = vld [vmem:[#allocation5 + $0x4a0] sm:$0xff]
        %v450 = vld [vmem:[#allocation5 + $0x4a8] sm:$0xff]
        %v451 = vld [vmem:[#allocation5 + $0x4b0] sm:$0xff]
        %v452 = vld [vmem:[#allocation5 + $0x4b8] sm:$0xff]
        %v453 = vld [vmem:[#allocation5 + $0x4c0] sm:$0xff]
        %v454 = vld [vmem:[#allocation5 + $0x4c8] sm:$0xff]
        %v455 = vld [vmem:[#allocation5 + $0x4d0] sm:$0xff]
        %v456 = vld [vmem:[#allocation5 + $0x4d8] sm:$0xff]
        %v457 = vld [vmem:[#allocation5 + $0x4e0] sm:$0xff]
        %v458 = vld [vmem:[#allocation5 + $0x4e8] sm:$0xff]
        %v459 = vld [vmem:[#allocation5 + $0x4f0] sm:$0xff]
        %v460 = vld [vmem:[#allocation5 + $0x4f8] sm:$0xff]
        %v461 = vld [vmem:[#allocation5 + $0x500] sm:$0xff]
        %v462 = vld [vmem:[#allocation5 + $0x508] sm:$0xff]
        %v463 = vld [vmem:[#allocation5 + $0x510] sm:$0xff]
        %v464 = vld [vmem:[#allocation5 + $0x518] sm:$0xff]
        %v465 = vld [vmem:[#allocation5 + $0x520] sm:$0xff]
        %v466 = vld [vmem:[#allocation5 + $0x528] sm:$0xff]
        %v467 = vld [vmem:[#allocation5 + $0x530] sm:$0xff]
        %v468 = vld [vmem:[#allocation5 + $0x538] sm:$0xff]
        %v469 = vld [vmem:[#allocation5 + $0x540] sm:$0xff]
        %v470 = vld [vmem:[#allocation5 + $0x548] sm:$0xff]
        %v471 = vld [vmem:[#allocation5 + $0x550] sm:$0xff]
        %v472 = vld [vmem:[#allocation5 + $0x558] sm:$0xff]
        %v473 = vld [vmem:[#allocation5 + $0x560] sm:$0xff]
        %v474 = vld [vmem:[#allocation5 + $0x568] sm:$0xff]
        %v475 = vld [vmem:[#allocation5 + $0x570] sm:$0xff]
        %v476 = vld [vmem:[#allocation5 + $0x578] sm:$0xff]
        %v477 = vld [vmem:[#allocation5 + $0x580] sm:$0xff]
        %v478 = vld [vmem:[#allocation5 + $0x588] sm:$0xff]
        %v479 = vld [vmem:[#allocation5 + $0x590] sm:$0xff]
        %v480 = vld [vmem:[#allocation5 + $0x598] sm:$0xff]
        %v481 = vld [vmem:[#allocation5 + $0x5a0] sm:$0xff]
        %v482 = vld [vmem:[#allocation5 + $0x5a8] sm:$0xff]
        %v483 = vld [vmem:[#allocation5 + $0x5b0] sm:$0xff]
        %v484 = vld [vmem:[#allocation5 + $0x5b8] sm:$0xff]
        %v485 = vld [vmem:[#allocation5 + $0x5c0] sm:$0xff]
        %v486 = vld [vmem:[#allocation5 + $0x5c8] sm:$0xff]
        %v487 = vld [vmem:[#allocation5 + $0x5d0] sm:$0xff]
        %v488 = vld [vmem:[#allocation5 + $0x5d8] sm:$0xff]
        %v489 = vld [vmem:[#allocation5 + $0x5e0] sm:$0xff]
        %v490 = vld [vmem:[#allocation5 + $0x5e8] sm:$0xff]
        %v491 = vld [vmem:[#allocation5 + $0x5f0] sm:$0xff]
        %v492 = vld [vmem:[#allocation5 + $0x5f8] sm:$0xff]
        %v493 = vld [vmem:[#allocation5 + $0x600] sm:$0xff]
        %v494 = vld [vmem:[#allocation5 + $0x608] sm:$0xff]
        %v495 = vld [vmem:[#allocation5 + $0x610] sm:$0xff]
        %v496 = vld [vmem:[#allocation5 + $0x618] sm:$0xff]
        %v497 = vld [vmem:[#allocation5 + $0x620] sm:$0xff]
        %v498 = vld [vmem:[#allocation5 + $0x628] sm:$0xff]
        %v499 = vld [vmem:[#allocation5 + $0x630] sm:$0xff]
        %v500 = vld [vmem:[#allocation5 + $0x638] sm:$0xff]
        %v501 = vld [vmem:[#allocation5 + $0x640] sm:$0xff]
        %v502 = vld [vmem:[#allocation5 + $0x648] sm:$0xff]
        %v503 = vld [vmem:[#allocation5 + $0x650] sm:$0xff]
        %v504 = vld [vmem:[#allocation5 + $0x658] sm:$0xff]
        %v505 = vld [vmem:[#allocation5 + $0x660] sm:$0xff]
        %v506 = vld [vmem:[#allocation5 + $0x668] sm:$0xff]
        %v507 = vld [vmem:[#allocation5 + $0x670] sm:$0xff]
        %v508 = vld [vmem:[#allocation5 + $0x678] sm:$0xff]
        %v509 = vld [vmem:[#allocation5 + $0x680] sm:$0xff]
        %v510 = vld [vmem:[#allocation5 + $0x688] sm:$0xff]
        %v511 = vld [vmem:[#allocation5 + $0x690] sm:$0xff]
        %v512 = vld [vmem:[#allocation5 + $0x698] sm:$0xff]
        %v513 = vld [vmem:[#allocation5 + $0x6a0] sm:$0xff]
        %v514 = vld [vmem:[#allocation5 + $0x6a8] sm:$0xff]
        %v515 = vld [vmem:[#allocation5 + $0x6b0] sm:$0xff]
        %v516 = vld [vmem:[#allocation5 + $0x6b8] sm:$0xff]
        %v517 = vld [vmem:[#allocation5 + $0x6c0] sm:$0xff]
        %v518 = vld [vmem:[#allocation5 + $0x6c8] sm:$0xff]
        %v519 = vld [vmem:[#allocation5 + $0x6d0] sm:$0xff]
        %v520 = vld [vmem:[#allocation5 + $0x6d8] sm:$0xff]
        %v521 = vld [vmem:[#allocation5 + $0x6e0] sm:$0xff]
        %v522 = vld [vmem:[#allocation5 + $0x6e8] sm:$0xff]
        %v523 = vld [vmem:[#allocation5 + $0x6f0] sm:$0xff]
        %v524 = vld [vmem:[#allocation5 + $0x6f8] sm:$0xff]
        %v525 = vld [vmem:[#allocation5 + $0x700] sm:$0xff]
        %v526 = vld [vmem:[#allocation5 + $0x708] sm:$0xff]
        %v527 = vld [vmem:[#allocation5 + $0x710] sm:$0xff]
        %v528 = vld [vmem:[#allocation5 + $0x718] sm:$0xff]
        %v529 = vld [vmem:[#allocation5 + $0x720] sm:$0xff]
        %v530 = vld [vmem:[#allocation5 + $0x728] sm:$0xff]
        %v531 = vld [vmem:[#allocation5 + $0x730] sm:$0xff]
        %v532 = vld [vmem:[#allocation5 + $0x738] sm:$0xff]
        %v533 = vld [vmem:[#allocation5 + $0x740] sm:$0xff]
        %v534 = vld [vmem:[#allocation5 + $0x748] sm:$0xff]
        %v535 = vld [vmem:[#allocation5 + $0x750] sm:$0xff]
        %v536 = vld [vmem:[#allocation5 + $0x758] sm:$0xff]
        %v537 = vld [vmem:[#allocation5 + $0x760] sm:$0xff]
        %v538 = vld [vmem:[#allocation5 + $0x768] sm:$0xff]
        %v539 = vld [vmem:[#allocation5 + $0x770] sm:$0xff]
        %v540 = vld [vmem:[#allocation5 + $0x778] sm:$0xff]
        %v541 = vld [vmem:[#allocation5 + $0x780] sm:$0xff]
        %v542 = vld [vmem:[#allocation5 + $0x788] sm:$0xff]
        %v543 = vld [vmem:[#allocation5 + $0x790] sm:$0xff]
        %v544 = vld [vmem:[#allocation5 + $0x798] sm:$0xff]
        %v545 = vld [vmem:[#allocation5 + $0x7a0] sm:$0xff]
        %v546 = vld [vmem:[#allocation5 + $0x7a8] sm:$0xff]
        %v547 = vld [vmem:[#allocation5 + $0x7b0] sm:$0xff]
        %v548 = vld [vmem:[#allocation5 + $0x7b8] sm:$0xff]
        %v549 = vld [vmem:[#allocation5 + $0x7c0] sm:$0xff]
        %v550 = vld [vmem:[#allocation5 + $0x7c8] sm:$0xff]
        %v551 = vld [vmem:[#allocation5 + $0x7d0] sm:$0xff]
        %v552 = vld [vmem:[#allocation5 + $0x7d8] sm:$0xff]
        %v553 = vld [vmem:[#allocation5 + $0x7e0] sm:$0xff]
        %v554 = vld [vmem:[#allocation5 + $0x7e8] sm:$0xff]
        %v555 = vld [vmem:[#allocation5 + $0x7f0] sm:$0xff]
        %v556 = vld [vmem:[#allocation5 + $0x7f8] sm:$0xff]
        %v557 = vld [vmem:[#allocation5 + $0x800] sm:$0xff]
        %v558 = vld [vmem:[#allocation5 + $0x808] sm:$0xff]
        %v559 = vld [vmem:[#allocation5 + $0x810] sm:$0xff]
        %v560 = vld [vmem:[#allocation5 + $0x818] sm:$0xff]
        %v561 = vld [vmem:[#allocation5 + $0x820] sm:$0xff]
        %v562 = vld [vmem:[#allocation5 + $0x828] sm:$0xff]
        %v563 = vld [vmem:[#allocation5 + $0x830] sm:$0xff]
        %v564 = vld [vmem:[#allocation5 + $0x838] sm:$0xff]
        %v565 = vld [vmem:[#allocation5 + $0x840] sm:$0xff]
        %v566 = vld [vmem:[#allocation5 + $0x848] sm:$0xff]
        %v567 = vld [vmem:[#allocation5 + $0x850] sm:$0xff]
        %v568 = vld [vmem:[#allocation5 + $0x858] sm:$0xff]
        %v569 = vld [vmem:[#allocation5 + $0x860] sm:$0xff]
        %v570 = vld [vmem:[#allocation5 + $0x868] sm:$0xff]
        %v571 = vld [vmem:[#allocation5 + $0x870] sm:$0xff]
        %v572 = vld [vmem:[#allocation5 + $0x878] sm:$0xff]
        %v573 = vld [vmem:[#allocation5 + $0x880] sm:$0xff]
        %v574 = vld [vmem:[#allocation5 + $0x888] sm:$0xff]
        %v575 = vld [vmem:[#allocation5 + $0x890] sm:$0xff]
        %v576 = vld [vmem:[#allocation5 + $0x898] sm:$0xff]
        %v577 = vld [vmem:[#allocation5 + $0x8a0] sm:$0xff]
        %v578 = vld [vmem:[#allocation5 + $0x8a8] sm:$0xff]
        %v579 = vld [vmem:[#allocation5 + $0x8b0] sm:$0xff]
        %v580 = vld [vmem:[#allocation5 + $0x8b8] sm:$0xff]
        %v581 = vld [vmem:[#allocation5 + $0x8c0] sm:$0xff]
        %v582 = vld [vmem:[#allocation5 + $0x8c8] sm:$0xff]
        %v583 = vld [vmem:[#allocation5 + $0x8d0] sm:$0xff]
        %v584 = vld [vmem:[#allocation5 + $0x8d8] sm:$0xff]
        %v585 = vld [vmem:[#allocation5 + $0x8e0] sm:$0xff]
        %v586 = vld [vmem:[#allocation5 + $0x8e8] sm:$0xff]
        %v587 = vld [vmem:[#allocation5 + $0x8f0] sm:$0xff]
        %v588 = vld [vmem:[#allocation5 + $0x8f8] sm:$0xff]
        %v589 = vld [vmem:[#allocation5 + $0x900] sm:$0xff]
        %v590 = vld [vmem:[#allocation5 + $0x908] sm:$0xff]
        %v591 = vld [vmem:[#allocation5 + $0x910] sm:$0xff]
        %v592 = vld [vmem:[#allocation5 + $0x918] sm:$0xff]
        %v593 = vld [vmem:[#allocation5 + $0x920] sm:$0xff]
        %v594 = vld [vmem:[#allocation5 + $0x928] sm:$0xff]
        %v595 = vld [vmem:[#allocation5 + $0x930] sm:$0xff]
        %v596 = vld [vmem:[#allocation5 + $0x938] sm:$0xff]
        %v597 = vld [vmem:[#allocation5 + $0x940] sm:$0xff]
        %v598 = vld [vmem:[#allocation5 + $0x948] sm:$0xff]
        %v599 = vld [vmem:[#allocation5 + $0x950] sm:$0xff]
        %v600 = vld [vmem:[#allocation5 + $0x958] sm:$0xff]
        %v601 = vld [vmem:[#allocation5 + $0x960] sm:$0xff]
        %v602 = vld [vmem:[#allocation5 + $0x968] sm:$0xff]
        %v603 = vld [vmem:[#allocation5 + $0x970] sm:$0xff]
        %v604 = vld [vmem:[#allocation5 + $0x978] sm:$0xff]
        %v605 = vld [vmem:[#allocation5 + $0x980] sm:$0xff]
        %v606 = vld [vmem:[#allocation5 + $0x988] sm:$0xff]
        %v607 = vld [vmem:[#allocation5 + $0x990] sm:$0xff]
        %v608 = vld [vmem:[#allocation5 + $0x998] sm:$0xff]
        %v609 = vld [vmem:[#allocation5 + $0x9a0] sm:$0xff]
        %v610 = vld [vmem:[#allocation5 + $0x9a8] sm:$0xff]
        %v611 = vld [vmem:[#allocation5 + $0x9b0] sm:$0xff]
        %v612 = vld [vmem:[#allocation5 + $0x9b8] sm:$0xff]
        %v613 = vld [vmem:[#allocation5 + $0x9c0] sm:$0xff]
        %v614 = vld [vmem:[#allocation5 + $0x9c8] sm:$0xff]
        %v615 = vld [vmem:[#allocation5 + $0x9d0] sm:$0xff]
        %v616 = vld [vmem:[#allocation5 + $0x9d8] sm:$0xff]
        %v617 = vld [vmem:[#allocation5 + $0x9e0] sm:$0xff]
        %v618 = vld [vmem:[#allocation5 + $0x9e8] sm:$0xff]
        %v619 = vld [vmem:[#allocation5 + $0x9f0] sm:$0xff]
        %v620 = vld [vmem:[#allocation5 + $0x9f8] sm:$0xff]
        %v621 = vld [vmem:[#allocation5 + $0xa00] sm:$0xff]
        %v622 = vld [vmem:[#allocation5 + $0xa08] sm:$0xff]
        %v623 = vld [vmem:[#allocation5 + $0xa10] sm:$0xff]
        %v624 = vld [vmem:[#allocation5 + $0xa18] sm:$0xff]
        %v625 = vld [vmem:[#allocation5 + $0xa20] sm:$0xff]
        %v626 = vld [vmem:[#allocation5 + $0xa28] sm:$0xff]
        %v627 = vld [vmem:[#allocation5 + $0xa30] sm:$0xff]
        %v628 = vld [vmem:[#allocation5 + $0xa38] sm:$0xff]
        %v629 = vld [vmem:[#allocation5 + $0xa40] sm:$0xff]
        %v630 = vld [vmem:[#allocation5 + $0xa48] sm:$0xff]
        %v631 = vld [vmem:[#allocation5 + $0xa50] sm:$0xff]
        %v632 = vld [vmem:[#allocation5 + $0xa58] sm:$0xff]
        %v633 = vld [vmem:[#allocation5 + $0xa60] sm:$0xff]
        %v634 = vld [vmem:[#allocation5 + $0xa68] sm:$0xff]
        %v635 = vld [vmem:[#allocation5 + $0xa70] sm:$0xff]
        %v636 = vld [vmem:[#allocation5 + $0xa78] sm:$0xff]
        %v637 = vld [vmem:[#allocation5 + $0xa80] sm:$0xff]
        %v638 = vld [vmem:[#allocation5 + $0xa88] sm:$0xff]
        %v639 = vld [vmem:[#allocation5 + $0xa90] sm:$0xff]
        %v640 = vld [vmem:[#allocation5 + $0xa98] sm:$0xff]
        %v641 = vld [vmem:[#allocation5 + $0xaa0] sm:$0xff]
        %v642 = vld [vmem:[#allocation5 + $0xaa8] sm:$0xff]
        %v643 = vld [vmem:[#allocation5 + $0xab0] sm:$0xff]
        %v644 = vld [vmem:[#allocation5 + $0xab8] sm:$0xff]
        %v645 = vld [vmem:[#allocation5 + $0xac0] sm:$0xff]
        %v646 = vld [vmem:[#allocation5 + $0xac8] sm:$0xff]
        %v647 = vld [vmem:[#allocation5 + $0xad0] sm:$0xff]
        %v648 = vld [vmem:[#allocation5 + $0xad8] sm:$0xff]
        %v649 = vld [vmem:[#allocation5 + $0xae0] sm:$0xff]
        %v650 = vld [vmem:[#allocation5 + $0xae8] sm:$0xff]
        %v651 = vld [vmem:[#allocation5 + $0xaf0] sm:$0xff]
        %v652 = vld [vmem:[#allocation5 + $0xaf8] sm:$0xff]
        %v653 = vld [vmem:[#allocation5 + $0xb00] sm:$0xff]
        %v654 = vld [vmem:[#allocation5 + $0xb08] sm:$0xff]
        %v655 = vld [vmem:[#allocation5 + $0xb10] sm:$0xff]
        %v656 = vld [vmem:[#allocation5 + $0xb18] sm:$0xff]
        %v657 = vld [vmem:[#allocation5 + $0xb20] sm:$0xff]
        %v658 = vld [vmem:[#allocation5 + $0xb28] sm:$0xff]
        %v659 = vld [vmem:[#allocation5 + $0xb30] sm:$0xff]
        %v660 = vld [vmem:[#allocation5 + $0xb38] sm:$0xff]
        %v661 = vld [vmem:[#allocation5 + $0xb40] sm:$0xff]
        %v662 = vld [vmem:[#allocation5 + $0xb48] sm:$0xff]
        %v663 = vld [vmem:[#allocation5 + $0xb50] sm:$0xff]
        %v664 = vld [vmem:[#allocation5 + $0xb58] sm:$0xff]
        %v665 = vld [vmem:[#allocation5 + $0xb60] sm:$0xff]
        %v666 = vld [vmem:[#allocation5 + $0xb68] sm:$0xff]
        %v667 = vld [vmem:[#allocation5 + $0xb70] sm:$0xff]
        %v668 = vld [vmem:[#allocation5 + $0xb78] sm:$0xff]
        %v669 = vld [vmem:[#allocation5 + $0xb80] sm:$0xff]
        %v670 = vld [vmem:[#allocation5 + $0xb88] sm:$0xff]
        %v671 = vld [vmem:[#allocation5 + $0xb90] sm:$0xff]
        %v672 = vld [vmem:[#allocation5 + $0xb98] sm:$0xff]
        %v673 = vld [vmem:[#allocation5 + $0xba0] sm:$0xff]
        %v674 = vld [vmem:[#allocation5 + $0xba8] sm:$0xff]
        %v675 = vld [vmem:[#allocation5 + $0xbb0] sm:$0xff]
        %v676 = vld [vmem:[#allocation5 + $0xbb8] sm:$0xff]
        %v677 = vld [vmem:[#allocation5 + $0xbc0] sm:$0xff]
        %v678 = vld [vmem:[#allocation5 + $0xbc8] sm:$0xff]
        %v679 = vld [vmem:[#allocation5 + $0xbd0] sm:$0xff]
        %v680 = vld [vmem:[#allocation5 + $0xbd8] sm:$0xff]
        %v681 = vld [vmem:[#allocation5 + $0xbe0] sm:$0xff]
        %v682 = vld [vmem:[#allocation5 + $0xbe8] sm:$0xff]
        %v683 = vld [vmem:[#allocation5 + $0xbf0] sm:$0xff]
        %v684 = vld [vmem:[#allocation5 + $0xbf8] sm:$0xff]
        %v685 = vld [vmem:[#allocation7] sm:$0xff]
        %v686 = vld [vmem:[#allocation7 + $0x8] sm:$0xf]
        %v689 = vlaneseq
        %v690 = vshrl.u32 %v689, 7
        %v691 = vsub.s32 0, %v690
        %v692 = vrot.slane %v685, %v691
        %v693 = vlaneseq
        %v694 = vshrl.u32 %v693, 7
        %v695 = vsub.s32 1, %v694
        %v696 = vrot.slane %v685, %v695
        %v697 = vlaneseq
        %v698 = vshrl.u32 %v697, 7
        %v699 = vsub.s32 2, %v698
        %v700 = vrot.slane %v685, %v699
        %v701 = vlaneseq
        %v702 = vshrl.u32 %v701, 7
        %v703 = vsub.s32 3, %v702
        %v704 = vrot.slane %v685, %v703
        %v705 = vlaneseq
        %v706 = vshrl.u32 %v705, 7
        %v707 = vsub.s32 4, %v706
        %v708 = vrot.slane %v685, %v707
        %v709 = vlaneseq
        %v710 = vshrl.u32 %v709, 7
        %v711 = vsub.s32 5, %v710
        %v712 = vrot.slane %v685, %v711
        %v713 = vlaneseq
        %v714 = vshrl.u32 %v713, 7
        %v715 = vsub.s32 6, %v714
        %v716 = vrot.slane %v685, %v715
        %v717 = vlaneseq
        %v718 = vshrl.u32 %v717, 7
        %v719 = vsub.s32 7, %v718
        %v720 = vrot.slane %v685, %v719
        %v721 = vlaneseq
        %v722 = vshrl.u32 %v721, 7
        %v723 = vsub.s32 0, %v722
        %v724 = vrot.slane %v686, %v723
        %v725 = vlaneseq
        %v726 = vshrl.u32 %v725, 7
        %v727 = vsub.s32 1, %v726
        %v728 = vrot.slane %v686, %v727
        %v729 = vlaneseq
        %v730 = vshrl.u32 %v729, 7
        %v731 = vsub.s32 2, %v730
        %v732 = vrot.slane %v686, %v731
        %v733 = vlaneseq
        %v734 = vshrl.u32 %v733, 7
        %v735 = vsub.s32 3, %v734
        %v736 = vrot.slane %v686, %v735
        %v813 = vunpack.c.l.b16 %v237
        %v814 = vunpack.c.h.b16 %v237
        %v815 = vunpack.c.l.b16 %v238
        %v816 = vunpack.c.h.b16 %v238
        %v817 = vunpack.c.l.b16 %v239
        %v818 = vunpack.c.h.b16 %v239
        %v819 = vunpack.c.l.b16 %v240
        %v820 = vunpack.c.h.b16 %v240
        %v821 = vunpack.c.l.b16 %v241
        %v822 = vunpack.c.h.b16 %v241
        %v823 = vunpack.c.l.b16 %v242
        %v824 = vunpack.c.h.b16 %v242
        %v825 = vunpack.c.l.b16 %v243
        %v826 = vunpack.c.h.b16 %v243
        %v827 = vunpack.c.l.b16 %v244
        %v828 = vunpack.c.h.b16 %v244
        %v829 = vunpack.c.l.b16 %v245
        %v830 = vunpack.c.h.b16 %v245
        %v831 = vunpack.c.l.b16 %v246
        %v832 = vunpack.c.h.b16 %v246
        %v833 = vunpack.c.l.b16 %v247
        %v834 = vunpack.c.h.b16 %v247
        %v835 = vunpack.c.l.b16 %v248
        %v836 = vunpack.c.h.b16 %v248
        %v837 = vunpack.c.l.b16 %v249
        %v838 = vunpack.c.h.b16 %v249
        %v839 = vunpack.c.l.b16 %v250
        %v840 = vunpack.c.h.b16 %v250
        %v841 = vunpack.c.l.b16 %v251
        %v842 = vunpack.c.h.b16 %v251
        %v843 = vunpack.c.l.b16 %v252
        %v844 = vunpack.c.h.b16 %v252
        %v845 = vunpack.c.l.b16 %v253
        %v846 = vunpack.c.h.b16 %v253
        %v847 = vunpack.c.l.b16 %v254
        %v848 = vunpack.c.h.b16 %v254
        %v849 = vunpack.c.l.b16 %v255
        %v850 = vunpack.c.h.b16 %v255
        %v851 = vunpack.c.l.b16 %v256
        %v852 = vunpack.c.h.b16 %v256
        %v853 = vunpack.c.l.b16 %v257
        %v854 = vunpack.c.h.b16 %v257
        %v855 = vunpack.c.l.b16 %v258
        %v856 = vunpack.c.h.b16 %v258
        %v857 = vunpack.c.l.b16 %v259
        %v858 = vunpack.c.h.b16 %v259
        %v859 = vunpack.c.l.b16 %v260
        %v860 = vunpack.c.h.b16 %v260
        %v861 = vunpack.c.l.b16 %v261
        %v862 = vunpack.c.h.b16 %v261
        %v863 = vunpack.c.l.b16 %v262
        %v864 = vunpack.c.h.b16 %v262
        %v865 = vunpack.c.l.b16 %v263
        %v866 = vunpack.c.h.b16 %v263
        %v867 = vunpack.c.l.b16 %v264
        %v868 = vunpack.c.h.b16 %v264
        %v869 = vunpack.c.l.b16 %v265
        %v870 = vunpack.c.h.b16 %v265
        %v871 = vunpack.c.l.b16 %v266
        %v872 = vunpack.c.h.b16 %v266
        %v873 = vunpack.c.l.b16 %v267
        %v874 = vunpack.c.h.b16 %v267
        %v875 = vunpack.c.l.b16 %v268
        %v876 = vunpack.c.h.b16 %v268
        %v877 = vunpack.c.l.b16 %v269
        %v878 = vunpack.c.h.b16 %v269
        %v879 = vunpack.c.l.b16 %v270
        %v880 = vunpack.c.h.b16 %v270
        %v881 = vunpack.c.l.b16 %v271
        %v882 = vunpack.c.h.b16 %v271
        %v883 = vunpack.c.l.b16 %v272
        %v884 = vunpack.c.h.b16 %v272
        %v885 = vunpack.c.l.b16 %v273
        %v886 = vunpack.c.h.b16 %v273
        %v887 = vunpack.c.l.b16 %v274
        %v888 = vunpack.c.h.b16 %v274
        %v889 = vunpack.c.l.b16 %v275
        %v890 = vunpack.c.h.b16 %v275
        %v891 = vunpack.c.l.b16 %v276
        %v892 = vunpack.c.h.b16 %v276
        %v893 = vunpack.c.l.b16 %v277
        %v894 = vunpack.c.h.b16 %v277
        %v895 = vunpack.c.l.b16 %v278
        %v896 = vunpack.c.h.b16 %v278
        %v897 = vunpack.c.l.b16 %v279
        %v898 = vunpack.c.h.b16 %v279
        %v899 = vunpack.c.l.b16 %v280
        %v900 = vunpack.c.h.b16 %v280
        %v901 = vunpack.c.l.b16 %v281
        %v902 = vunpack.c.h.b16 %v281
        %v903 = vunpack.c.l.b16 %v282
        %v904 = vunpack.c.h.b16 %v282
        %v905 = vunpack.c.l.b16 %v283
        %v906 = vunpack.c.h.b16 %v283
        %v907 = vunpack.c.l.b16 %v284
        %v908 = vunpack.c.h.b16 %v284
        %v909 = vunpack.c.l.b16 %v285
        %v910 = vunpack.c.h.b16 %v285
        %v911 = vunpack.c.l.b16 %v286
        %v912 = vunpack.c.h.b16 %v286
        %v913 = vunpack.c.l.b16 %v287
        %v914 = vunpack.c.h.b16 %v287
        %v915 = vunpack.c.l.b16 %v288
        %v916 = vunpack.c.h.b16 %v288
        %v917 = vunpack.c.l.b16 %v289
        %v918 = vunpack.c.h.b16 %v289
        %v919 = vunpack.c.l.b16 %v290
        %v920 = vunpack.c.h.b16 %v290
        %v921 = vunpack.c.l.b16 %v291
        %v922 = vunpack.c.h.b16 %v291
        %v923 = vunpack.c.l.b16 %v292
        %v924 = vunpack.c.h.b16 %v292
        %v925 = vunpack.c.l.b16 %v293
        %v926 = vunpack.c.h.b16 %v293
        %v927 = vunpack.c.l.b16 %v294
        %v928 = vunpack.c.h.b16 %v294
        %v929 = vunpack.c.l.b16 %v295
        %v930 = vunpack.c.h.b16 %v295
        %v931 = vunpack.c.l.b16 %v296
        %v932 = vunpack.c.h.b16 %v296
        %v933 = vunpack.c.l.b16 %v297
        %v934 = vunpack.c.h.b16 %v297
        %v935 = vunpack.c.l.b16 %v298
        %v936 = vunpack.c.h.b16 %v298
        %v937 = vunpack.c.l.b16 %v299
        %v938 = vunpack.c.h.b16 %v299
        %v939 = vunpack.c.l.b16 %v300
        %v940 = vunpack.c.h.b16 %v300
        %v941 = vpack.c.b16 %v817, %v813
        %v942 = vpack.c.b16 %v818, %v814
        %v943 = vpack.c.b16 %v819, %v815
        %v944 = vpack.c.b16 %v820, %v816
        %v945 = vpack.c.b16 %v825, %v821
        %v946 = vpack.c.b16 %v826, %v822
        %v947 = vpack.c.b16 %v827, %v823
        %v948 = vpack.c.b16 %v828, %v824
        %v949 = vpack.c.b16 %v833, %v829
        %v950 = vpack.c.b16 %v834, %v830
        %v951 = vpack.c.b16 %v835, %v831
        %v952 = vpack.c.b16 %v836, %v832
        %v953 = vpack.c.b16 %v841, %v837
        %v954 = vpack.c.b16 %v842, %v838
        %v955 = vpack.c.b16 %v843, %v839
        %v956 = vpack.c.b16 %v844, %v840
        %v957 = vpack.c.b16 %v849, %v845
        %v958 = vpack.c.b16 %v850, %v846
        %v959 = vpack.c.b16 %v851, %v847
        %v960 = vpack.c.b16 %v852, %v848
        %v961 = vpack.c.b16 %v857, %v853
        %v962 = vpack.c.b16 %v858, %v854
        %v963 = vpack.c.b16 %v859, %v855
        %v964 = vpack.c.b16 %v860, %v856
        %v965 = vpack.c.b16 %v865, %v861
        %v966 = vpack.c.b16 %v866, %v862
        %v967 = vpack.c.b16 %v867, %v863
        %v968 = vpack.c.b16 %v868, %v864
        %v969 = vpack.c.b16 %v873, %v869
        %v970 = vpack.c.b16 %v874, %v870
        %v971 = vpack.c.b16 %v875, %v871
        %v972 = vpack.c.b16 %v876, %v872
        %v973 = vpack.c.b16 %v881, %v877
        %v974 = vpack.c.b16 %v882, %v878
        %v975 = vpack.c.b16 %v883, %v879
        %v976 = vpack.c.b16 %v884, %v880
        %v977 = vpack.c.b16 %v889, %v885
        %v978 = vpack.c.b16 %v890, %v886
        %v979 = vpack.c.b16 %v891, %v887
        %v980 = vpack.c.b16 %v892, %v888
        %v981 = vpack.c.b16 %v897, %v893
        %v982 = vpack.c.b16 %v898, %v894
        %v983 = vpack.c.b16 %v899, %v895
        %v984 = vpack.c.b16 %v900, %v896
        %v985 = vpack.c.b16 %v905, %v901
        %v986 = vpack.c.b16 %v906, %v902
        %v987 = vpack.c.b16 %v907, %v903
        %v988 = vpack.c.b16 %v908, %v904
        %v989 = vpack.c.b16 %v913, %v909
        %v990 = vpack.c.b16 %v914, %v910
        %v991 = vpack.c.b16 %v915, %v911
        %v992 = vpack.c.b16 %v916, %v912
        %v993 = vpack.c.b16 %v921, %v917
        %v994 = vpack.c.b16 %v922, %v918
        %v995 = vpack.c.b16 %v923, %v919
        %v996 = vpack.c.b16 %v924, %v920
        %v997 = vpack.c.b16 %v929, %v925
        %v998 = vpack.c.b16 %v930, %v926
        %v999 = vpack.c.b16 %v931, %v927
        %v1000 = vpack.c.b16 %v932, %v928
        %v1001 = vpack.c.b16 %v937, %v933
        %v1002 = vpack.c.b16 %v938, %v934
        %v1003 = vpack.c.b16 %v939, %v935
        %v1004 = vpack.c.b16 %v940, %v936
        %v1453 = vunpack.c.l.b16 %v301
        %v1454 = vunpack.c.h.b16 %v301
        %v1455 = vunpack.c.l.b16 %v302
        %v1456 = vunpack.c.h.b16 %v302
        %v1457 = vunpack.c.l.b16 %v303
        %v1458 = vunpack.c.h.b16 %v303
        %v1459 = vunpack.c.l.b16 %v304
        %v1460 = vunpack.c.h.b16 %v304
        %v1461 = vunpack.c.l.b16 %v305
        %v1462 = vunpack.c.h.b16 %v305
        %v1463 = vunpack.c.l.b16 %v306
        %v1464 = vunpack.c.h.b16 %v306
        %v1465 = vunpack.c.l.b16 %v307
        %v1466 = vunpack.c.h.b16 %v307
        %v1467 = vunpack.c.l.b16 %v308
        %v1468 = vunpack.c.h.b16 %v308
        %v1469 = vunpack.c.l.b16 %v309
        %v1470 = vunpack.c.h.b16 %v309
        %v1471 = vunpack.c.l.b16 %v310
        %v1472 = vunpack.c.h.b16 %v310
        %v1473 = vunpack.c.l.b16 %v311
        %v1474 = vunpack.c.h.b16 %v311
        %v1475 = vunpack.c.l.b16 %v312
        %v1476 = vunpack.c.h.b16 %v312
        %v1477 = vunpack.c.l.b16 %v313
        %v1478 = vunpack.c.h.b16 %v313
        %v1479 = vunpack.c.l.b16 %v314
        %v1480 = vunpack.c.h.b16 %v314
        %v1481 = vunpack.c.l.b16 %v315
        %v1482 = vunpack.c.h.b16 %v315
        %v1483 = vunpack.c.l.b16 %v316
        %v1484 = vunpack.c.h.b16 %v316
        %v1485 = vunpack.c.l.b16 %v317
        %v1486 = vunpack.c.h.b16 %v317
        %v1487 = vunpack.c.l.b16 %v318
        %v1488 = vunpack.c.h.b16 %v318
        %v1489 = vunpack.c.l.b16 %v319
        %v1490 = vunpack.c.h.b16 %v319
        %v1491 = vunpack.c.l.b16 %v320
        %v1492 = vunpack.c.h.b16 %v320
        %v1493 = vunpack.c.l.b16 %v321
        %v1494 = vunpack.c.h.b16 %v321
        %v1495 = vunpack.c.l.b16 %v322
        %v1496 = vunpack.c.h.b16 %v322
        %v1497 = vunpack.c.l.b16 %v323
        %v1498 = vunpack.c.h.b16 %v323
        %v1499 = vunpack.c.l.b16 %v324
        %v1500 = vunpack.c.h.b16 %v324
        %v1501 = vunpack.c.l.b16 %v325
        %v1502 = vunpack.c.h.b16 %v325
        %v1503 = vunpack.c.l.b16 %v326
        %v1504 = vunpack.c.h.b16 %v326
        %v1505 = vunpack.c.l.b16 %v327
        %v1506 = vunpack.c.h.b16 %v327
        %v1507 = vunpack.c.l.b16 %v328
        %v1508 = vunpack.c.h.b16 %v328
        %v1509 = vunpack.c.l.b16 %v329
        %v1510 = vunpack.c.h.b16 %v329
        %v1511 = vunpack.c.l.b16 %v330
        %v1512 = vunpack.c.h.b16 %v330
        %v1513 = vunpack.c.l.b16 %v331
        %v1514 = vunpack.c.h.b16 %v331
        %v1515 = vunpack.c.l.b16 %v332
        %v1516 = vunpack.c.h.b16 %v332
        %v1517 = vunpack.c.l.b16 %v333
        %v1518 = vunpack.c.h.b16 %v333
        %v1519 = vunpack.c.l.b16 %v334
        %v1520 = vunpack.c.h.b16 %v334
        %v1521 = vunpack.c.l.b16 %v335
        %v1522 = vunpack.c.h.b16 %v335
        %v1523 = vunpack.c.l.b16 %v336
        %v1524 = vunpack.c.h.b16 %v336
        %v1525 = vunpack.c.l.b16 %v337
        %v1526 = vunpack.c.h.b16 %v337
        %v1527 = vunpack.c.l.b16 %v338
        %v1528 = vunpack.c.h.b16 %v338
        %v1529 = vunpack.c.l.b16 %v339
        %v1530 = vunpack.c.h.b16 %v339
        %v1531 = vunpack.c.l.b16 %v340
        %v1532 = vunpack.c.h.b16 %v340
        %v1533 = vunpack.c.l.b16 %v341
        %v1534 = vunpack.c.h.b16 %v341
        %v1535 = vunpack.c.l.b16 %v342
        %v1536 = vunpack.c.h.b16 %v342
        %v1537 = vunpack.c.l.b16 %v343
        %v1538 = vunpack.c.h.b16 %v343
        %v1539 = vunpack.c.l.b16 %v344
        %v1540 = vunpack.c.h.b16 %v344
        %v1541 = vunpack.c.l.b16 %v345
        %v1542 = vunpack.c.h.b16 %v345
        %v1543 = vunpack.c.l.b16 %v346
        %v1544 = vunpack.c.h.b16 %v346
        %v1545 = vunpack.c.l.b16 %v347
        %v1546 = vunpack.c.h.b16 %v347
        %v1547 = vunpack.c.l.b16 %v348
        %v1548 = vunpack.c.h.b16 %v348
        %v1549 = vunpack.c.l.b16 %v349
        %v1550 = vunpack.c.h.b16 %v349
        %v1551 = vunpack.c.l.b16 %v350
        %v1552 = vunpack.c.h.b16 %v350
        %v1553 = vunpack.c.l.b16 %v351
        %v1554 = vunpack.c.h.b16 %v351
        %v1555 = vunpack.c.l.b16 %v352
        %v1556 = vunpack.c.h.b16 %v352
        %v1557 = vunpack.c.l.b16 %v353
        %v1558 = vunpack.c.h.b16 %v353
        %v1559 = vunpack.c.l.b16 %v354
        %v1560 = vunpack.c.h.b16 %v354
        %v1561 = vunpack.c.l.b16 %v355
        %v1562 = vunpack.c.h.b16 %v355
        %v1563 = vunpack.c.l.b16 %v356
        %v1564 = vunpack.c.h.b16 %v356
        %v1565 = vunpack.c.l.b16 %v357
        %v1566 = vunpack.c.h.b16 %v357
        %v1567 = vunpack.c.l.b16 %v358
        %v1568 = vunpack.c.h.b16 %v358
        %v1569 = vunpack.c.l.b16 %v359
        %v1570 = vunpack.c.h.b16 %v359
        %v1571 = vunpack.c.l.b16 %v360
        %v1572 = vunpack.c.h.b16 %v360
        %v1573 = vunpack.c.l.b16 %v361
        %v1574 = vunpack.c.h.b16 %v361
        %v1575 = vunpack.c.l.b16 %v362
        %v1576 = vunpack.c.h.b16 %v362
        %v1577 = vunpack.c.l.b16 %v363
        %v1578 = vunpack.c.h.b16 %v363
        %v1579 = vunpack.c.l.b16 %v364
        %v1580 = vunpack.c.h.b16 %v364
        %v1581 = vunpack.c.l.b16 %v365
        %v1582 = vunpack.c.h.b16 %v365
        %v1583 = vunpack.c.l.b16 %v366
        %v1584 = vunpack.c.h.b16 %v366
        %v1585 = vunpack.c.l.b16 %v367
        %v1586 = vunpack.c.h.b16 %v367
        %v1587 = vunpack.c.l.b16 %v368
        %v1588 = vunpack.c.h.b16 %v368
        %v1589 = vunpack.c.l.b16 %v369
        %v1590 = vunpack.c.h.b16 %v369
        %v1591 = vunpack.c.l.b16 %v370
        %v1592 = vunpack.c.h.b16 %v370
        %v1593 = vunpack.c.l.b16 %v371
        %v1594 = vunpack.c.h.b16 %v371
        %v1595 = vunpack.c.l.b16 %v372
        %v1596 = vunpack.c.h.b16 %v372
        %v1597 = vunpack.c.l.b16 %v373
        %v1598 = vunpack.c.h.b16 %v373
        %v1599 = vunpack.c.l.b16 %v374
        %v1600 = vunpack.c.h.b16 %v374
        %v1601 = vunpack.c.l.b16 %v375
        %v1602 = vunpack.c.h.b16 %v375
        %v1603 = vunpack.c.l.b16 %v376
        %v1604 = vunpack.c.h.b16 %v376
        %v1605 = vunpack.c.l.b16 %v377
        %v1606 = vunpack.c.h.b16 %v377
        %v1607 = vunpack.c.l.b16 %v378
        %v1608 = vunpack.c.h.b16 %v378
        %v1609 = vunpack.c.l.b16 %v379
        %v1610 = vunpack.c.h.b16 %v379
        %v1611 = vunpack.c.l.b16 %v380
        %v1612 = vunpack.c.h.b16 %v380
        %v1613 = vunpack.c.l.b16 %v381
        %v1614 = vunpack.c.h.b16 %v381
        %v1615 = vunpack.c.l.b16 %v382
        %v1616 = vunpack.c.h.b16 %v382
        %v1617 = vunpack.c.l.b16 %v383
        %v1618 = vunpack.c.h.b16 %v383
        %v1619 = vunpack.c.l.b16 %v384
        %v1620 = vunpack.c.h.b16 %v384
        %v1621 = vunpack.c.l.b16 %v385
        %v1622 = vunpack.c.h.b16 %v385
        %v1623 = vunpack.c.l.b16 %v386
        %v1624 = vunpack.c.h.b16 %v386
        %v1625 = vunpack.c.l.b16 %v387
        %v1626 = vunpack.c.h.b16 %v387
        %v1627 = vunpack.c.l.b16 %v388
        %v1628 = vunpack.c.h.b16 %v388
        %v1629 = vunpack.c.l.b16 %v389
        %v1630 = vunpack.c.h.b16 %v389
        %v1631 = vunpack.c.l.b16 %v390
        %v1632 = vunpack.c.h.b16 %v390
        %v1633 = vunpack.c.l.b16 %v391
        %v1634 = vunpack.c.h.b16 %v391
        %v1635 = vunpack.c.l.b16 %v392
        %v1636 = vunpack.c.h.b16 %v392
        %v1637 = vunpack.c.l.b16 %v393
        %v1638 = vunpack.c.h.b16 %v393
        %v1639 = vunpack.c.l.b16 %v394
        %v1640 = vunpack.c.h.b16 %v394
        %v1641 = vunpack.c.l.b16 %v395
        %v1642 = vunpack.c.h.b16 %v395
        %v1643 = vunpack.c.l.b16 %v396
        %v1644 = vunpack.c.h.b16 %v396
        %v1645 = vunpack.c.l.b16 %v397
        %v1646 = vunpack.c.h.b16 %v397
        %v1647 = vunpack.c.l.b16 %v398
        %v1648 = vunpack.c.h.b16 %v398
        %v1649 = vunpack.c.l.b16 %v399
        %v1650 = vunpack.c.h.b16 %v399
        %v1651 = vunpack.c.l.b16 %v400
        %v1652 = vunpack.c.h.b16 %v400
        %v1653 = vunpack.c.l.b16 %v401
        %v1654 = vunpack.c.h.b16 %v401
        %v1655 = vunpack.c.l.b16 %v402
        %v1656 = vunpack.c.h.b16 %v402
        %v1657 = vunpack.c.l.b16 %v403
        %v1658 = vunpack.c.h.b16 %v403
        %v1659 = vunpack.c.l.b16 %v404
        %v1660 = vunpack.c.h.b16 %v404
        %v1661 = vunpack.c.l.b16 %v405
        %v1662 = vunpack.c.h.b16 %v405
        %v1663 = vunpack.c.l.b16 %v406
        %v1664 = vunpack.c.h.b16 %v406
        %v1665 = vunpack.c.l.b16 %v407
        %v1666 = vunpack.c.h.b16 %v407
        %v1667 = vunpack.c.l.b16 %v408
        %v1668 = vunpack.c.h.b16 %v408
        %v1669 = vunpack.c.l.b16 %v409
        %v1670 = vunpack.c.h.b16 %v409
        %v1671 = vunpack.c.l.b16 %v410
        %v1672 = vunpack.c.h.b16 %v410
        %v1673 = vunpack.c.l.b16 %v411
        %v1674 = vunpack.c.h.b16 %v411
        %v1675 = vunpack.c.l.b16 %v412
        %v1676 = vunpack.c.h.b16 %v412
        %v1677 = vunpack.c.l.b16 %v413
        %v1678 = vunpack.c.h.b16 %v413
        %v1679 = vunpack.c.l.b16 %v414
        %v1680 = vunpack.c.h.b16 %v414
        %v1681 = vunpack.c.l.b16 %v415
        %v1682 = vunpack.c.h.b16 %v415
        %v1683 = vunpack.c.l.b16 %v416
        %v1684 = vunpack.c.h.b16 %v416
        %v1685 = vunpack.c.l.b16 %v417
        %v1686 = vunpack.c.h.b16 %v417
        %v1687 = vunpack.c.l.b16 %v418
        %v1688 = vunpack.c.h.b16 %v418
        %v1689 = vunpack.c.l.b16 %v419
        %v1690 = vunpack.c.h.b16 %v419
        %v1691 = vunpack.c.l.b16 %v420
        %v1692 = vunpack.c.h.b16 %v420
        %v1693 = vunpack.c.l.b16 %v421
        %v1694 = vunpack.c.h.b16 %v421
        %v1695 = vunpack.c.l.b16 %v422
        %v1696 = vunpack.c.h.b16 %v422
        %v1697 = vunpack.c.l.b16 %v423
        %v1698 = vunpack.c.h.b16 %v423
        %v1699 = vunpack.c.l.b16 %v424
        %v1700 = vunpack.c.h.b16 %v424
        %v1701 = vunpack.c.l.b16 %v425
        %v1702 = vunpack.c.h.b16 %v425
        %v1703 = vunpack.c.l.b16 %v426
        %v1704 = vunpack.c.h.b16 %v426
        %v1705 = vunpack.c.l.b16 %v427
        %v1706 = vunpack.c.h.b16 %v427
        %v1707 = vunpack.c.l.b16 %v428
        %v1708 = vunpack.c.h.b16 %v428
        %v1709 = vunpack.c.l.b16 %v429
        %v1710 = vunpack.c.h.b16 %v429
        %v1711 = vunpack.c.l.b16 %v430
        %v1712 = vunpack.c.h.b16 %v430
        %v1713 = vunpack.c.l.b16 %v431
        %v1714 = vunpack.c.h.b16 %v431
        %v1715 = vunpack.c.l.b16 %v432
        %v1716 = vunpack.c.h.b16 %v432
        %v1717 = vunpack.c.l.b16 %v433
        %v1718 = vunpack.c.h.b16 %v433
        %v1719 = vunpack.c.l.b16 %v434
        %v1720 = vunpack.c.h.b16 %v434
        %v1721 = vunpack.c.l.b16 %v435
        %v1722 = vunpack.c.h.b16 %v435
        %v1723 = vunpack.c.l.b16 %v436
        %v1724 = vunpack.c.h.b16 %v436
        %v1725 = vunpack.c.l.b16 %v437
        %v1726 = vunpack.c.h.b16 %v437
        %v1727 = vunpack.c.l.b16 %v438
        %v1728 = vunpack.c.h.b16 %v438
        %v1729 = vunpack.c.l.b16 %v439
        %v1730 = vunpack.c.h.b16 %v439
        %v1731 = vunpack.c.l.b16 %v440
        %v1732 = vunpack.c.h.b16 %v440
        %v1733 = vunpack.c.l.b16 %v441
        %v1734 = vunpack.c.h.b16 %v441
        %v1735 = vunpack.c.l.b16 %v442
        %v1736 = vunpack.c.h.b16 %v442
        %v1737 = vunpack.c.l.b16 %v443
        %v1738 = vunpack.c.h.b16 %v443
        %v1739 = vunpack.c.l.b16 %v444
        %v1740 = vunpack.c.h.b16 %v444
        %v1741 = vunpack.c.l.b16 %v445
        %v1742 = vunpack.c.h.b16 %v445
        %v1743 = vunpack.c.l.b16 %v446
        %v1744 = vunpack.c.h.b16 %v446
        %v1745 = vunpack.c.l.b16 %v447
        %v1746 = vunpack.c.h.b16 %v447
        %v1747 = vunpack.c.l.b16 %v448
        %v1748 = vunpack.c.h.b16 %v448
        %v1749 = vunpack.c.l.b16 %v449
        %v1750 = vunpack.c.h.b16 %v449
        %v1751 = vunpack.c.l.b16 %v450
        %v1752 = vunpack.c.h.b16 %v450
        %v1753 = vunpack.c.l.b16 %v451
        %v1754 = vunpack.c.h.b16 %v451
        %v1755 = vunpack.c.l.b16 %v452
        %v1756 = vunpack.c.h.b16 %v452
        %v1757 = vunpack.c.l.b16 %v453
        %v1758 = vunpack.c.h.b16 %v453
        %v1759 = vunpack.c.l.b16 %v454
        %v1760 = vunpack.c.h.b16 %v454
        %v1761 = vunpack.c.l.b16 %v455
        %v1762 = vunpack.c.h.b16 %v455
        %v1763 = vunpack.c.l.b16 %v456
        %v1764 = vunpack.c.h.b16 %v456
        %v1765 = vunpack.c.l.b16 %v457
        %v1766 = vunpack.c.h.b16 %v457
        %v1767 = vunpack.c.l.b16 %v458
        %v1768 = vunpack.c.h.b16 %v458
        %v1769 = vunpack.c.l.b16 %v459
        %v1770 = vunpack.c.h.b16 %v459
        %v1771 = vunpack.c.l.b16 %v460
        %v1772 = vunpack.c.h.b16 %v460
        %v1773 = vunpack.c.l.b16 %v461
        %v1774 = vunpack.c.h.b16 %v461
        %v1775 = vunpack.c.l.b16 %v462
        %v1776 = vunpack.c.h.b16 %v462
        %v1777 = vunpack.c.l.b16 %v463
        %v1778 = vunpack.c.h.b16 %v463
        %v1779 = vunpack.c.l.b16 %v464
        %v1780 = vunpack.c.h.b16 %v464
        %v1781 = vunpack.c.l.b16 %v465
        %v1782 = vunpack.c.h.b16 %v465
        %v1783 = vunpack.c.l.b16 %v466
        %v1784 = vunpack.c.h.b16 %v466
        %v1785 = vunpack.c.l.b16 %v467
        %v1786 = vunpack.c.h.b16 %v467
        %v1787 = vunpack.c.l.b16 %v468
        %v1788 = vunpack.c.h.b16 %v468
        %v1789 = vunpack.c.l.b16 %v469
        %v1790 = vunpack.c.h.b16 %v469
        %v1791 = vunpack.c.l.b16 %v470
        %v1792 = vunpack.c.h.b16 %v470
        %v1793 = vunpack.c.l.b16 %v471
        %v1794 = vunpack.c.h.b16 %v471
        %v1795 = vunpack.c.l.b16 %v472
        %v1796 = vunpack.c.h.b16 %v472
        %v1797 = vunpack.c.l.b16 %v473
        %v1798 = vunpack.c.h.b16 %v473
        %v1799 = vunpack.c.l.b16 %v474
        %v1800 = vunpack.c.h.b16 %v474
        %v1801 = vunpack.c.l.b16 %v475
        %v1802 = vunpack.c.h.b16 %v475
        %v1803 = vunpack.c.l.b16 %v476
        %v1804 = vunpack.c.h.b16 %v476
        %v1805 = vunpack.c.l.b16 %v477
        %v1806 = vunpack.c.h.b16 %v477
        %v1807 = vunpack.c.l.b16 %v478
        %v1808 = vunpack.c.h.b16 %v478
        %v1809 = vunpack.c.l.b16 %v479
        %v1810 = vunpack.c.h.b16 %v479
        %v1811 = vunpack.c.l.b16 %v480
        %v1812 = vunpack.c.h.b16 %v480
        %v1813 = vunpack.c.l.b16 %v481
        %v1814 = vunpack.c.h.b16 %v481
        %v1815 = vunpack.c.l.b16 %v482
        %v1816 = vunpack.c.h.b16 %v482
        %v1817 = vunpack.c.l.b16 %v483
        %v1818 = vunpack.c.h.b16 %v483
        %v1819 = vunpack.c.l.b16 %v484
        %v1820 = vunpack.c.h.b16 %v484
        %v1821 = vunpack.c.l.b16 %v485
        %v1822 = vunpack.c.h.b16 %v485
        %v1823 = vunpack.c.l.b16 %v486
        %v1824 = vunpack.c.h.b16 %v486
        %v1825 = vunpack.c.l.b16 %v487
        %v1826 = vunpack.c.h.b16 %v487
        %v1827 = vunpack.c.l.b16 %v488
        %v1828 = vunpack.c.h.b16 %v488
        %v1829 = vunpack.c.l.b16 %v489
        %v1830 = vunpack.c.h.b16 %v489
        %v1831 = vunpack.c.l.b16 %v490
        %v1832 = vunpack.c.h.b16 %v490
        %v1833 = vunpack.c.l.b16 %v491
        %v1834 = vunpack.c.h.b16 %v491
        %v1835 = vunpack.c.l.b16 %v492
        %v1836 = vunpack.c.h.b16 %v492
        %v1837 = vunpack.c.l.b16 %v493
        %v1838 = vunpack.c.h.b16 %v493
        %v1839 = vunpack.c.l.b16 %v494
        %v1840 = vunpack.c.h.b16 %v494
        %v1841 = vunpack.c.l.b16 %v495
        %v1842 = vunpack.c.h.b16 %v495
        %v1843 = vunpack.c.l.b16 %v496
        %v1844 = vunpack.c.h.b16 %v496
        %v1845 = vunpack.c.l.b16 %v497
        %v1846 = vunpack.c.h.b16 %v497
        %v1847 = vunpack.c.l.b16 %v498
        %v1848 = vunpack.c.h.b16 %v498
        %v1849 = vunpack.c.l.b16 %v499
        %v1850 = vunpack.c.h.b16 %v499
        %v1851 = vunpack.c.l.b16 %v500
        %v1852 = vunpack.c.h.b16 %v500
        %v1853 = vunpack.c.l.b16 %v501
        %v1854 = vunpack.c.h.b16 %v501
        %v1855 = vunpack.c.l.b16 %v502
        %v1856 = vunpack.c.h.b16 %v502
        %v1857 = vunpack.c.l.b16 %v503
        %v1858 = vunpack.c.h.b16 %v503
        %v1859 = vunpack.c.l.b16 %v504
        %v1860 = vunpack.c.h.b16 %v504
        %v1861 = vunpack.c.l.b16 %v505
        %v1862 = vunpack.c.h.b16 %v505
        %v1863 = vunpack.c.l.b16 %v506
        %v1864 = vunpack.c.h.b16 %v506
        %v1865 = vunpack.c.l.b16 %v507
        %v1866 = vunpack.c.h.b16 %v507
        %v1867 = vunpack.c.l.b16 %v508
        %v1868 = vunpack.c.h.b16 %v508
        %v1869 = vunpack.c.l.b16 %v509
        %v1870 = vunpack.c.h.b16 %v509
        %v1871 = vunpack.c.l.b16 %v510
        %v1872 = vunpack.c.h.b16 %v510
        %v1873 = vunpack.c.l.b16 %v511
        %v1874 = vunpack.c.h.b16 %v511
        %v1875 = vunpack.c.l.b16 %v512
        %v1876 = vunpack.c.h.b16 %v512
        %v1877 = vunpack.c.l.b16 %v513
        %v1878 = vunpack.c.h.b16 %v513
        %v1879 = vunpack.c.l.b16 %v514
        %v1880 = vunpack.c.h.b16 %v514
        %v1881 = vunpack.c.l.b16 %v515
        %v1882 = vunpack.c.h.b16 %v515
        %v1883 = vunpack.c.l.b16 %v516
        %v1884 = vunpack.c.h.b16 %v516
        %v1885 = vunpack.c.l.b16 %v517
        %v1886 = vunpack.c.h.b16 %v517
        %v1887 = vunpack.c.l.b16 %v518
        %v1888 = vunpack.c.h.b16 %v518
        %v1889 = vunpack.c.l.b16 %v519
        %v1890 = vunpack.c.h.b16 %v519
        %v1891 = vunpack.c.l.b16 %v520
        %v1892 = vunpack.c.h.b16 %v520
        %v1893 = vunpack.c.l.b16 %v521
        %v1894 = vunpack.c.h.b16 %v521
        %v1895 = vunpack.c.l.b16 %v522
        %v1896 = vunpack.c.h.b16 %v522
        %v1897 = vunpack.c.l.b16 %v523
        %v1898 = vunpack.c.h.b16 %v523
        %v1899 = vunpack.c.l.b16 %v524
        %v1900 = vunpack.c.h.b16 %v524
        %v1901 = vunpack.c.l.b16 %v525
        %v1902 = vunpack.c.h.b16 %v525
        %v1903 = vunpack.c.l.b16 %v526
        %v1904 = vunpack.c.h.b16 %v526
        %v1905 = vunpack.c.l.b16 %v527
        %v1906 = vunpack.c.h.b16 %v527
        %v1907 = vunpack.c.l.b16 %v528
        %v1908 = vunpack.c.h.b16 %v528
        %v1909 = vunpack.c.l.b16 %v529
        %v1910 = vunpack.c.h.b16 %v529
        %v1911 = vunpack.c.l.b16 %v530
        %v1912 = vunpack.c.h.b16 %v530
        %v1913 = vunpack.c.l.b16 %v531
        %v1914 = vunpack.c.h.b16 %v531
        %v1915 = vunpack.c.l.b16 %v532
        %v1916 = vunpack.c.h.b16 %v532
        %v1917 = vunpack.c.l.b16 %v533
        %v1918 = vunpack.c.h.b16 %v533
        %v1919 = vunpack.c.l.b16 %v534
        %v1920 = vunpack.c.h.b16 %v534
        %v1921 = vunpack.c.l.b16 %v535
        %v1922 = vunpack.c.h.b16 %v535
        %v1923 = vunpack.c.l.b16 %v536
        %v1924 = vunpack.c.h.b16 %v536
        %v1925 = vunpack.c.l.b16 %v537
        %v1926 = vunpack.c.h.b16 %v537
        %v1927 = vunpack.c.l.b16 %v538
        %v1928 = vunpack.c.h.b16 %v538
        %v1929 = vunpack.c.l.b16 %v539
        %v1930 = vunpack.c.h.b16 %v539
        %v1931 = vunpack.c.l.b16 %v540
        %v1932 = vunpack.c.h.b16 %v540
        %v1933 = vunpack.c.l.b16 %v541
        %v1934 = vunpack.c.h.b16 %v541
        %v1935 = vunpack.c.l.b16 %v542
        %v1936 = vunpack.c.h.b16 %v542
        %v1937 = vunpack.c.l.b16 %v543
        %v1938 = vunpack.c.h.b16 %v543
        %v1939 = vunpack.c.l.b16 %v544
        %v1940 = vunpack.c.h.b16 %v544
        %v1941 = vunpack.c.l.b16 %v545
        %v1942 = vunpack.c.h.b16 %v545
        %v1943 = vunpack.c.l.b16 %v546
        %v1944 = vunpack.c.h.b16 %v546
        %v1945 = vunpack.c.l.b16 %v547
        %v1946 = vunpack.c.h.b16 %v547
        %v1947 = vunpack.c.l.b16 %v548
        %v1948 = vunpack.c.h.b16 %v548
        %v1949 = vunpack.c.l.b16 %v549
        %v1950 = vunpack.c.h.b16 %v549
        %v1951 = vunpack.c.l.b16 %v550
        %v1952 = vunpack.c.h.b16 %v550
        %v1953 = vunpack.c.l.b16 %v551
        %v1954 = vunpack.c.h.b16 %v551
        %v1955 = vunpack.c.l.b16 %v552
        %v1956 = vunpack.c.h.b16 %v552
        %v1957 = vunpack.c.l.b16 %v553
        %v1958 = vunpack.c.h.b16 %v553
        %v1959 = vunpack.c.l.b16 %v554
        %v1960 = vunpack.c.h.b16 %v554
        %v1961 = vunpack.c.l.b16 %v555
        %v1962 = vunpack.c.h.b16 %v555
        %v1963 = vunpack.c.l.b16 %v556
        %v1964 = vunpack.c.h.b16 %v556
        %v1965 = vunpack.c.l.b16 %v557
        %v1966 = vunpack.c.h.b16 %v557
        %v1967 = vunpack.c.l.b16 %v558
        %v1968 = vunpack.c.h.b16 %v558
        %v1969 = vunpack.c.l.b16 %v559
        %v1970 = vunpack.c.h.b16 %v559
        %v1971 = vunpack.c.l.b16 %v560
        %v1972 = vunpack.c.h.b16 %v560
        %v1973 = vunpack.c.l.b16 %v561
        %v1974 = vunpack.c.h.b16 %v561
        %v1975 = vunpack.c.l.b16 %v562
        %v1976 = vunpack.c.h.b16 %v562
        %v1977 = vunpack.c.l.b16 %v563
        %v1978 = vunpack.c.h.b16 %v563
        %v1979 = vunpack.c.l.b16 %v564
        %v1980 = vunpack.c.h.b16 %v564
        %v1981 = vunpack.c.l.b16 %v565
        %v1982 = vunpack.c.h.b16 %v565
        %v1983 = vunpack.c.l.b16 %v566
        %v1984 = vunpack.c.h.b16 %v566
        %v1985 = vunpack.c.l.b16 %v567
        %v1986 = vunpack.c.h.b16 %v567
        %v1987 = vunpack.c.l.b16 %v568
        %v1988 = vunpack.c.h.b16 %v568
        %v1989 = vunpack.c.l.b16 %v569
        %v1990 = vunpack.c.h.b16 %v569
        %v1991 = vunpack.c.l.b16 %v570
        %v1992 = vunpack.c.h.b16 %v570
        %v1993 = vunpack.c.l.b16 %v571
        %v1994 = vunpack.c.h.b16 %v571
        %v1995 = vunpack.c.l.b16 %v572
        %v1996 = vunpack.c.h.b16 %v572
        %v1997 = vunpack.c.l.b16 %v573
        %v1998 = vunpack.c.h.b16 %v573
        %v1999 = vunpack.c.l.b16 %v574
        %v2000 = vunpack.c.h.b16 %v574
        %v2001 = vunpack.c.l.b16 %v575
        %v2002 = vunpack.c.h.b16 %v575
        %v2003 = vunpack.c.l.b16 %v576
        %v2004 = vunpack.c.h.b16 %v576
        %v2005 = vunpack.c.l.b16 %v577
        %v2006 = vunpack.c.h.b16 %v577
        %v2007 = vunpack.c.l.b16 %v578
        %v2008 = vunpack.c.h.b16 %v578
        %v2009 = vunpack.c.l.b16 %v579
        %v2010 = vunpack.c.h.b16 %v579
        %v2011 = vunpack.c.l.b16 %v580
        %v2012 = vunpack.c.h.b16 %v580
        %v2013 = vunpack.c.l.b16 %v581
        %v2014 = vunpack.c.h.b16 %v581
        %v2015 = vunpack.c.l.b16 %v582
        %v2016 = vunpack.c.h.b16 %v582
        %v2017 = vunpack.c.l.b16 %v583
        %v2018 = vunpack.c.h.b16 %v583
        %v2019 = vunpack.c.l.b16 %v584
        %v2020 = vunpack.c.h.b16 %v584
        %v2021 = vunpack.c.l.b16 %v585
        %v2022 = vunpack.c.h.b16 %v585
        %v2023 = vunpack.c.l.b16 %v586
        %v2024 = vunpack.c.h.b16 %v586
        %v2025 = vunpack.c.l.b16 %v587
        %v2026 = vunpack.c.h.b16 %v587
        %v2027 = vunpack.c.l.b16 %v588
        %v2028 = vunpack.c.h.b16 %v588
        %v2029 = vunpack.c.l.b16 %v589
        %v2030 = vunpack.c.h.b16 %v589
        %v2031 = vunpack.c.l.b16 %v590
        %v2032 = vunpack.c.h.b16 %v590
        %v2033 = vunpack.c.l.b16 %v591
        %v2034 = vunpack.c.h.b16 %v591
        %v2035 = vunpack.c.l.b16 %v592
        %v2036 = vunpack.c.h.b16 %v592
        %v2037 = vunpack.c.l.b16 %v593
        %v2038 = vunpack.c.h.b16 %v593
        %v2039 = vunpack.c.l.b16 %v594
        %v2040 = vunpack.c.h.b16 %v594
        %v2041 = vunpack.c.l.b16 %v595
        %v2042 = vunpack.c.h.b16 %v595
        %v2043 = vunpack.c.l.b16 %v596
        %v2044 = vunpack.c.h.b16 %v596
        %v2045 = vunpack.c.l.b16 %v597
        %v2046 = vunpack.c.h.b16 %v597
        %v2047 = vunpack.c.l.b16 %v598
        %v2048 = vunpack.c.h.b16 %v598
        %v2049 = vunpack.c.l.b16 %v599
        %v2050 = vunpack.c.h.b16 %v599
        %v2051 = vunpack.c.l.b16 %v600
        %v2052 = vunpack.c.h.b16 %v600
        %v2053 = vunpack.c.l.b16 %v601
        %v2054 = vunpack.c.h.b16 %v601
        %v2055 = vunpack.c.l.b16 %v602
        %v2056 = vunpack.c.h.b16 %v602
        %v2057 = vunpack.c.l.b16 %v603
        %v2058 = vunpack.c.h.b16 %v603
        %v2059 = vunpack.c.l.b16 %v604
        %v2060 = vunpack.c.h.b16 %v604
        %v2061 = vunpack.c.l.b16 %v605
        %v2062 = vunpack.c.h.b16 %v605
        %v2063 = vunpack.c.l.b16 %v606
        %v2064 = vunpack.c.h.b16 %v606
        %v2065 = vunpack.c.l.b16 %v607
        %v2066 = vunpack.c.h.b16 %v607
        %v2067 = vunpack.c.l.b16 %v608
        %v2068 = vunpack.c.h.b16 %v608
        %v2069 = vunpack.c.l.b16 %v609
        %v2070 = vunpack.c.h.b16 %v609
        %v2071 = vunpack.c.l.b16 %v610
        %v2072 = vunpack.c.h.b16 %v610
        %v2073 = vunpack.c.l.b16 %v611
        %v2074 = vunpack.c.h.b16 %v611
        %v2075 = vunpack.c.l.b16 %v612
        %v2076 = vunpack.c.h.b16 %v612
        %v2077 = vunpack.c.l.b16 %v613
        %v2078 = vunpack.c.h.b16 %v613
        %v2079 = vunpack.c.l.b16 %v614
        %v2080 = vunpack.c.h.b16 %v614
        %v2081 = vunpack.c.l.b16 %v615
        %v2082 = vunpack.c.h.b16 %v615
        %v2083 = vunpack.c.l.b16 %v616
        %v2084 = vunpack.c.h.b16 %v616
        %v2085 = vunpack.c.l.b16 %v617
        %v2086 = vunpack.c.h.b16 %v617
        %v2087 = vunpack.c.l.b16 %v618
        %v2088 = vunpack.c.h.b16 %v618
        %v2089 = vunpack.c.l.b16 %v619
        %v2090 = vunpack.c.h.b16 %v619
        %v2091 = vunpack.c.l.b16 %v620
        %v2092 = vunpack.c.h.b16 %v620
        %v2093 = vunpack.c.l.b16 %v621
        %v2094 = vunpack.c.h.b16 %v621
        %v2095 = vunpack.c.l.b16 %v622
        %v2096 = vunpack.c.h.b16 %v622
        %v2097 = vunpack.c.l.b16 %v623
        %v2098 = vunpack.c.h.b16 %v623
        %v2099 = vunpack.c.l.b16 %v624
        %v2100 = vunpack.c.h.b16 %v624
        %v2101 = vunpack.c.l.b16 %v625
        %v2102 = vunpack.c.h.b16 %v625
        %v2103 = vunpack.c.l.b16 %v626
        %v2104 = vunpack.c.h.b16 %v626
        %v2105 = vunpack.c.l.b16 %v627
        %v2106 = vunpack.c.h.b16 %v627
        %v2107 = vunpack.c.l.b16 %v628
        %v2108 = vunpack.c.h.b16 %v628
        %v2109 = vunpack.c.l.b16 %v629
        %v2110 = vunpack.c.h.b16 %v629
        %v2111 = vunpack.c.l.b16 %v630
        %v2112 = vunpack.c.h.b16 %v630
        %v2113 = vunpack.c.l.b16 %v631
        %v2114 = vunpack.c.h.b16 %v631
        %v2115 = vunpack.c.l.b16 %v632
        %v2116 = vunpack.c.h.b16 %v632
        %v2117 = vunpack.c.l.b16 %v633
        %v2118 = vunpack.c.h.b16 %v633
        %v2119 = vunpack.c.l.b16 %v634
        %v2120 = vunpack.c.h.b16 %v634
        %v2121 = vunpack.c.l.b16 %v635
        %v2122 = vunpack.c.h.b16 %v635
        %v2123 = vunpack.c.l.b16 %v636
        %v2124 = vunpack.c.h.b16 %v636
        %v2125 = vunpack.c.l.b16 %v637
        %v2126 = vunpack.c.h.b16 %v637
        %v2127 = vunpack.c.l.b16 %v638
        %v2128 = vunpack.c.h.b16 %v638
        %v2129 = vunpack.c.l.b16 %v639
        %v2130 = vunpack.c.h.b16 %v639
        %v2131 = vunpack.c.l.b16 %v640
        %v2132 = vunpack.c.h.b16 %v640
        %v2133 = vunpack.c.l.b16 %v641
        %v2134 = vunpack.c.h.b16 %v641
        %v2135 = vunpack.c.l.b16 %v642
        %v2136 = vunpack.c.h.b16 %v642
        %v2137 = vunpack.c.l.b16 %v643
        %v2138 = vunpack.c.h.b16 %v643
        %v2139 = vunpack.c.l.b16 %v644
        %v2140 = vunpack.c.h.b16 %v644
        %v2141 = vunpack.c.l.b16 %v645
        %v2142 = vunpack.c.h.b16 %v645
        %v2143 = vunpack.c.l.b16 %v646
        %v2144 = vunpack.c.h.b16 %v646
        %v2145 = vunpack.c.l.b16 %v647
        %v2146 = vunpack.c.h.b16 %v647
        %v2147 = vunpack.c.l.b16 %v648
        %v2148 = vunpack.c.h.b16 %v648
        %v2149 = vunpack.c.l.b16 %v649
        %v2150 = vunpack.c.h.b16 %v649
        %v2151 = vunpack.c.l.b16 %v650
        %v2152 = vunpack.c.h.b16 %v650
        %v2153 = vunpack.c.l.b16 %v651
        %v2154 = vunpack.c.h.b16 %v651
        %v2155 = vunpack.c.l.b16 %v652
        %v2156 = vunpack.c.h.b16 %v652
        %v2157 = vunpack.c.l.b16 %v653
        %v2158 = vunpack.c.h.b16 %v653
        %v2159 = vunpack.c.l.b16 %v654
        %v2160 = vunpack.c.h.b16 %v654
        %v2161 = vunpack.c.l.b16 %v655
        %v2162 = vunpack.c.h.b16 %v655
        %v2163 = vunpack.c.l.b16 %v656
        %v2164 = vunpack.c.h.b16 %v656
        %v2165 = vunpack.c.l.b16 %v657
        %v2166 = vunpack.c.h.b16 %v657
        %v2167 = vunpack.c.l.b16 %v658
        %v2168 = vunpack.c.h.b16 %v658
        %v2169 = vunpack.c.l.b16 %v659
        %v2170 = vunpack.c.h.b16 %v659
        %v2171 = vunpack.c.l.b16 %v660
        %v2172 = vunpack.c.h.b16 %v660
        %v2173 = vunpack.c.l.b16 %v661
        %v2174 = vunpack.c.h.b16 %v661
        %v2175 = vunpack.c.l.b16 %v662
        %v2176 = vunpack.c.h.b16 %v662
        %v2177 = vunpack.c.l.b16 %v663
        %v2178 = vunpack.c.h.b16 %v663
        %v2179 = vunpack.c.l.b16 %v664
        %v2180 = vunpack.c.h.b16 %v664
        %v2181 = vunpack.c.l.b16 %v665
        %v2182 = vunpack.c.h.b16 %v665
        %v2183 = vunpack.c.l.b16 %v666
        %v2184 = vunpack.c.h.b16 %v666
        %v2185 = vunpack.c.l.b16 %v667
        %v2186 = vunpack.c.h.b16 %v667
        %v2187 = vunpack.c.l.b16 %v668
        %v2188 = vunpack.c.h.b16 %v668
        %v2189 = vunpack.c.l.b16 %v669
        %v2190 = vunpack.c.h.b16 %v669
        %v2191 = vunpack.c.l.b16 %v670
        %v2192 = vunpack.c.h.b16 %v670
        %v2193 = vunpack.c.l.b16 %v671
        %v2194 = vunpack.c.h.b16 %v671
        %v2195 = vunpack.c.l.b16 %v672
        %v2196 = vunpack.c.h.b16 %v672
        %v2197 = vunpack.c.l.b16 %v673
        %v2198 = vunpack.c.h.b16 %v673
        %v2199 = vunpack.c.l.b16 %v674
        %v2200 = vunpack.c.h.b16 %v674
        %v2201 = vunpack.c.l.b16 %v675
        %v2202 = vunpack.c.h.b16 %v675
        %v2203 = vunpack.c.l.b16 %v676
        %v2204 = vunpack.c.h.b16 %v676
        %v2205 = vunpack.c.l.b16 %v677
        %v2206 = vunpack.c.h.b16 %v677
        %v2207 = vunpack.c.l.b16 %v678
        %v2208 = vunpack.c.h.b16 %v678
        %v2209 = vunpack.c.l.b16 %v679
        %v2210 = vunpack.c.h.b16 %v679
        %v2211 = vunpack.c.l.b16 %v680
        %v2212 = vunpack.c.h.b16 %v680
        %v2213 = vunpack.c.l.b16 %v681
        %v2214 = vunpack.c.h.b16 %v681
        %v2215 = vunpack.c.l.b16 %v682
        %v2216 = vunpack.c.h.b16 %v682
        %v2217 = vunpack.c.l.b16 %v683
        %v2218 = vunpack.c.h.b16 %v683
        %v2219 = vunpack.c.l.b16 %v684
        %v2220 = vunpack.c.h.b16 %v684
        %v2221 = vpack.c.b16 %v1465, %v1453
        %v2222 = vpack.c.b16 %v1466, %v1454
        %v2223 = vpack.c.b16 %v1467, %v1455
        %v2224 = vpack.c.b16 %v1468, %v1456
        %v2225 = vpack.c.b16 %v1469, %v1457
        %v2226 = vpack.c.b16 %v1470, %v1458
        %v2227 = vpack.c.b16 %v1471, %v1459
        %v2228 = vpack.c.b16 %v1472, %v1460
        %v2229 = vpack.c.b16 %v1473, %v1461
        %v2230 = vpack.c.b16 %v1474, %v1462
        %v2231 = vpack.c.b16 %v1475, %v1463
        %v2232 = vpack.c.b16 %v1476, %v1464
        %v2233 = vpack.c.b16 %v1489, %v1477
        %v2234 = vpack.c.b16 %v1490, %v1478
        %v2235 = vpack.c.b16 %v1491, %v1479
        %v2236 = vpack.c.b16 %v1492, %v1480
        %v2237 = vpack.c.b16 %v1493, %v1481
        %v2238 = vpack.c.b16 %v1494, %v1482
        %v2239 = vpack.c.b16 %v1495, %v1483
        %v2240 = vpack.c.b16 %v1496, %v1484
        %v2241 = vpack.c.b16 %v1497, %v1485
        %v2242 = vpack.c.b16 %v1498, %v1486
        %v2243 = vpack.c.b16 %v1499, %v1487
        %v2244 = vpack.c.b16 %v1500, %v1488
        %v2245 = vpack.c.b16 %v1513, %v1501
        %v2246 = vpack.c.b16 %v1514, %v1502
        %v2247 = vpack.c.b16 %v1515, %v1503
        %v2248 = vpack.c.b16 %v1516, %v1504
        %v2249 = vpack.c.b16 %v1517, %v1505
        %v2250 = vpack.c.b16 %v1518, %v1506
        %v2251 = vpack.c.b16 %v1519, %v1507
        %v2252 = vpack.c.b16 %v1520, %v1508
        %v2253 = vpack.c.b16 %v1521, %v1509
        %v2254 = vpack.c.b16 %v1522, %v1510
        %v2255 = vpack.c.b16 %v1523, %v1511
        %v2256 = vpack.c.b16 %v1524, %v1512
        %v2257 = vpack.c.b16 %v1537, %v1525
        %v2258 = vpack.c.b16 %v1538, %v1526
        %v2259 = vpack.c.b16 %v1539, %v1527
        %v2260 = vpack.c.b16 %v1540, %v1528
        %v2261 = vpack.c.b16 %v1541, %v1529
        %v2262 = vpack.c.b16 %v1542, %v1530
        %v2263 = vpack.c.b16 %v1543, %v1531
        %v2264 = vpack.c.b16 %v1544, %v1532
        %v2265 = vpack.c.b16 %v1545, %v1533
        %v2266 = vpack.c.b16 %v1546, %v1534
        %v2267 = vpack.c.b16 %v1547, %v1535
        %v2268 = vpack.c.b16 %v1548, %v1536
        %v2269 = vpack.c.b16 %v1561, %v1549
        %v2270 = vpack.c.b16 %v1562, %v1550
        %v2271 = vpack.c.b16 %v1563, %v1551
        %v2272 = vpack.c.b16 %v1564, %v1552
        %v2273 = vpack.c.b16 %v1565, %v1553
        %v2274 = vpack.c.b16 %v1566, %v1554
        %v2275 = vpack.c.b16 %v1567, %v1555
        %v2276 = vpack.c.b16 %v1568, %v1556
        %v2277 = vpack.c.b16 %v1569, %v1557
        %v2278 = vpack.c.b16 %v1570, %v1558
        %v2279 = vpack.c.b16 %v1571, %v1559
        %v2280 = vpack.c.b16 %v1572, %v1560
        %v2281 = vpack.c.b16 %v1585, %v1573
        %v2282 = vpack.c.b16 %v1586, %v1574
        %v2283 = vpack.c.b16 %v1587, %v1575
        %v2284 = vpack.c.b16 %v1588, %v1576
        %v2285 = vpack.c.b16 %v1589, %v1577
        %v2286 = vpack.c.b16 %v1590, %v1578
        %v2287 = vpack.c.b16 %v1591, %v1579
        %v2288 = vpack.c.b16 %v1592, %v1580
        %v2289 = vpack.c.b16 %v1593, %v1581
        %v2290 = vpack.c.b16 %v1594, %v1582
        %v2291 = vpack.c.b16 %v1595, %v1583
        %v2292 = vpack.c.b16 %v1596, %v1584
        %v2293 = vpack.c.b16 %v1609, %v1597
        %v2294 = vpack.c.b16 %v1610, %v1598
        %v2295 = vpack.c.b16 %v1611, %v1599
        %v2296 = vpack.c.b16 %v1612, %v1600
        %v2297 = vpack.c.b16 %v1613, %v1601
        %v2298 = vpack.c.b16 %v1614, %v1602
        %v2299 = vpack.c.b16 %v1615, %v1603
        %v2300 = vpack.c.b16 %v1616, %v1604
        %v2301 = vpack.c.b16 %v1617, %v1605
        %v2302 = vpack.c.b16 %v1618, %v1606
        %v2303 = vpack.c.b16 %v1619, %v1607
        %v2304 = vpack.c.b16 %v1620, %v1608
        %v2305 = vpack.c.b16 %v1633, %v1621
        %v2306 = vpack.c.b16 %v1634, %v1622
        %v2307 = vpack.c.b16 %v1635, %v1623
        %v2308 = vpack.c.b16 %v1636, %v1624
        %v2309 = vpack.c.b16 %v1637, %v1625
        %v2310 = vpack.c.b16 %v1638, %v1626
        %v2311 = vpack.c.b16 %v1639, %v1627
        %v2312 = vpack.c.b16 %v1640, %v1628
        %v2313 = vpack.c.b16 %v1641, %v1629
        %v2314 = vpack.c.b16 %v1642, %v1630
        %v2315 = vpack.c.b16 %v1643, %v1631
        %v2316 = vpack.c.b16 %v1644, %v1632
        %v2317 = vpack.c.b16 %v1657, %v1645
        %v2318 = vpack.c.b16 %v1658, %v1646
        %v2319 = vpack.c.b16 %v1659, %v1647
        %v2320 = vpack.c.b16 %v1660, %v1648
        %v2321 = vpack.c.b16 %v1661, %v1649
        %v2322 = vpack.c.b16 %v1662, %v1650
        %v2323 = vpack.c.b16 %v1663, %v1651
        %v2324 = vpack.c.b16 %v1664, %v1652
        %v2325 = vpack.c.b16 %v1665, %v1653
        %v2326 = vpack.c.b16 %v1666, %v1654
        %v2327 = vpack.c.b16 %v1667, %v1655
        %v2328 = vpack.c.b16 %v1668, %v1656
        %v2329 = vpack.c.b16 %v1681, %v1669
        %v2330 = vpack.c.b16 %v1682, %v1670
        %v2331 = vpack.c.b16 %v1683, %v1671
        %v2332 = vpack.c.b16 %v1684, %v1672
        %v2333 = vpack.c.b16 %v1685, %v1673
        %v2334 = vpack.c.b16 %v1686, %v1674
        %v2335 = vpack.c.b16 %v1687, %v1675
        %v2336 = vpack.c.b16 %v1688, %v1676
        %v2337 = vpack.c.b16 %v1689, %v1677
        %v2338 = vpack.c.b16 %v1690, %v1678
        %v2339 = vpack.c.b16 %v1691, %v1679
        %v2340 = vpack.c.b16 %v1692, %v1680
        %v2341 = vpack.c.b16 %v1705, %v1693
        %v2342 = vpack.c.b16 %v1706, %v1694
        %v2343 = vpack.c.b16 %v1707, %v1695
        %v2344 = vpack.c.b16 %v1708, %v1696
        %v2345 = vpack.c.b16 %v1709, %v1697
        %v2346 = vpack.c.b16 %v1710, %v1698
        %v2347 = vpack.c.b16 %v1711, %v1699
        %v2348 = vpack.c.b16 %v1712, %v1700
        %v2349 = vpack.c.b16 %v1713, %v1701
        %v2350 = vpack.c.b16 %v1714, %v1702
        %v2351 = vpack.c.b16 %v1715, %v1703
        %v2352 = vpack.c.b16 %v1716, %v1704
        %v2353 = vpack.c.b16 %v1729, %v1717
        %v2354 = vpack.c.b16 %v1730, %v1718
        %v2355 = vpack.c.b16 %v1731, %v1719
        %v2356 = vpack.c.b16 %v1732, %v1720
        %v2357 = vpack.c.b16 %v1733, %v1721
        %v2358 = vpack.c.b16 %v1734, %v1722
        %v2359 = vpack.c.b16 %v1735, %v1723
        %v2360 = vpack.c.b16 %v1736, %v1724
        %v2361 = vpack.c.b16 %v1737, %v1725
        %v2362 = vpack.c.b16 %v1738, %v1726
        %v2363 = vpack.c.b16 %v1739, %v1727
        %v2364 = vpack.c.b16 %v1740, %v1728
        %v2365 = vpack.c.b16 %v1753, %v1741
        %v2366 = vpack.c.b16 %v1754, %v1742
        %v2367 = vpack.c.b16 %v1755, %v1743
        %v2368 = vpack.c.b16 %v1756, %v1744
        %v2369 = vpack.c.b16 %v1757, %v1745
        %v2370 = vpack.c.b16 %v1758, %v1746
        %v2371 = vpack.c.b16 %v1759, %v1747
        %v2372 = vpack.c.b16 %v1760, %v1748
        %v2373 = vpack.c.b16 %v1761, %v1749
        %v2374 = vpack.c.b16 %v1762, %v1750
        %v2375 = vpack.c.b16 %v1763, %v1751
        %v2376 = vpack.c.b16 %v1764, %v1752
        %v2377 = vpack.c.b16 %v1777, %v1765
        %v2378 = vpack.c.b16 %v1778, %v1766
        %v2379 = vpack.c.b16 %v1779, %v1767
        %v2380 = vpack.c.b16 %v1780, %v1768
        %v2381 = vpack.c.b16 %v1781, %v1769
        %v2382 = vpack.c.b16 %v1782, %v1770
        %v2383 = vpack.c.b16 %v1783, %v1771
        %v2384 = vpack.c.b16 %v1784, %v1772
        %v2385 = vpack.c.b16 %v1785, %v1773
        %v2386 = vpack.c.b16 %v1786, %v1774
        %v2387 = vpack.c.b16 %v1787, %v1775
        %v2388 = vpack.c.b16 %v1788, %v1776
        %v2389 = vpack.c.b16 %v1801, %v1789
        %v2390 = vpack.c.b16 %v1802, %v1790
        %v2391 = vpack.c.b16 %v1803, %v1791
        %v2392 = vpack.c.b16 %v1804, %v1792
        %v2393 = vpack.c.b16 %v1805, %v1793
        %v2394 = vpack.c.b16 %v1806, %v1794
        %v2395 = vpack.c.b16 %v1807, %v1795
        %v2396 = vpack.c.b16 %v1808, %v1796
        %v2397 = vpack.c.b16 %v1809, %v1797
        %v2398 = vpack.c.b16 %v1810, %v1798
        %v2399 = vpack.c.b16 %v1811, %v1799
        %v2400 = vpack.c.b16 %v1812, %v1800
        %v2401 = vpack.c.b16 %v1825, %v1813
        %v2402 = vpack.c.b16 %v1826, %v1814
        %v2403 = vpack.c.b16 %v1827, %v1815
        %v2404 = vpack.c.b16 %v1828, %v1816
        %v2405 = vpack.c.b16 %v1829, %v1817
        %v2406 = vpack.c.b16 %v1830, %v1818
        %v2407 = vpack.c.b16 %v1831, %v1819
        %v2408 = vpack.c.b16 %v1832, %v1820
        %v2409 = vpack.c.b16 %v1833, %v1821
        %v2410 = vpack.c.b16 %v1834, %v1822
        %v2411 = vpack.c.b16 %v1835, %v1823
        %v2412 = vpack.c.b16 %v1836, %v1824
        %v2413 = vpack.c.b16 %v1849, %v1837
        %v2414 = vpack.c.b16 %v1850, %v1838
        %v2415 = vpack.c.b16 %v1851, %v1839
        %v2416 = vpack.c.b16 %v1852, %v1840
        %v2417 = vpack.c.b16 %v1853, %v1841
        %v2418 = vpack.c.b16 %v1854, %v1842
        %v2419 = vpack.c.b16 %v1855, %v1843
        %v2420 = vpack.c.b16 %v1856, %v1844
        %v2421 = vpack.c.b16 %v1857, %v1845
        %v2422 = vpack.c.b16 %v1858, %v1846
        %v2423 = vpack.c.b16 %v1859, %v1847
        %v2424 = vpack.c.b16 %v1860, %v1848
        %v2425 = vpack.c.b16 %v1873, %v1861
        %v2426 = vpack.c.b16 %v1874, %v1862
        %v2427 = vpack.c.b16 %v1875, %v1863
        %v2428 = vpack.c.b16 %v1876, %v1864
        %v2429 = vpack.c.b16 %v1877, %v1865
        %v2430 = vpack.c.b16 %v1878, %v1866
        %v2431 = vpack.c.b16 %v1879, %v1867
        %v2432 = vpack.c.b16 %v1880, %v1868
        %v2433 = vpack.c.b16 %v1881, %v1869
        %v2434 = vpack.c.b16 %v1882, %v1870
        %v2435 = vpack.c.b16 %v1883, %v1871
        %v2436 = vpack.c.b16 %v1884, %v1872
        %v2437 = vpack.c.b16 %v1897, %v1885
        %v2438 = vpack.c.b16 %v1898, %v1886
        %v2439 = vpack.c.b16 %v1899, %v1887
        %v2440 = vpack.c.b16 %v1900, %v1888
        %v2441 = vpack.c.b16 %v1901, %v1889
        %v2442 = vpack.c.b16 %v1902, %v1890
        %v2443 = vpack.c.b16 %v1903, %v1891
        %v2444 = vpack.c.b16 %v1904, %v1892
        %v2445 = vpack.c.b16 %v1905, %v1893
        %v2446 = vpack.c.b16 %v1906, %v1894
        %v2447 = vpack.c.b16 %v1907, %v1895
        %v2448 = vpack.c.b16 %v1908, %v1896
        %v2449 = vpack.c.b16 %v1921, %v1909
        %v2450 = vpack.c.b16 %v1922, %v1910
        %v2451 = vpack.c.b16 %v1923, %v1911
        %v2452 = vpack.c.b16 %v1924, %v1912
        %v2453 = vpack.c.b16 %v1925, %v1913
        %v2454 = vpack.c.b16 %v1926, %v1914
        %v2455 = vpack.c.b16 %v1927, %v1915
        %v2456 = vpack.c.b16 %v1928, %v1916
        %v2457 = vpack.c.b16 %v1929, %v1917
        %v2458 = vpack.c.b16 %v1930, %v1918
        %v2459 = vpack.c.b16 %v1931, %v1919
        %v2460 = vpack.c.b16 %v1932, %v1920
        %v2461 = vpack.c.b16 %v1945, %v1933
        %v2462 = vpack.c.b16 %v1946, %v1934
        %v2463 = vpack.c.b16 %v1947, %v1935
        %v2464 = vpack.c.b16 %v1948, %v1936
        %v2465 = vpack.c.b16 %v1949, %v1937
        %v2466 = vpack.c.b16 %v1950, %v1938
        %v2467 = vpack.c.b16 %v1951, %v1939
        %v2468 = vpack.c.b16 %v1952, %v1940
        %v2469 = vpack.c.b16 %v1953, %v1941
        %v2470 = vpack.c.b16 %v1954, %v1942
        %v2471 = vpack.c.b16 %v1955, %v1943
        %v2472 = vpack.c.b16 %v1956, %v1944
        %v2473 = vpack.c.b16 %v1969, %v1957
        %v2474 = vpack.c.b16 %v1970, %v1958
        %v2475 = vpack.c.b16 %v1971, %v1959
        %v2476 = vpack.c.b16 %v1972, %v1960
        %v2477 = vpack.c.b16 %v1973, %v1961
        %v2478 = vpack.c.b16 %v1974, %v1962
        %v2479 = vpack.c.b16 %v1975, %v1963
        %v2480 = vpack.c.b16 %v1976, %v1964
        %v2481 = vpack.c.b16 %v1977, %v1965
        %v2482 = vpack.c.b16 %v1978, %v1966
        %v2483 = vpack.c.b16 %v1979, %v1967
        %v2484 = vpack.c.b16 %v1980, %v1968
        %v2485 = vpack.c.b16 %v1993, %v1981
        %v2486 = vpack.c.b16 %v1994, %v1982
        %v2487 = vpack.c.b16 %v1995, %v1983
        %v2488 = vpack.c.b16 %v1996, %v1984
        %v2489 = vpack.c.b16 %v1997, %v1985
        %v2490 = vpack.c.b16 %v1998, %v1986
        %v2491 = vpack.c.b16 %v1999, %v1987
        %v2492 = vpack.c.b16 %v2000, %v1988
        %v2493 = vpack.c.b16 %v2001, %v1989
        %v2494 = vpack.c.b16 %v2002, %v1990
        %v2495 = vpack.c.b16 %v2003, %v1991
        %v2496 = vpack.c.b16 %v2004, %v1992
        %v2497 = vpack.c.b16 %v2017, %v2005
        %v2498 = vpack.c.b16 %v2018, %v2006
        %v2499 = vpack.c.b16 %v2019, %v2007
        %v2500 = vpack.c.b16 %v2020, %v2008
        %v2501 = vpack.c.b16 %v2021, %v2009
        %v2502 = vpack.c.b16 %v2022, %v2010
        %v2503 = vpack.c.b16 %v2023, %v2011
        %v2504 = vpack.c.b16 %v2024, %v2012
        %v2505 = vpack.c.b16 %v2025, %v2013
        %v2506 = vpack.c.b16 %v2026, %v2014
        %v2507 = vpack.c.b16 %v2027, %v2015
        %v2508 = vpack.c.b16 %v2028, %v2016
        %v2509 = vpack.c.b16 %v2041, %v2029
        %v2510 = vpack.c.b16 %v2042, %v2030
        %v2511 = vpack.c.b16 %v2043, %v2031
        %v2512 = vpack.c.b16 %v2044, %v2032
        %v2513 = vpack.c.b16 %v2045, %v2033
        %v2514 = vpack.c.b16 %v2046, %v2034
        %v2515 = vpack.c.b16 %v2047, %v2035
        %v2516 = vpack.c.b16 %v2048, %v2036
        %v2517 = vpack.c.b16 %v2049, %v2037
        %v2518 = vpack.c.b16 %v2050, %v2038
        %v2519 = vpack.c.b16 %v2051, %v2039
        %v2520 = vpack.c.b16 %v2052, %v2040
        %v2521 = vpack.c.b16 %v2065, %v2053
        %v2522 = vpack.c.b16 %v2066, %v2054
        %v2523 = vpack.c.b16 %v2067, %v2055
        %v2524 = vpack.c.b16 %v2068, %v2056
        %v2525 = vpack.c.b16 %v2069, %v2057
        %v2526 = vpack.c.b16 %v2070, %v2058
        %v2527 = vpack.c.b16 %v2071, %v2059
        %v2528 = vpack.c.b16 %v2072, %v2060
        %v2529 = vpack.c.b16 %v2073, %v2061
        %v2530 = vpack.c.b16 %v2074, %v2062
        %v2531 = vpack.c.b16 %v2075, %v2063
        %v2532 = vpack.c.b16 %v2076, %v2064
        %v2533 = vpack.c.b16 %v2089, %v2077
        %v2534 = vpack.c.b16 %v2090, %v2078
        %v2535 = vpack.c.b16 %v2091, %v2079
        %v2536 = vpack.c.b16 %v2092, %v2080
        %v2537 = vpack.c.b16 %v2093, %v2081
        %v2538 = vpack.c.b16 %v2094, %v2082
        %v2539 = vpack.c.b16 %v2095, %v2083
        %v2540 = vpack.c.b16 %v2096, %v2084
        %v2541 = vpack.c.b16 %v2097, %v2085
        %v2542 = vpack.c.b16 %v2098, %v2086
        %v2543 = vpack.c.b16 %v2099, %v2087
        %v2544 = vpack.c.b16 %v2100, %v2088
        %v2545 = vpack.c.b16 %v2113, %v2101
        %v2546 = vpack.c.b16 %v2114, %v2102
        %v2547 = vpack.c.b16 %v2115, %v2103
        %v2548 = vpack.c.b16 %v2116, %v2104
        %v2549 = vpack.c.b16 %v2117, %v2105
        %v2550 = vpack.c.b16 %v2118, %v2106
        %v2551 = vpack.c.b16 %v2119, %v2107
        %v2552 = vpack.c.b16 %v2120, %v2108
        %v2553 = vpack.c.b16 %v2121, %v2109
        %v2554 = vpack.c.b16 %v2122, %v2110
        %v2555 = vpack.c.b16 %v2123, %v2111
        %v2556 = vpack.c.b16 %v2124, %v2112
        %v2557 = vpack.c.b16 %v2137, %v2125
        %v2558 = vpack.c.b16 %v2138, %v2126
        %v2559 = vpack.c.b16 %v2139, %v2127
        %v2560 = vpack.c.b16 %v2140, %v2128
        %v2561 = vpack.c.b16 %v2141, %v2129
        %v2562 = vpack.c.b16 %v2142, %v2130
        %v2563 = vpack.c.b16 %v2143, %v2131
        %v2564 = vpack.c.b16 %v2144, %v2132
        %v2565 = vpack.c.b16 %v2145, %v2133
        %v2566 = vpack.c.b16 %v2146, %v2134
        %v2567 = vpack.c.b16 %v2147, %v2135
        %v2568 = vpack.c.b16 %v2148, %v2136
        %v2569 = vpack.c.b16 %v2161, %v2149
        %v2570 = vpack.c.b16 %v2162, %v2150
        %v2571 = vpack.c.b16 %v2163, %v2151
        %v2572 = vpack.c.b16 %v2164, %v2152
        %v2573 = vpack.c.b16 %v2165, %v2153
        %v2574 = vpack.c.b16 %v2166, %v2154
        %v2575 = vpack.c.b16 %v2167, %v2155
        %v2576 = vpack.c.b16 %v2168, %v2156
        %v2577 = vpack.c.b16 %v2169, %v2157
        %v2578 = vpack.c.b16 %v2170, %v2158
        %v2579 = vpack.c.b16 %v2171, %v2159
        %v2580 = vpack.c.b16 %v2172, %v2160
        %v2581 = vpack.c.b16 %v2185, %v2173
        %v2582 = vpack.c.b16 %v2186, %v2174
        %v2583 = vpack.c.b16 %v2187, %v2175
        %v2584 = vpack.c.b16 %v2188, %v2176
        %v2585 = vpack.c.b16 %v2189, %v2177
        %v2586 = vpack.c.b16 %v2190, %v2178
        %v2587 = vpack.c.b16 %v2191, %v2179
        %v2588 = vpack.c.b16 %v2192, %v2180
        %v2589 = vpack.c.b16 %v2193, %v2181
        %v2590 = vpack.c.b16 %v2194, %v2182
        %v2591 = vpack.c.b16 %v2195, %v2183
        %v2592 = vpack.c.b16 %v2196, %v2184
        %v2593 = vpack.c.b16 %v2209, %v2197
        %v2594 = vpack.c.b16 %v2210, %v2198
        %v2595 = vpack.c.b16 %v2211, %v2199
        %v2596 = vpack.c.b16 %v2212, %v2200
        %v2597 = vpack.c.b16 %v2213, %v2201
        %v2598 = vpack.c.b16 %v2214, %v2202
        %v2599 = vpack.c.b16 %v2215, %v2203
        %v2600 = vpack.c.b16 %v2216, %v2204
        %v2601 = vpack.c.b16 %v2217, %v2205
        %v2602 = vpack.c.b16 %v2218, %v2206
        %v2603 = vpack.c.b16 %v2219, %v2207
        %v2604 = vpack.c.b16 %v2220, %v2208
        %2989 = vmatprep.subr.bf16.mxu0 %v2222
        %2990 = vmatpush1.bf16.msra.mxu0 %v2221
        %2991 = vmatprep.subr.bf16.mxu0 %v2234
        %2992 = vmatpush1.bf16.msra.mxu0 %v2233
        %2993 = vmatprep.subr.bf16.mxu0 %v2246
        %2994 = vmatpush1.bf16.msra.mxu0 %v2245
        %2995 = vmatprep.subr.bf16.mxu0 %v2258
        %2996 = vmatpush1.bf16.msra.mxu0 %v2257
        %2997 = vmatprep.subr.bf16.mxu0 %v2270
        %2998 = vmatpush1.bf16.msra.mxu0 %v2269
        %2999 = vmatprep.subr.bf16.mxu0 %v2282
        %3000 = vmatpush1.bf16.msra.mxu0 %v2281
        %3001 = vmatprep.subr.bf16.mxu0 %v2294
        %3002 = vmatpush1.bf16.msra.mxu0 %v2293
        %3003 = vmatprep.subr.bf16.mxu0 %v2306
        %3004 = vmatpush1.bf16.msra.mxu0 %v2305
        %3005 = vmatprep.subr.bf16.mxu0 %v2318
        %3006 = vmatpush1.bf16.msra.mxu0 %v2317
        %3007 = vmatprep.subr.bf16.mxu0 %v2330
        %3008 = vmatpush1.bf16.msra.mxu0 %v2329
        %3009 = vmatprep.subr.bf16.mxu0 %v2342
        %3010 = vmatpush1.bf16.msra.mxu0 %v2341
        %3011 = vmatprep.subr.bf16.mxu0 %v2354
        %3012 = vmatpush1.bf16.msra.mxu0 %v2353
        %3013 = vmatprep.subr.bf16.mxu0 %v2366
        %3014 = vmatpush1.bf16.msra.mxu0 %v2365
        %3015 = vmatprep.subr.bf16.mxu0 %v2378
        %3016 = vmatpush1.bf16.msra.mxu0 %v2377
        %3017 = vmatprep.subr.bf16.mxu0 %v2390
        %3018 = vmatpush1.bf16.msra.mxu0 %v2389
        %3019 = vmatprep.subr.bf16.mxu0 %v2402
        %3020 = vmatpush1.bf16.msra.mxu0 %v2401
        %3021 = vmatprep.mubr.bf16.mxu0 %v942
        %3022 = vmatmul.mubr.bf16.gmra.mrb[0].mxu0 %v941
        %v3023 = vpop.f32.mrb[0].mxu0
        %v3024 = vadd.f32 %v692, %v3023
        %v3025 = vpop.f32.mrb[0].mxu0
        %v3026 = vadd.f32 %v696, %v3025
        %v3027 = vpop.f32.mrb[0].mxu0
        %v3028 = vadd.f32 %v692, %v3027
        %v3029 = vpop.f32.mrb[0].mxu0
        %v3030 = vadd.f32 %v696, %v3029
        %3031 = vmatprep.mubr.bf16.mxu0 %v946
        %3032 = vmatmul.mubr.bf16.gmra.mrb[0].mxu0 %v945
        %v3033 = vpop.f32.mrb[0].mxu0
        %v3034 = vadd.f32 %v692, %v3033
        %v3035 = vpop.f32.mrb[0].mxu0
        %v3036 = vadd.f32 %v696, %v3035
        %v3037 = vpop.f32.mrb[0].mxu0
        %v3038 = vadd.f32 %v692, %v3037
        %v3039 = vpop.f32.mrb[0].mxu0
        %v3040 = vadd.f32 %v696, %v3039
        %3041 = vmatprep.mubr.bf16.mxu0 %v950
        %3042 = vmatmul.mubr.bf16.gmra.mrb[0].mxu0 %v949
        %v3043 = vpop.f32.mrb[0].mxu0
        %v3044 = vadd.f32 %v692, %v3043
        %v3045 = vpop.f32.mrb[0].mxu0
        %v3046 = vadd.f32 %v696, %v3045
        %v3047 = vpop.f32.mrb[0].mxu0
        %v3048 = vadd.f32 %v692, %v3047
        %v3049 = vpop.f32.mrb[0].mxu0
        %v3050 = vadd.f32 %v696, %v3049
        %3051 = vmatprep.mubr.bf16.mxu0 %v954
        %3052 = vmatmul.mubr.bf16.gmra.mrb[0].mxu0 %v953
        %v3053 = vpop.f32.mrb[0].mxu0
        %v3054 = vadd.f32 %v692, %v3053
        %v3055 = vpop.f32.mrb[0].mxu0
        %v3056 = vadd.f32 %v696, %v3055
        %v3057 = vpop.f32.mrb[0].mxu0
        %v3058 = vadd.f32 %v692, %v3057
        %v3059 = vpop.f32.mrb[0].mxu0
        %v3060 = vadd.f32 %v696, %v3059
        %3061 = vmatprep.mubr.bf16.mxu0 %v958
        %3062 = vmatmul.mubr.bf16.gmra.mrb[0].mxu0 %v957
        %v3063 = vpop.f32.mrb[0].mxu0
        %v3064 = vadd.f32 %v692, %v3063
        %v3065 = vpop.f32.mrb[0].mxu0
        %v3066 = vadd.f32 %v696, %v3065
        %v3067 = vpop.f32.mrb[0].mxu0
        %v3068 = vadd.f32 %v692, %v3067
        %v3069 = vpop.f32.mrb[0].mxu0
        %v3070 = vadd.f32 %v696, %v3069
        %3071 = vmatprep.mubr.bf16.mxu0 %v962
        %3072 = vmatmul.mubr.bf16.gmra.mrb[0].mxu0 %v961
        %v3073 = vpop.f32.mrb[0].mxu0
        %v3074 = vadd.f32 %v692, %v3073
        %v3075 = vpop.f32.mrb[0].mxu0
        %v3076 = vadd.f32 %v696, %v3075
        %v3077 = vpop.f32.mrb[0].mxu0
        %v3078 = vadd.f32 %v692, %v3077
        %v3079 = vpop.f32.mrb[0].mxu0
        %v3080 = vadd.f32 %v696, %v3079
        %3081 = vmatprep.mubr.bf16.mxu0 %v966
        %3082 = vmatmul.mubr.bf16.gmra.mrb[0].mxu0 %v965
        %v3083 = vpop.f32.mrb[0].mxu0
        %v3084 = vadd.f32 %v692, %v3083
        %v3085 = vpop.f32.mrb[0].mxu0
        %v3086 = vadd.f32 %v696, %v3085
        %v3087 = vpop.f32.mrb[0].mxu0
        %v3088 = vadd.f32 %v692, %v3087
        %v3089 = vpop.f32.mrb[0].mxu0
        %v3090 = vadd.f32 %v696, %v3089
        %3091 = vmatprep.mubr.bf16.mxu0 %v970
        %3092 = vmatmul.mubr.bf16.gmra.mrb[0].mxu0 %v969
        %v3093 = vpop.f32.mrb[0].mxu0
        %v3094 = vadd.f32 %v692, %v3093
        %v3095 = vpop.f32.mrb[0].mxu0
        %v3096 = vadd.f32 %v696, %v3095
        %v3097 = vpop.f32.mrb[0].mxu0
        %v3098 = vadd.f32 %v692, %v3097
        %v3099 = vpop.f32.mrb[0].mxu0
        %v3100 = vadd.f32 %v696, %v3099
        %3101 = vmatprep.mubr.bf16.mxu0 %v974
        %3102 = vmatmul.mubr.bf16.gmra.mrb[0].mxu0 %v973
        %v3103 = vpop.f32.mrb[0].mxu0
        %v3104 = vadd.f32 %v692, %v3103
        %v3105 = vpop.f32.mrb[0].mxu0
        %v3106 = vadd.f32 %v696, %v3105
        %v3107 = vpop.f32.mrb[0].mxu0
        %v3108 = vadd.f32 %v692, %v3107
        %v3109 = vpop.f32.mrb[0].mxu0
        %v3110 = vadd.f32 %v696, %v3109
        %3111 = vmatprep.mubr.bf16.mxu0 %v978
        %3112 = vmatmul.mubr.bf16.gmra.mrb[0].mxu0 %v977
        %v3113 = vpop.f32.mrb[0].mxu0
        %v3114 = vadd.f32 %v692, %v3113
        %v3115 = vpop.f32.mrb[0].mxu0
        %v3116 = vadd.f32 %v696, %v3115
        %v3117 = vpop.f32.mrb[0].mxu0
        %v3118 = vadd.f32 %v692, %v3117
        %v3119 = vpop.f32.mrb[0].mxu0
        %v3120 = vadd.f32 %v696, %v3119
        %3121 = vmatprep.mubr.bf16.mxu0 %v982
        %3122 = vmatmul.mubr.bf16.gmra.mrb[0].mxu0 %v981
        %v3123 = vpop.f32.mrb[0].mxu0
        %v3124 = vadd.f32 %v692, %v3123
        %v3125 = vpop.f32.mrb[0].mxu0
        %v3126 = vadd.f32 %v696, %v3125
        %v3127 = vpop.f32.mrb[0].mxu0
        %v3128 = vadd.f32 %v692, %v3127
        %v3129 = vpop.f32.mrb[0].mxu0
        %v3130 = vadd.f32 %v696, %v3129
        %3131 = vmatprep.mubr.bf16.mxu0 %v986
        %3132 = vmatmul.mubr.bf16.gmra.mrb[0].mxu0 %v985
        %v3133 = vpop.f32.mrb[0].mxu0
        %v3134 = vadd.f32 %v692, %v3133
        %v3135 = vpop.f32.mrb[0].mxu0
        %v3136 = vadd.f32 %v696, %v3135
        %v3137 = vpop.f32.mrb[0].mxu0
        %v3138 = vadd.f32 %v692, %v3137
        %v3139 = vpop.f32.mrb[0].mxu0
        %v3140 = vadd.f32 %v696, %v3139
        %3141 = vmatprep.mubr.bf16.mxu0 %v990
        %3142 = vmatmul.mubr.bf16.gmra.mrb[0].mxu0 %v989
        %v3143 = vpop.f32.mrb[0].mxu0
        %v3144 = vadd.f32 %v692, %v3143
        %v3145 = vpop.f32.mrb[0].mxu0
        %v3146 = vadd.f32 %v696, %v3145
        %v3147 = vpop.f32.mrb[0].mxu0
        %v3148 = vadd.f32 %v692, %v3147
        %v3149 = vpop.f32.mrb[0].mxu0
        %v3150 = vadd.f32 %v696, %v3149
        %3151 = vmatprep.mubr.bf16.mxu0 %v994
        %3152 = vmatmul.mubr.bf16.gmra.mrb[0].mxu0 %v993
        %v3153 = vpop.f32.mrb[0].mxu0
        %v3154 = vadd.f32 %v692, %v3153
        %v3155 = vpop.f32.mrb[0].mxu0
        %v3156 = vadd.f32 %v696, %v3155
        %v3157 = vpop.f32.mrb[0].mxu0
        %v3158 = vadd.f32 %v692, %v3157
        %v3159 = vpop.f32.mrb[0].mxu0
        %v3160 = vadd.f32 %v696, %v3159
        %3161 = vmatprep.mubr.bf16.mxu0 %v998
        %3162 = vmatmul.mubr.bf16.gmra.mrb[0].mxu0 %v997
        %v3163 = vpop.f32.mrb[0].mxu0
        %v3164 = vadd.f32 %v692, %v3163
        %v3165 = vpop.f32.mrb[0].mxu0
        %v3166 = vadd.f32 %v696, %v3165
        %v3167 = vpop.f32.mrb[0].mxu0
        %v3168 = vadd.f32 %v692, %v3167
        %v3169 = vpop.f32.mrb[0].mxu0
        %v3170 = vadd.f32 %v696, %v3169
        %3171 = vmatprep.mubr.bf16.mxu0 %v1002
        %3172 = vmatmul.mubr.bf16.gmra.mrb[0].mxu0 %v1001
        %v3173 = vpop.f32.mrb[0].mxu0
        %v3174 = vadd.f32 %v692, %v3173
        %v3175 = vpop.f32.mrb[0].mxu0
        %v3176 = vadd.f32 %v696, %v3175
        %v3177 = vpop.f32.mrb[0].mxu0
        %v3178 = vadd.f32 %v692, %v3177
        %v3179 = vpop.f32.mrb[0].mxu0
        %v3180 = vadd.f32 %v696, %v3179
        %3181 = vdwg.mxu0
        %3182 = vmatprep.subr.bf16.mxu0 %v2414
        %3183 = vmatpush1.bf16.msra.mxu0 %v2413
        %3184 = vmatprep.subr.bf16.mxu0 %v2426
        %3185 = vmatpush1.bf16.msra.mxu0 %v2425
        %3186 = vmatprep.subr.bf16.mxu0 %v2438
        %3187 = vmatpush1.bf16.msra.mxu0 %v2437
        %3188 = vmatprep.subr.bf16.mxu0 %v2450
        %3189 = vmatpush1.bf16.msra.mxu0 %v2449
        %3190 = vmatprep.subr.bf16.mxu0 %v2462
        %3191 = vmatpush1.bf16.msra.mxu0 %v2461
        %3192 = vmatprep.subr.bf16.mxu0 %v2474
        %3193 = vmatpush1.bf16.msra.mxu0 %v2473
        %3194 = vmatprep.subr.bf16.mxu0 %v2486
        %3195 = vmatpush1.bf16.msra.mxu0 %v2485
        %3196 = vmatprep.subr.bf16.mxu0 %v2498
        %3197 = vmatpush1.bf16.msra.mxu0 %v2497
        %3198 = vmatprep.subr.bf16.mxu0 %v2510
        %3199 = vmatpush1.bf16.msra.mxu0 %v2509
        %3200 = vmatprep.subr.bf16.mxu0 %v2522
        %3201 = vmatpush1.bf16.msra.mxu0 %v2521
        %3202 = vmatprep.subr.bf16.mxu0 %v2534
        %3203 = vmatpush1.bf16.msra.mxu0 %v2533
        %3204 = vmatprep.subr.bf16.mxu0 %v2546
        %3205 = vmatpush1.bf16.msra.mxu0 %v2545
        %3206 = vmatprep.subr.bf16.mxu0 %v2558
        %3207 = vmatpush1.bf16.msra.mxu0 %v2557
        %3208 = vmatprep.subr.bf16.mxu0 %v2570
        %3209 = vmatpush1.bf16.msra.mxu0 %v2569
        %3210 = vmatprep.subr.bf16.mxu0 %v2582
        %3211 = vmatpush1.bf16.msra.mxu0 %v2581
        %3212 = vmatprep.subr.bf16.mxu0 %v2594
        %3213 = vmatpush1.bf16.msra.mxu0 %v2593
        %3214 = vmatprep.mubr.bf16.mxu0 %v944
        %3215 = vmatmul.mubr.bf16.gmra.mrb[0].mxu0 %v943
        %v3216 = vpop.f32.mrb[0].mxu0
        %v3217 = vadd.f32 %v3024, %v3216
        %v3218 = vpop.f32.mrb[0].mxu0
        %v3219 = vadd.f32 %v3026, %v3218
        %v3220 = vpop.f32.mrb[0].mxu0
        %v3221 = vadd.f32 %v3028, %v3220
        %v3222 = vpop.f32.mrb[0].mxu0
        %v3223 = vadd.f32 %v3030, %v3222
        %3224 = vmatprep.mubr.bf16.mxu0 %v948
        %3225 = vmatmul.mubr.bf16.gmra.mrb[0].mxu0 %v947
        %v3226 = vpop.f32.mrb[0].mxu0
        %v3227 = vadd.f32 %v3034, %v3226
        %v3228 = vpop.f32.mrb[0].mxu0
        %v3229 = vadd.f32 %v3036, %v3228
        %v3230 = vpop.f32.mrb[0].mxu0
        %v3231 = vadd.f32 %v3038, %v3230
        %v3232 = vpop.f32.mrb[0].mxu0
        %v3233 = vadd.f32 %v3040, %v3232
        %3234 = vmatprep.mubr.bf16.mxu0 %v952
        %3235 = vmatmul.mubr.bf16.gmra.mrb[0].mxu0 %v951
        %v3236 = vpop.f32.mrb[0].mxu0
        %v3237 = vadd.f32 %v3044, %v3236
        %v3238 = vpop.f32.mrb[0].mxu0
        %v3239 = vadd.f32 %v3046, %v3238
        %v3240 = vpop.f32.mrb[0].mxu0
        %v3241 = vadd.f32 %v3048, %v3240
        %v3242 = vpop.f32.mrb[0].mxu0
        %v3243 = vadd.f32 %v3050, %v3242
        %3244 = vmatprep.mubr.bf16.mxu0 %v956
        %3245 = vmatmul.mubr.bf16.gmra.mrb[0].mxu0 %v955
        %v3246 = vpop.f32.mrb[0].mxu0
        %v3247 = vadd.f32 %v3054, %v3246
        %v3248 = vpop.f32.mrb[0].mxu0
        %v3249 = vadd.f32 %v3056, %v3248
        %v3250 = vpop.f32.mrb[0].mxu0
        %v3251 = vadd.f32 %v3058, %v3250
        %v3252 = vpop.f32.mrb[0].mxu0
        %v3253 = vadd.f32 %v3060, %v3252
        %3254 = vmatprep.mubr.bf16.mxu0 %v960
        %3255 = vmatmul.mubr.bf16.gmra.mrb[0].mxu0 %v959
        %v3256 = vpop.f32.mrb[0].mxu0
        %v3257 = vadd.f32 %v3064, %v3256
        %v3258 = vpop.f32.mrb[0].mxu0
        %v3259 = vadd.f32 %v3066, %v3258
        %v3260 = vpop.f32.mrb[0].mxu0
        %v3261 = vadd.f32 %v3068, %v3260
        %v3262 = vpop.f32.mrb[0].mxu0
        %v3263 = vadd.f32 %v3070, %v3262
        %3264 = vmatprep.mubr.bf16.mxu0 %v964
        %3265 = vmatmul.mubr.bf16.gmra.mrb[0].mxu0 %v963
        %v3266 = vpop.f32.mrb[0].mxu0
        %v3267 = vadd.f32 %v3074, %v3266
        %v3268 = vpop.f32.mrb[0].mxu0
        %v3269 = vadd.f32 %v3076, %v3268
        %v3270 = vpop.f32.mrb[0].mxu0
        %v3271 = vadd.f32 %v3078, %v3270
        %v3272 = vpop.f32.mrb[0].mxu0
        %v3273 = vadd.f32 %v3080, %v3272
        %3274 = vmatprep.mubr.bf16.mxu0 %v968
        %3275 = vmatmul.mubr.bf16.gmra.mrb[0].mxu0 %v967
        %v3276 = vpop.f32.mrb[0].mxu0
        %v3277 = vadd.f32 %v3084, %v3276
        %v3278 = vpop.f32.mrb[0].mxu0
        %v3279 = vadd.f32 %v3086, %v3278
        %v3280 = vpop.f32.mrb[0].mxu0
        %v3281 = vadd.f32 %v3088, %v3280
        %v3282 = vpop.f32.mrb[0].mxu0
        %v3283 = vadd.f32 %v3090, %v3282
        %3284 = vmatprep.mubr.bf16.mxu0 %v972
        %3285 = vmatmul.mubr.bf16.gmra.mrb[0].mxu0 %v971
        %v3286 = vpop.f32.mrb[0].mxu0
        %v3287 = vadd.f32 %v3094, %v3286
        %v3288 = vpop.f32.mrb[0].mxu0
        %v3289 = vadd.f32 %v3096, %v3288
        %v3290 = vpop.f32.mrb[0].mxu0
        %v3291 = vadd.f32 %v3098, %v3290
        %v3292 = vpop.f32.mrb[0].mxu0
        %v3293 = vadd.f32 %v3100, %v3292
        %3294 = vmatprep.mubr.bf16.mxu0 %v976
        %3295 = vmatmul.mubr.bf16.gmra.mrb[0].mxu0 %v975
        %v3296 = vpop.f32.mrb[0].mxu0
        %v3297 = vadd.f32 %v3104, %v3296
        %v3298 = vpop.f32.mrb[0].mxu0
        %v3299 = vadd.f32 %v3106, %v3298
        %v3300 = vpop.f32.mrb[0].mxu0
        %v3301 = vadd.f32 %v3108, %v3300
        %v3302 = vpop.f32.mrb[0].mxu0
        %v3303 = vadd.f32 %v3110, %v3302
        %3304 = vmatprep.mubr.bf16.mxu0 %v980
        %3305 = vmatmul.mubr.bf16.gmra.mrb[0].mxu0 %v979
        %v3306 = vpop.f32.mrb[0].mxu0
        %v3307 = vadd.f32 %v3114, %v3306
        %v3308 = vpop.f32.mrb[0].mxu0
        %v3309 = vadd.f32 %v3116, %v3308
        %v3310 = vpop.f32.mrb[0].mxu0
        %v3311 = vadd.f32 %v3118, %v3310
        %v3312 = vpop.f32.mrb[0].mxu0
        %v3313 = vadd.f32 %v3120, %v3312
        %3314 = vmatprep.mubr.bf16.mxu0 %v984
        %3315 = vmatmul.mubr.bf16.gmra.mrb[0].mxu0 %v983
        %v3316 = vpop.f32.mrb[0].mxu0
        %v3317 = vadd.f32 %v3124, %v3316
        %v3318 = vpop.f32.mrb[0].mxu0
        %v3319 = vadd.f32 %v3126, %v3318
        %v3320 = vpop.f32.mrb[0].mxu0
        %v3321 = vadd.f32 %v3128, %v3320
        %v3322 = vpop.f32.mrb[0].mxu0
        %v3323 = vadd.f32 %v3130, %v3322
        %3324 = vmatprep.mubr.bf16.mxu0 %v988
        %3325 = vmatmul.mubr.bf16.gmra.mrb[0].mxu0 %v987
        %v3326 = vpop.f32.mrb[0].mxu0
        %v3327 = vadd.f32 %v3134, %v3326
        %v3328 = vpop.f32.mrb[0].mxu0
        %v3329 = vadd.f32 %v3136, %v3328
        %v3330 = vpop.f32.mrb[0].mxu0
        %v3331 = vadd.f32 %v3138, %v3330
        %v3332 = vpop.f32.mrb[0].mxu0
        %v3333 = vadd.f32 %v3140, %v3332
        %3334 = vmatprep.mubr.bf16.mxu0 %v992
        %3335 = vmatmul.mubr.bf16.gmra.mrb[0].mxu0 %v991
        %v3336 = vpop.f32.mrb[0].mxu0
        %v3337 = vadd.f32 %v3144, %v3336
        %v3338 = vpop.f32.mrb[0].mxu0
        %v3339 = vadd.f32 %v3146, %v3338
        %v3340 = vpop.f32.mrb[0].mxu0
        %v3341 = vadd.f32 %v3148, %v3340
        %v3342 = vpop.f32.mrb[0].mxu0
        %v3343 = vadd.f32 %v3150, %v3342
        %3344 = vmatprep.mubr.bf16.mxu0 %v996
        %3345 = vmatmul.mubr.bf16.gmra.mrb[0].mxu0 %v995
        %v3346 = vpop.f32.mrb[0].mxu0
        %v3347 = vadd.f32 %v3154, %v3346
        %v3348 = vpop.f32.mrb[0].mxu0
        %v3349 = vadd.f32 %v3156, %v3348
        %v3350 = vpop.f32.mrb[0].mxu0
        %v3351 = vadd.f32 %v3158, %v3350
        %v3352 = vpop.f32.mrb[0].mxu0
        %v3353 = vadd.f32 %v3160, %v3352
        %3354 = vmatprep.mubr.bf16.mxu0 %v1000
        %3355 = vmatmul.mubr.bf16.gmra.mrb[0].mxu0 %v999
        %v3356 = vpop.f32.mrb[0].mxu0
        %v3357 = vadd.f32 %v3164, %v3356
        %v3358 = vpop.f32.mrb[0].mxu0
        %v3359 = vadd.f32 %v3166, %v3358
        %v3360 = vpop.f32.mrb[0].mxu0
        %v3361 = vadd.f32 %v3168, %v3360
        %v3362 = vpop.f32.mrb[0].mxu0
        %v3363 = vadd.f32 %v3170, %v3362
        %3364 = vmatprep.mubr.bf16.mxu0 %v1004
        %3365 = vmatmul.mubr.bf16.gmra.mrb[0].mxu0 %v1003
        %v3366 = vpop.f32.mrb[0].mxu0
        %v3367 = vadd.f32 %v3174, %v3366
        %v3368 = vpop.f32.mrb[0].mxu0
        %v3369 = vadd.f32 %v3176, %v3368
        %v3370 = vpop.f32.mrb[0].mxu0
        %v3371 = vadd.f32 %v3178, %v3370
        %v3372 = vpop.f32.mrb[0].mxu0
        %v3373 = vadd.f32 %v3180, %v3372
        %3374 = vdwg.mxu0
        %3375 = vmatprep.subr.bf16.mxu0 %v2224
        %3376 = vmatpush1.bf16.msra.mxu0 %v2223
        %3377 = vmatprep.subr.bf16.mxu0 %v2236
        %3378 = vmatpush1.bf16.msra.mxu0 %v2235
        %3379 = vmatprep.subr.bf16.mxu0 %v2248
        %3380 = vmatpush1.bf16.msra.mxu0 %v2247
        %3381 = vmatprep.subr.bf16.mxu0 %v2260
        %3382 = vmatpush1.bf16.msra.mxu0 %v2259
        %3383 = vmatprep.subr.bf16.mxu0 %v2272
        %3384 = vmatpush1.bf16.msra.mxu0 %v2271
        %3385 = vmatprep.subr.bf16.mxu0 %v2284
        %3386 = vmatpush1.bf16.msra.mxu0 %v2283
        %3387 = vmatprep.subr.bf16.mxu0 %v2296
        %3388 = vmatpush1.bf16.msra.mxu0 %v2295
        %3389 = vmatprep.subr.bf16.mxu0 %v2308
        %3390 = vmatpush1.bf16.msra.mxu0 %v2307
        %3391 = vmatprep.subr.bf16.mxu0 %v2320
        %3392 = vmatpush1.bf16.msra.mxu0 %v2319
        %3393 = vmatprep.subr.bf16.mxu0 %v2332
        %3394 = vmatpush1.bf16.msra.mxu0 %v2331
        %3395 = vmatprep.subr.bf16.mxu0 %v2344
        %3396 = vmatpush1.bf16.msra.mxu0 %v2343
        %3397 = vmatprep.subr.bf16.mxu0 %v2356
        %3398 = vmatpush1.bf16.msra.mxu0 %v2355
        %3399 = vmatprep.subr.bf16.mxu0 %v2368
        %3400 = vmatpush1.bf16.msra.mxu0 %v2367
        %3401 = vmatprep.subr.bf16.mxu0 %v2380
        %3402 = vmatpush1.bf16.msra.mxu0 %v2379
        %3403 = vmatprep.subr.bf16.mxu0 %v2392
        %3404 = vmatpush1.bf16.msra.mxu0 %v2391
        %3405 = vmatprep.subr.bf16.mxu0 %v2404
        %3406 = vmatpush1.bf16.msra.mxu0 %v2403
        %3407 = vmatprep.mubr.bf16.mxu0 %v942
        %3408 = vmatmul.mubr.bf16.gmra.mrb[0].mxu0 %v941
        %v3409 = vpop.f32.mrb[0].mxu0
        %v3410 = vadd.f32 %v700, %v3409
        %v3411 = vpop.f32.mrb[0].mxu0
        %v3412 = vadd.f32 %v704, %v3411
        %v3413 = vpop.f32.mrb[0].mxu0
        %v3414 = vadd.f32 %v700, %v3413
        %v3415 = vpop.f32.mrb[0].mxu0
        %v3416 = vadd.f32 %v704, %v3415
        %3417 = vmatprep.mubr.bf16.mxu0 %v946
        %3418 = vmatmul.mubr.bf16.gmra.mrb[0].mxu0 %v945
        %v3419 = vpop.f32.mrb[0].mxu0
        %v3420 = vadd.f32 %v700, %v3419
        %v3421 = vpop.f32.mrb[0].mxu0
        %v3422 = vadd.f32 %v704, %v3421
        %v3423 = vpop.f32.mrb[0].mxu0
        %v3424 = vadd.f32 %v700, %v3423
        %v3425 = vpop.f32.mrb[0].mxu0
        %v3426 = vadd.f32 %v704, %v3425
        %3427 = vmatprep.mubr.bf16.mxu0 %v950
        %3428 = vmatmul.mubr.bf16.gmra.mrb[0].mxu0 %v949
        %v3429 = vpop.f32.mrb[0].mxu0
        %v3430 = vadd.f32 %v700, %v3429
        %v3431 = vpop.f32.mrb[0].mxu0
        %v3432 = vadd.f32 %v704, %v3431
        %v3433 = vpop.f32.mrb[0].mxu0
        %v3434 = vadd.f32 %v700, %v3433
        %v3435 = vpop.f32.mrb[0].mxu0
        %v3436 = vadd.f32 %v704, %v3435
        %3437 = vmatprep.mubr.bf16.mxu0 %v954
        %3438 = vmatmul.mubr.bf16.gmra.mrb[0].mxu0 %v953
        %v3439 = vpop.f32.mrb[0].mxu0
        %v3440 = vadd.f32 %v700, %v3439
        %v3441 = vpop.f32.mrb[0].mxu0
        %v3442 = vadd.f32 %v704, %v3441
        %v3443 = vpop.f32.mrb[0].mxu0
        %v3444 = vadd.f32 %v700, %v3443
        %v3445 = vpop.f32.mrb[0].mxu0
        %v3446 = vadd.f32 %v704, %v3445
        %3447 = vmatprep.mubr.bf16.mxu0 %v958
        %3448 = vmatmul.mubr.bf16.gmra.mrb[0].mxu0 %v957
        %v3449 = vpop.f32.mrb[0].mxu0
        %v3450 = vadd.f32 %v700, %v3449
        %v3451 = vpop.f32.mrb[0].mxu0
        %v3452 = vadd.f32 %v704, %v3451
        %v3453 = vpop.f32.mrb[0].mxu0
        %v3454 = vadd.f32 %v700, %v3453
        %v3455 = vpop.f32.mrb[0].mxu0
        %v3456 = vadd.f32 %v704, %v3455
        %3457 = vmatprep.mubr.bf16.mxu0 %v962
        %3458 = vmatmul.mubr.bf16.gmra.mrb[0].mxu0 %v961
        %v3459 = vpop.f32.mrb[0].mxu0
        %v3460 = vadd.f32 %v700, %v3459
        %v3461 = vpop.f32.mrb[0].mxu0
        %v3462 = vadd.f32 %v704, %v3461
        %v3463 = vpop.f32.mrb[0].mxu0
        %v3464 = vadd.f32 %v700, %v3463
        %v3465 = vpop.f32.mrb[0].mxu0
        %v3466 = vadd.f32 %v704, %v3465
        %3467 = vmatprep.mubr.bf16.mxu0 %v966
        %3468 = vmatmul.mubr.bf16.gmra.mrb[0].mxu0 %v965
        %v3469 = vpop.f32.mrb[0].mxu0
        %v3470 = vadd.f32 %v700, %v3469
        %v3471 = vpop.f32.mrb[0].mxu0
        %v3472 = vadd.f32 %v704, %v3471
        %v3473 = vpop.f32.mrb[0].mxu0
        %v3474 = vadd.f32 %v700, %v3473
        %v3475 = vpop.f32.mrb[0].mxu0
        %v3476 = vadd.f32 %v704, %v3475
        %3477 = vmatprep.mubr.bf16.mxu0 %v970
        %3478 = vmatmul.mubr.bf16.gmra.mrb[0].mxu0 %v969
        %v3479 = vpop.f32.mrb[0].mxu0
        %v3480 = vadd.f32 %v700, %v3479
        %v3481 = vpop.f32.mrb[0].mxu0
        %v3482 = vadd.f32 %v704, %v3481
        %v3483 = vpop.f32.mrb[0].mxu0
        %v3484 = vadd.f32 %v700, %v3483
        %v3485 = vpop.f32.mrb[0].mxu0
        %v3486 = vadd.f32 %v704, %v3485
        %3487 = vmatprep.mubr.bf16.mxu0 %v974
        %3488 = vmatmul.mubr.bf16.gmra.mrb[0].mxu0 %v973
        %v3489 = vpop.f32.mrb[0].mxu0
        %v3490 = vadd.f32 %v700, %v3489
        %v3491 = vpop.f32.mrb[0].mxu0
        %v3492 = vadd.f32 %v704, %v3491
        %v3493 = vpop.f32.mrb[0].mxu0
        %v3494 = vadd.f32 %v700, %v3493
        %v3495 = vpop.f32.mrb[0].mxu0
        %v3496 = vadd.f32 %v704, %v3495
        %3497 = vmatprep.mubr.bf16.mxu0 %v978
        %3498 = vmatmul.mubr.bf16.gmra.mrb[0].mxu0 %v977
        %v3499 = vpop.f32.mrb[0].mxu0
        %v3500 = vadd.f32 %v700, %v3499
        %v3501 = vpop.f32.mrb[0].mxu0
        %v3502 = vadd.f32 %v704, %v3501
        %v3503 = vpop.f32.mrb[0].mxu0
        %v3504 = vadd.f32 %v700, %v3503
        %v3505 = vpop.f32.mrb[0].mxu0
        %v3506 = vadd.f32 %v704, %v3505
        %3507 = vmatprep.mubr.bf16.mxu0 %v982
        %3508 = vmatmul.mubr.bf16.gmra.mrb[0].mxu0 %v981
        %v3509 = vpop.f32.mrb[0].mxu0
        %v3510 = vadd.f32 %v700, %v3509
        %v3511 = vpop.f32.mrb[0].mxu0
        %v3512 = vadd.f32 %v704, %v3511
        %v3513 = vpop.f32.mrb[0].mxu0
        %v3514 = vadd.f32 %v700, %v3513
        %v3515 = vpop.f32.mrb[0].mxu0
        %v3516 = vadd.f32 %v704, %v3515
        %3517 = vmatprep.mubr.bf16.mxu0 %v986
        %3518 = vmatmul.mubr.bf16.gmra.mrb[0].mxu0 %v985
        %v3519 = vpop.f32.mrb[0].mxu0
        %v3520 = vadd.f32 %v700, %v3519
        %v3521 = vpop.f32.mrb[0].mxu0
        %v3522 = vadd.f32 %v704, %v3521
        %v3523 = vpop.f32.mrb[0].mxu0
        %v3524 = vadd.f32 %v700, %v3523
        %v3525 = vpop.f32.mrb[0].mxu0
        %v3526 = vadd.f32 %v704, %v3525
        %3527 = vmatprep.mubr.bf16.mxu0 %v990
        %3528 = vmatmul.mubr.bf16.gmra.mrb[0].mxu0 %v989
        %v3529 = vpop.f32.mrb[0].mxu0
        %v3530 = vadd.f32 %v700, %v3529
        %v3531 = vpop.f32.mrb[0].mxu0
        %v3532 = vadd.f32 %v704, %v3531
        %v3533 = vpop.f32.mrb[0].mxu0
        %v3534 = vadd.f32 %v700, %v3533
        %v3535 = vpop.f32.mrb[0].mxu0
        %v3536 = vadd.f32 %v704, %v3535
        %3537 = vmatprep.mubr.bf16.mxu0 %v994
        %3538 = vmatmul.mubr.bf16.gmra.mrb[0].mxu0 %v993
        %v3539 = vpop.f32.mrb[0].mxu0
        %v3540 = vadd.f32 %v700, %v3539
        %v3541 = vpop.f32.mrb[0].mxu0
        %v3542 = vadd.f32 %v704, %v3541
        %v3543 = vpop.f32.mrb[0].mxu0
        %v3544 = vadd.f32 %v700, %v3543
        %v3545 = vpop.f32.mrb[0].mxu0
        %v3546 = vadd.f32 %v704, %v3545
        %3547 = vmatprep.mubr.bf16.mxu0 %v998
        %3548 = vmatmul.mubr.bf16.gmra.mrb[0].mxu0 %v997
        %v3549 = vpop.f32.mrb[0].mxu0
        %v3550 = vadd.f32 %v700, %v3549
        %v3551 = vpop.f32.mrb[0].mxu0
        %v3552 = vadd.f32 %v704, %v3551
        %v3553 = vpop.f32.mrb[0].mxu0
        %v3554 = vadd.f32 %v700, %v3553
        %v3555 = vpop.f32.mrb[0].mxu0
        %v3556 = vadd.f32 %v704, %v3555
        %3557 = vmatprep.mubr.bf16.mxu0 %v1002
        %3558 = vmatmul.mubr.bf16.gmra.mrb[0].mxu0 %v1001
        %v3559 = vpop.f32.mrb[0].mxu0
        %v3560 = vadd.f32 %v700, %v3559
        %v3561 = vpop.f32.mrb[0].mxu0
        %v3562 = vadd.f32 %v704, %v3561
        %v3563 = vpop.f32.mrb[0].mxu0
        %v3564 = vadd.f32 %v700, %v3563
        %v3565 = vpop.f32.mrb[0].mxu0
        %v3566 = vadd.f32 %v704, %v3565
        %3567 = vdwg.mxu0
        %3568 = vmatprep.subr.bf16.mxu0 %v2416
        %3569 = vmatpush1.bf16.msra.mxu0 %v2415
        %3570 = vmatprep.subr.bf16.mxu0 %v2428
        %3571 = vmatpush1.bf16.msra.mxu0 %v2427
        %3572 = vmatprep.subr.bf16.mxu0 %v2440
        %3573 = vmatpush1.bf16.msra.mxu0 %v2439
        %3574 = vmatprep.subr.bf16.mxu0 %v2452
        %3575 = vmatpush1.bf16.msra.mxu0 %v2451
        %3576 = vmatprep.subr.bf16.mxu0 %v2464
        %3577 = vmatpush1.bf16.msra.mxu0 %v2463
        %3578 = vmatprep.subr.bf16.mxu0 %v2476
        %3579 = vmatpush1.bf16.msra.mxu0 %v2475
        %3580 = vmatprep.subr.bf16.mxu0 %v2488
        %3581 = vmatpush1.bf16.msra.mxu0 %v2487
        %3582 = vmatprep.subr.bf16.mxu0 %v2500
        %3583 = vmatpush1.bf16.msra.mxu0 %v2499
        %3584 = vmatprep.subr.bf16.mxu0 %v2512
        %3585 = vmatpush1.bf16.msra.mxu0 %v2511
        %3586 = vmatprep.subr.bf16.mxu0 %v2524
        %3587 = vmatpush1.bf16.msra.mxu0 %v2523
        %3588 = vmatprep.subr.bf16.mxu0 %v2536
        %3589 = vmatpush1.bf16.msra.mxu0 %v2535
        %3590 = vmatprep.subr.bf16.mxu0 %v2548
        %3591 = vmatpush1.bf16.msra.mxu0 %v2547
        %3592 = vmatprep.subr.bf16.mxu0 %v2560
        %3593 = vmatpush1.bf16.msra.mxu0 %v2559
        %3594 = vmatprep.subr.bf16.mxu0 %v2572
        %3595 = vmatpush1.bf16.msra.mxu0 %v2571
        %3596 = vmatprep.subr.bf16.mxu0 %v2584
        %3597 = vmatpush1.bf16.msra.mxu0 %v2583
        %3598 = vmatprep.subr.bf16.mxu0 %v2596
        %3599 = vmatpush1.bf16.msra.mxu0 %v2595
        %3600 = vmatprep.mubr.bf16.mxu0 %v944
        %3601 = vmatmul.mubr.bf16.gmra.mrb[0].mxu0 %v943
        %v3602 = vpop.f32.mrb[0].mxu0
        %v3603 = vadd.f32 %v3410, %v3602
        %v3604 = vpop.f32.mrb[0].mxu0
        %v3605 = vadd.f32 %v3412, %v3604
        %v3606 = vpop.f32.mrb[0].mxu0
        %v3607 = vadd.f32 %v3414, %v3606
        %v3608 = vpop.f32.mrb[0].mxu0
        %v3609 = vadd.f32 %v3416, %v3608
        %3610 = vmatprep.mubr.bf16.mxu0 %v948
        %3611 = vmatmul.mubr.bf16.gmra.mrb[0].mxu0 %v947
        %v3612 = vpop.f32.mrb[0].mxu0
        %v3613 = vadd.f32 %v3420, %v3612
        %v3614 = vpop.f32.mrb[0].mxu0
        %v3615 = vadd.f32 %v3422, %v3614
        %v3616 = vpop.f32.mrb[0].mxu0
        %v3617 = vadd.f32 %v3424, %v3616
        %v3618 = vpop.f32.mrb[0].mxu0
        %v3619 = vadd.f32 %v3426, %v3618
        %3620 = vmatprep.mubr.bf16.mxu0 %v952
        %3621 = vmatmul.mubr.bf16.gmra.mrb[0].mxu0 %v951
        %v3622 = vpop.f32.mrb[0].mxu0
        %v3623 = vadd.f32 %v3430, %v3622
        %v3624 = vpop.f32.mrb[0].mxu0
        %v3625 = vadd.f32 %v3432, %v3624
        %v3626 = vpop.f32.mrb[0].mxu0
        %v3627 = vadd.f32 %v3434, %v3626
        %v3628 = vpop.f32.mrb[0].mxu0
        %v3629 = vadd.f32 %v3436, %v3628
        %3630 = vmatprep.mubr.bf16.mxu0 %v956
        %3631 = vmatmul.mubr.bf16.gmra.mrb[0].mxu0 %v955
        %v3632 = vpop.f32.mrb[0].mxu0
        %v3633 = vadd.f32 %v3440, %v3632
        %v3634 = vpop.f32.mrb[0].mxu0
        %v3635 = vadd.f32 %v3442, %v3634
        %v3636 = vpop.f32.mrb[0].mxu0
        %v3637 = vadd.f32 %v3444, %v3636
        %v3638 = vpop.f32.mrb[0].mxu0
        %v3639 = vadd.f32 %v3446, %v3638
        %3640 = vmatprep.mubr.bf16.mxu0 %v960
        %3641 = vmatmul.mubr.bf16.gmra.mrb[0].mxu0 %v959
        %v3642 = vpop.f32.mrb[0].mxu0
        %v3643 = vadd.f32 %v3450, %v3642
        %v3644 = vpop.f32.mrb[0].mxu0
        %v3645 = vadd.f32 %v3452, %v3644
        %v3646 = vpop.f32.mrb[0].mxu0
        %v3647 = vadd.f32 %v3454, %v3646
        %v3648 = vpop.f32.mrb[0].mxu0
        %v3649 = vadd.f32 %v3456, %v3648
        %3650 = vmatprep.mubr.bf16.mxu0 %v964
        %3651 = vmatmul.mubr.bf16.gmra.mrb[0].mxu0 %v963
        %v3652 = vpop.f32.mrb[0].mxu0
        %v3653 = vadd.f32 %v3460, %v3652
        %v3654 = vpop.f32.mrb[0].mxu0
        %v3655 = vadd.f32 %v3462, %v3654
        %v3656 = vpop.f32.mrb[0].mxu0
        %v3657 = vadd.f32 %v3464, %v3656
        %v3658 = vpop.f32.mrb[0].mxu0
        %v3659 = vadd.f32 %v3466, %v3658
        %3660 = vmatprep.mubr.bf16.mxu0 %v968
        %3661 = vmatmul.mubr.bf16.gmra.mrb[0].mxu0 %v967
        %v3662 = vpop.f32.mrb[0].mxu0
        %v3663 = vadd.f32 %v3470, %v3662
        %v3664 = vpop.f32.mrb[0].mxu0
        %v3665 = vadd.f32 %v3472, %v3664
        %v3666 = vpop.f32.mrb[0].mxu0
        %v3667 = vadd.f32 %v3474, %v3666
        %v3668 = vpop.f32.mrb[0].mxu0
        %v3669 = vadd.f32 %v3476, %v3668
        %3670 = vmatprep.mubr.bf16.mxu0 %v972
        %3671 = vmatmul.mubr.bf16.gmra.mrb[0].mxu0 %v971
        %v3672 = vpop.f32.mrb[0].mxu0
        %v3673 = vadd.f32 %v3480, %v3672
        %v3674 = vpop.f32.mrb[0].mxu0
        %v3675 = vadd.f32 %v3482, %v3674
        %v3676 = vpop.f32.mrb[0].mxu0
        %v3677 = vadd.f32 %v3484, %v3676
        %v3678 = vpop.f32.mrb[0].mxu0
        %v3679 = vadd.f32 %v3486, %v3678
        %3680 = vmatprep.mubr.bf16.mxu0 %v976
        %3681 = vmatmul.mubr.bf16.gmra.mrb[0].mxu0 %v975
        %v3682 = vpop.f32.mrb[0].mxu0
        %v3683 = vadd.f32 %v3490, %v3682
        %v3684 = vpop.f32.mrb[0].mxu0
        %v3685 = vadd.f32 %v3492, %v3684
        %v3686 = vpop.f32.mrb[0].mxu0
        %v3687 = vadd.f32 %v3494, %v3686
        %v3688 = vpop.f32.mrb[0].mxu0
        %v3689 = vadd.f32 %v3496, %v3688
        %3690 = vmatprep.mubr.bf16.mxu0 %v980
        %3691 = vmatmul.mubr.bf16.gmra.mrb[0].mxu0 %v979
        %v3692 = vpop.f32.mrb[0].mxu0
        %v3693 = vadd.f32 %v3500, %v3692
        %v3694 = vpop.f32.mrb[0].mxu0
        %v3695 = vadd.f32 %v3502, %v3694
        %v3696 = vpop.f32.mrb[0].mxu0
        %v3697 = vadd.f32 %v3504, %v3696
        %v3698 = vpop.f32.mrb[0].mxu0
        %v3699 = vadd.f32 %v3506, %v3698
        %3700 = vmatprep.mubr.bf16.mxu0 %v984
        %3701 = vmatmul.mubr.bf16.gmra.mrb[0].mxu0 %v983
        %v3702 = vpop.f32.mrb[0].mxu0
        %v3703 = vadd.f32 %v3510, %v3702
        %v3704 = vpop.f32.mrb[0].mxu0
        %v3705 = vadd.f32 %v3512, %v3704
        %v3706 = vpop.f32.mrb[0].mxu0
        %v3707 = vadd.f32 %v3514, %v3706
        %v3708 = vpop.f32.mrb[0].mxu0
        %v3709 = vadd.f32 %v3516, %v3708
        %3710 = vmatprep.mubr.bf16.mxu0 %v988
        %3711 = vmatmul.mubr.bf16.gmra.mrb[0].mxu0 %v987
        %v3712 = vpop.f32.mrb[0].mxu0
        %v3713 = vadd.f32 %v3520, %v3712
        %v3714 = vpop.f32.mrb[0].mxu0
        %v3715 = vadd.f32 %v3522, %v3714
        %v3716 = vpop.f32.mrb[0].mxu0
        %v3717 = vadd.f32 %v3524, %v3716
        %v3718 = vpop.f32.mrb[0].mxu0
        %v3719 = vadd.f32 %v3526, %v3718
        %3720 = vmatprep.mubr.bf16.mxu0 %v992
        %3721 = vmatmul.mubr.bf16.gmra.mrb[0].mxu0 %v991
        %v3722 = vpop.f32.mrb[0].mxu0
        %v3723 = vadd.f32 %v3530, %v3722
        %v3724 = vpop.f32.mrb[0].mxu0
        %v3725 = vadd.f32 %v3532, %v3724
        %v3726 = vpop.f32.mrb[0].mxu0
        %v3727 = vadd.f32 %v3534, %v3726
        %v3728 = vpop.f32.mrb[0].mxu0
        %v3729 = vadd.f32 %v3536, %v3728
        %3730 = vmatprep.mubr.bf16.mxu0 %v996
        %3731 = vmatmul.mubr.bf16.gmra.mrb[0].mxu0 %v995
        %v3732 = vpop.f32.mrb[0].mxu0
        %v3733 = vadd.f32 %v3540, %v3732
        %v3734 = vpop.f32.mrb[0].mxu0
        %v3735 = vadd.f32 %v3542, %v3734
        %v3736 = vpop.f32.mrb[0].mxu0
        %v3737 = vadd.f32 %v3544, %v3736
        %v3738 = vpop.f32.mrb[0].mxu0
        %v3739 = vadd.f32 %v3546, %v3738
        %3740 = vmatprep.mubr.bf16.mxu0 %v1000
        %3741 = vmatmul.mubr.bf16.gmra.mrb[0].mxu0 %v999
        %v3742 = vpop.f32.mrb[0].mxu0
        %v3743 = vadd.f32 %v3550, %v3742
        %v3744 = vpop.f32.mrb[0].mxu0
        %v3745 = vadd.f32 %v3552, %v3744
        %v3746 = vpop.f32.mrb[0].mxu0
        %v3747 = vadd.f32 %v3554, %v3746
        %v3748 = vpop.f32.mrb[0].mxu0
        %v3749 = vadd.f32 %v3556, %v3748
        %3750 = vmatprep.mubr.bf16.mxu0 %v1004
        %3751 = vmatmul.mubr.bf16.gmra.mrb[0].mxu0 %v1003
        %v3752 = vpop.f32.mrb[0].mxu0
        %v3753 = vadd.f32 %v3560, %v3752
        %v3754 = vpop.f32.mrb[0].mxu0
        %v3755 = vadd.f32 %v3562, %v3754
        %v3756 = vpop.f32.mrb[0].mxu0
        %v3757 = vadd.f32 %v3564, %v3756
        %v3758 = vpop.f32.mrb[0].mxu0
        %v3759 = vadd.f32 %v3566, %v3758
        %3760 = vdwg.mxu0
        %3761 = vmatprep.subr.bf16.mxu0 %v2226
        %3762 = vmatpush1.bf16.msra.mxu0 %v2225
        %3763 = vmatprep.subr.bf16.mxu0 %v2238
        %3764 = vmatpush1.bf16.msra.mxu0 %v2237
        %3765 = vmatprep.subr.bf16.mxu0 %v2250
        %3766 = vmatpush1.bf16.msra.mxu0 %v2249
        %3767 = vmatprep.subr.bf16.mxu0 %v2262
        %3768 = vmatpush1.bf16.msra.mxu0 %v2261
        %3769 = vmatprep.subr.bf16.mxu0 %v2274
        %3770 = vmatpush1.bf16.msra.mxu0 %v2273
        %3771 = vmatprep.subr.bf16.mxu0 %v2286
        %3772 = vmatpush1.bf16.msra.mxu0 %v2285
        %3773 = vmatprep.subr.bf16.mxu0 %v2298
        %3774 = vmatpush1.bf16.msra.mxu0 %v2297
        %3775 = vmatprep.subr.bf16.mxu0 %v2310
        %3776 = vmatpush1.bf16.msra.mxu0 %v2309
        %3777 = vmatprep.subr.bf16.mxu0 %v2322
        %3778 = vmatpush1.bf16.msra.mxu0 %v2321
        %3779 = vmatprep.subr.bf16.mxu0 %v2334
        %3780 = vmatpush1.bf16.msra.mxu0 %v2333
        %3781 = vmatprep.subr.bf16.mxu0 %v2346
        %3782 = vmatpush1.bf16.msra.mxu0 %v2345
        %3783 = vmatprep.subr.bf16.mxu0 %v2358
        %3784 = vmatpush1.bf16.msra.mxu0 %v2357
        %3785 = vmatprep.subr.bf16.mxu0 %v2370
        %3786 = vmatpush1.bf16.msra.mxu0 %v2369
        %3787 = vmatprep.subr.bf16.mxu0 %v2382
        %3788 = vmatpush1.bf16.msra.mxu0 %v2381
        %3789 = vmatprep.subr.bf16.mxu0 %v2394
        %3790 = vmatpush1.bf16.msra.mxu0 %v2393
        %3791 = vmatprep.subr.bf16.mxu0 %v2406
        %3792 = vmatpush1.bf16.msra.mxu0 %v2405
        %3793 = vmatprep.mubr.bf16.mxu0 %v942
        %3794 = vmatmul.mubr.bf16.gmra.mrb[0].mxu0 %v941
        %v3795 = vpop.f32.mrb[0].mxu0
        %v3796 = vadd.f32 %v708, %v3795
        %v3797 = vpop.f32.mrb[0].mxu0
        %v3798 = vadd.f32 %v712, %v3797
        %v3799 = vpop.f32.mrb[0].mxu0
        %v3800 = vadd.f32 %v708, %v3799
        %v3801 = vpop.f32.mrb[0].mxu0
        %v3802 = vadd.f32 %v712, %v3801
        %3803 = vmatprep.mubr.bf16.mxu0 %v946
        %3804 = vmatmul.mubr.bf16.gmra.mrb[0].mxu0 %v945
        %v3805 = vpop.f32.mrb[0].mxu0
        %v3806 = vadd.f32 %v708, %v3805
        %v3807 = vpop.f32.mrb[0].mxu0
        %v3808 = vadd.f32 %v712, %v3807
        %v3809 = vpop.f32.mrb[0].mxu0
        %v3810 = vadd.f32 %v708, %v3809
        %v3811 = vpop.f32.mrb[0].mxu0
        %v3812 = vadd.f32 %v712, %v3811
        %3813 = vmatprep.mubr.bf16.mxu0 %v950
        %3814 = vmatmul.mubr.bf16.gmra.mrb[0].mxu0 %v949
        %v3815 = vpop.f32.mrb[0].mxu0
        %v3816 = vadd.f32 %v708, %v3815
        %v3817 = vpop.f32.mrb[0].mxu0
        %v3818 = vadd.f32 %v712, %v3817
        %v3819 = vpop.f32.mrb[0].mxu0
        %v3820 = vadd.f32 %v708, %v3819
        %v3821 = vpop.f32.mrb[0].mxu0
        %v3822 = vadd.f32 %v712, %v3821
        %3823 = vmatprep.mubr.bf16.mxu0 %v954
        %3824 = vmatmul.mubr.bf16.gmra.mrb[0].mxu0 %v953
        %v3825 = vpop.f32.mrb[0].mxu0
        %v3826 = vadd.f32 %v708, %v3825
        %v3827 = vpop.f32.mrb[0].mxu0
        %v3828 = vadd.f32 %v712, %v3827
        %v3829 = vpop.f32.mrb[0].mxu0
        %v3830 = vadd.f32 %v708, %v3829
        %v3831 = vpop.f32.mrb[0].mxu0
        %v3832 = vadd.f32 %v712, %v3831
        %3833 = vmatprep.mubr.bf16.mxu0 %v958
        %3834 = vmatmul.mubr.bf16.gmra.mrb[0].mxu0 %v957
        %v3835 = vpop.f32.mrb[0].mxu0
        %v3836 = vadd.f32 %v708, %v3835
        %v3837 = vpop.f32.mrb[0].mxu0
        %v3838 = vadd.f32 %v712, %v3837
        %v3839 = vpop.f32.mrb[0].mxu0
        %v3840 = vadd.f32 %v708, %v3839
        %v3841 = vpop.f32.mrb[0].mxu0
        %v3842 = vadd.f32 %v712, %v3841
        %3843 = vmatprep.mubr.bf16.mxu0 %v962
        %3844 = vmatmul.mubr.bf16.gmra.mrb[0].mxu0 %v961
        %v3845 = vpop.f32.mrb[0].mxu0
        %v3846 = vadd.f32 %v708, %v3845
        %v3847 = vpop.f32.mrb[0].mxu0
        %v3848 = vadd.f32 %v712, %v3847
        %v3849 = vpop.f32.mrb[0].mxu0
        %v3850 = vadd.f32 %v708, %v3849
        %v3851 = vpop.f32.mrb[0].mxu0
        %v3852 = vadd.f32 %v712, %v3851
        %3853 = vmatprep.mubr.bf16.mxu0 %v966
        %3854 = vmatmul.mubr.bf16.gmra.mrb[0].mxu0 %v965
        %v3855 = vpop.f32.mrb[0].mxu0
        %v3856 = vadd.f32 %v708, %v3855
        %v3857 = vpop.f32.mrb[0].mxu0
        %v3858 = vadd.f32 %v712, %v3857
        %v3859 = vpop.f32.mrb[0].mxu0
        %v3860 = vadd.f32 %v708, %v3859
        %v3861 = vpop.f32.mrb[0].mxu0
        %v3862 = vadd.f32 %v712, %v3861
        %3863 = vmatprep.mubr.bf16.mxu0 %v970
        %3864 = vmatmul.mubr.bf16.gmra.mrb[0].mxu0 %v969
        %v3865 = vpop.f32.mrb[0].mxu0
        %v3866 = vadd.f32 %v708, %v3865
        %v3867 = vpop.f32.mrb[0].mxu0
        %v3868 = vadd.f32 %v712, %v3867
        %v3869 = vpop.f32.mrb[0].mxu0
        %v3870 = vadd.f32 %v708, %v3869
        %v3871 = vpop.f32.mrb[0].mxu0
        %v3872 = vadd.f32 %v712, %v3871
        %3873 = vmatprep.mubr.bf16.mxu0 %v974
        %3874 = vmatmul.mubr.bf16.gmra.mrb[0].mxu0 %v973
        %v3875 = vpop.f32.mrb[0].mxu0
        %v3876 = vadd.f32 %v708, %v3875
        %v3877 = vpop.f32.mrb[0].mxu0
        %v3878 = vadd.f32 %v712, %v3877
        %v3879 = vpop.f32.mrb[0].mxu0
        %v3880 = vadd.f32 %v708, %v3879
        %v3881 = vpop.f32.mrb[0].mxu0
        %v3882 = vadd.f32 %v712, %v3881
        %3883 = vmatprep.mubr.bf16.mxu0 %v978
        %3884 = vmatmul.mubr.bf16.gmra.mrb[0].mxu0 %v977
        %v3885 = vpop.f32.mrb[0].mxu0
        %v3886 = vadd.f32 %v708, %v3885
        %v3887 = vpop.f32.mrb[0].mxu0
        %v3888 = vadd.f32 %v712, %v3887
        %v3889 = vpop.f32.mrb[0].mxu0
        %v3890 = vadd.f32 %v708, %v3889
        %v3891 = vpop.f32.mrb[0].mxu0
        %v3892 = vadd.f32 %v712, %v3891
        %3893 = vmatprep.mubr.bf16.mxu0 %v982
        %3894 = vmatmul.mubr.bf16.gmra.mrb[0].mxu0 %v981
        %v3895 = vpop.f32.mrb[0].mxu0
        %v3896 = vadd.f32 %v708, %v3895
        %v3897 = vpop.f32.mrb[0].mxu0
        %v3898 = vadd.f32 %v712, %v3897
        %v3899 = vpop.f32.mrb[0].mxu0
        %v3900 = vadd.f32 %v708, %v3899
        %v3901 = vpop.f32.mrb[0].mxu0
        %v3902 = vadd.f32 %v712, %v3901
        %3903 = vmatprep.mubr.bf16.mxu0 %v986
        %3904 = vmatmul.mubr.bf16.gmra.mrb[0].mxu0 %v985
        %v3905 = vpop.f32.mrb[0].mxu0
        %v3906 = vadd.f32 %v708, %v3905
        %v3907 = vpop.f32.mrb[0].mxu0
        %v3908 = vadd.f32 %v712, %v3907
        %v3909 = vpop.f32.mrb[0].mxu0
        %v3910 = vadd.f32 %v708, %v3909
        %v3911 = vpop.f32.mrb[0].mxu0
        %v3912 = vadd.f32 %v712, %v3911
        %3913 = vmatprep.mubr.bf16.mxu0 %v990
        %3914 = vmatmul.mubr.bf16.gmra.mrb[0].mxu0 %v989
        %v3915 = vpop.f32.mrb[0].mxu0
        %v3916 = vadd.f32 %v708, %v3915
        %v3917 = vpop.f32.mrb[0].mxu0
        %v3918 = vadd.f32 %v712, %v3917
        %v3919 = vpop.f32.mrb[0].mxu0
        %v3920 = vadd.f32 %v708, %v3919
        %v3921 = vpop.f32.mrb[0].mxu0
        %v3922 = vadd.f32 %v712, %v3921
        %3923 = vmatprep.mubr.bf16.mxu0 %v994
        %3924 = vmatmul.mubr.bf16.gmra.mrb[0].mxu0 %v993
        %v3925 = vpop.f32.mrb[0].mxu0
        %v3926 = vadd.f32 %v708, %v3925
        %v3927 = vpop.f32.mrb[0].mxu0
        %v3928 = vadd.f32 %v712, %v3927
        %v3929 = vpop.f32.mrb[0].mxu0
        %v3930 = vadd.f32 %v708, %v3929
        %v3931 = vpop.f32.mrb[0].mxu0
        %v3932 = vadd.f32 %v712, %v3931
        %3933 = vmatprep.mubr.bf16.mxu0 %v998
        %3934 = vmatmul.mubr.bf16.gmra.mrb[0].mxu0 %v997
        %v3935 = vpop.f32.mrb[0].mxu0
        %v3936 = vadd.f32 %v708, %v3935
        %v3937 = vpop.f32.mrb[0].mxu0
        %v3938 = vadd.f32 %v712, %v3937
        %v3939 = vpop.f32.mrb[0].mxu0
        %v3940 = vadd.f32 %v708, %v3939
        %v3941 = vpop.f32.mrb[0].mxu0
        %v3942 = vadd.f32 %v712, %v3941
        %3943 = vmatprep.mubr.bf16.mxu0 %v1002
        %3944 = vmatmul.mubr.bf16.gmra.mrb[0].mxu0 %v1001
        %v3945 = vpop.f32.mrb[0].mxu0
        %v3946 = vadd.f32 %v708, %v3945
        %v3947 = vpop.f32.mrb[0].mxu0
        %v3948 = vadd.f32 %v712, %v3947
        %v3949 = vpop.f32.mrb[0].mxu0
        %v3950 = vadd.f32 %v708, %v3949
        %v3951 = vpop.f32.mrb[0].mxu0
        %v3952 = vadd.f32 %v712, %v3951
        %3953 = vdwg.mxu0
        %3954 = vmatprep.subr.bf16.mxu0 %v2418
        %3955 = vmatpush1.bf16.msra.mxu0 %v2417
        %3956 = vmatprep.subr.bf16.mxu0 %v2430
        %3957 = vmatpush1.bf16.msra.mxu0 %v2429
        %3958 = vmatprep.subr.bf16.mxu0 %v2442
        %3959 = vmatpush1.bf16.msra.mxu0 %v2441
        %3960 = vmatprep.subr.bf16.mxu0 %v2454
        %3961 = vmatpush1.bf16.msra.mxu0 %v2453
        %3962 = vmatprep.subr.bf16.mxu0 %v2466
        %3963 = vmatpush1.bf16.msra.mxu0 %v2465
        %3964 = vmatprep.subr.bf16.mxu0 %v2478
        %3965 = vmatpush1.bf16.msra.mxu0 %v2477
        %3966 = vmatprep.subr.bf16.mxu0 %v2490
        %3967 = vmatpush1.bf16.msra.mxu0 %v2489
        %3968 = vmatprep.subr.bf16.mxu0 %v2502
        %3969 = vmatpush1.bf16.msra.mxu0 %v2501
        %3970 = vmatprep.subr.bf16.mxu0 %v2514
        %3971 = vmatpush1.bf16.msra.mxu0 %v2513
        %3972 = vmatprep.subr.bf16.mxu0 %v2526
        %3973 = vmatpush1.bf16.msra.mxu0 %v2525
        %3974 = vmatprep.subr.bf16.mxu0 %v2538
        %3975 = vmatpush1.bf16.msra.mxu0 %v2537
        %3976 = vmatprep.subr.bf16.mxu0 %v2550
        %3977 = vmatpush1.bf16.msra.mxu0 %v2549
        %3978 = vmatprep.subr.bf16.mxu0 %v2562
        %3979 = vmatpush1.bf16.msra.mxu0 %v2561
        %3980 = vmatprep.subr.bf16.mxu0 %v2574
        %3981 = vmatpush1.bf16.msra.mxu0 %v2573
        %3982 = vmatprep.subr.bf16.mxu0 %v2586
        %3983 = vmatpush1.bf16.msra.mxu0 %v2585
        %3984 = vmatprep.subr.bf16.mxu0 %v2598
        %3985 = vmatpush1.bf16.msra.mxu0 %v2597
        %3986 = vmatprep.mubr.bf16.mxu0 %v944
        %3987 = vmatmul.mubr.bf16.gmra.mrb[0].mxu0 %v943
        %v3988 = vpop.f32.mrb[0].mxu0
        %v3989 = vadd.f32 %v3796, %v3988
        %v3990 = vpop.f32.mrb[0].mxu0
        %v3991 = vadd.f32 %v3798, %v3990
        %v3992 = vpop.f32.mrb[0].mxu0
        %v3993 = vadd.f32 %v3800, %v3992
        %v3994 = vpop.f32.mrb[0].mxu0
        %v3995 = vadd.f32 %v3802, %v3994
        %3996 = vmatprep.mubr.bf16.mxu0 %v948
        %3997 = vmatmul.mubr.bf16.gmra.mrb[0].mxu0 %v947
        %v3998 = vpop.f32.mrb[0].mxu0
        %v3999 = vadd.f32 %v3806, %v3998
        %v4000 = vpop.f32.mrb[0].mxu0
        %v4001 = vadd.f32 %v3808, %v4000
        %v4002 = vpop.f32.mrb[0].mxu0
        %v4003 = vadd.f32 %v3810, %v4002
        %v4004 = vpop.f32.mrb[0].mxu0
        %v4005 = vadd.f32 %v3812, %v4004
        %4006 = vmatprep.mubr.bf16.mxu0 %v952
        %4007 = vmatmul.mubr.bf16.gmra.mrb[0].mxu0 %v951
        %v4008 = vpop.f32.mrb[0].mxu0
        %v4009 = vadd.f32 %v3816, %v4008
        %v4010 = vpop.f32.mrb[0].mxu0
        %v4011 = vadd.f32 %v3818, %v4010
        %v4012 = vpop.f32.mrb[0].mxu0
        %v4013 = vadd.f32 %v3820, %v4012
        %v4014 = vpop.f32.mrb[0].mxu0
        %v4015 = vadd.f32 %v3822, %v4014
        %4016 = vmatprep.mubr.bf16.mxu0 %v956
        %4017 = vmatmul.mubr.bf16.gmra.mrb[0].mxu0 %v955
        %v4018 = vpop.f32.mrb[0].mxu0
        %v4019 = vadd.f32 %v3826, %v4018
        %v4020 = vpop.f32.mrb[0].mxu0
        %v4021 = vadd.f32 %v3828, %v4020
        %v4022 = vpop.f32.mrb[0].mxu0
        %v4023 = vadd.f32 %v3830, %v4022
        %v4024 = vpop.f32.mrb[0].mxu0
        %v4025 = vadd.f32 %v3832, %v4024
        %4026 = vmatprep.mubr.bf16.mxu0 %v960
        %4027 = vmatmul.mubr.bf16.gmra.mrb[0].mxu0 %v959
        %v4028 = vpop.f32.mrb[0].mxu0
        %v4029 = vadd.f32 %v3836, %v4028
        %v4030 = vpop.f32.mrb[0].mxu0
        %v4031 = vadd.f32 %v3838, %v4030
        %v4032 = vpop.f32.mrb[0].mxu0
        %v4033 = vadd.f32 %v3840, %v4032
        %v4034 = vpop.f32.mrb[0].mxu0
        %v4035 = vadd.f32 %v3842, %v4034
        %4036 = vmatprep.mubr.bf16.mxu0 %v964
        %4037 = vmatmul.mubr.bf16.gmra.mrb[0].mxu0 %v963
        %v4038 = vpop.f32.mrb[0].mxu0
        %v4039 = vadd.f32 %v3846, %v4038
        %v4040 = vpop.f32.mrb[0].mxu0
        %v4041 = vadd.f32 %v3848, %v4040
        %v4042 = vpop.f32.mrb[0].mxu0
        %v4043 = vadd.f32 %v3850, %v4042
        %v4044 = vpop.f32.mrb[0].mxu0
        %v4045 = vadd.f32 %v3852, %v4044
        %4046 = vmatprep.mubr.bf16.mxu0 %v968
        %4047 = vmatmul.mubr.bf16.gmra.mrb[0].mxu0 %v967
        %v4048 = vpop.f32.mrb[0].mxu0
        %v4049 = vadd.f32 %v3856, %v4048
        %v4050 = vpop.f32.mrb[0].mxu0
        %v4051 = vadd.f32 %v3858, %v4050
        %v4052 = vpop.f32.mrb[0].mxu0
        %v4053 = vadd.f32 %v3860, %v4052
        %v4054 = vpop.f32.mrb[0].mxu0
        %v4055 = vadd.f32 %v3862, %v4054
        %4056 = vmatprep.mubr.bf16.mxu0 %v972
        %4057 = vmatmul.mubr.bf16.gmra.mrb[0].mxu0 %v971
        %v4058 = vpop.f32.mrb[0].mxu0
        %v4059 = vadd.f32 %v3866, %v4058
        %v4060 = vpop.f32.mrb[0].mxu0
        %v4061 = vadd.f32 %v3868, %v4060
        %v4062 = vpop.f32.mrb[0].mxu0
        %v4063 = vadd.f32 %v3870, %v4062
        %v4064 = vpop.f32.mrb[0].mxu0
        %v4065 = vadd.f32 %v3872, %v4064
        %4066 = vmatprep.mubr.bf16.mxu0 %v976
        %4067 = vmatmul.mubr.bf16.gmra.mrb[0].mxu0 %v975
        %v4068 = vpop.f32.mrb[0].mxu0
        %v4069 = vadd.f32 %v3876, %v4068
        %v4070 = vpop.f32.mrb[0].mxu0
        %v4071 = vadd.f32 %v3878, %v4070
        %v4072 = vpop.f32.mrb[0].mxu0
        %v4073 = vadd.f32 %v3880, %v4072
        %v4074 = vpop.f32.mrb[0].mxu0
        %v4075 = vadd.f32 %v3882, %v4074
        %4076 = vmatprep.mubr.bf16.mxu0 %v980
        %4077 = vmatmul.mubr.bf16.gmra.mrb[0].mxu0 %v979
        %v4078 = vpop.f32.mrb[0].mxu0
        %v4079 = vadd.f32 %v3886, %v4078
        %v4080 = vpop.f32.mrb[0].mxu0
        %v4081 = vadd.f32 %v3888, %v4080
        %v4082 = vpop.f32.mrb[0].mxu0
        %v4083 = vadd.f32 %v3890, %v4082
        %v4084 = vpop.f32.mrb[0].mxu0
        %v4085 = vadd.f32 %v3892, %v4084
        %4086 = vmatprep.mubr.bf16.mxu0 %v984
        %4087 = vmatmul.mubr.bf16.gmra.mrb[0].mxu0 %v983
        %v4088 = vpop.f32.mrb[0].mxu0
        %v4089 = vadd.f32 %v3896, %v4088
        %v4090 = vpop.f32.mrb[0].mxu0
        %v4091 = vadd.f32 %v3898, %v4090
        %v4092 = vpop.f32.mrb[0].mxu0
        %v4093 = vadd.f32 %v3900, %v4092
        %v4094 = vpop.f32.mrb[0].mxu0
        %v4095 = vadd.f32 %v3902, %v4094
        %4096 = vmatprep.mubr.bf16.mxu0 %v988
        %4097 = vmatmul.mubr.bf16.gmra.mrb[0].mxu0 %v987
        %v4098 = vpop.f32.mrb[0].mxu0
        %v4099 = vadd.f32 %v3906, %v4098
        %v4100 = vpop.f32.mrb[0].mxu0
        %v4101 = vadd.f32 %v3908, %v4100
        %v4102 = vpop.f32.mrb[0].mxu0
        %v4103 = vadd.f32 %v3910, %v4102
        %v4104 = vpop.f32.mrb[0].mxu0
        %v4105 = vadd.f32 %v3912, %v4104
        %4106 = vmatprep.mubr.bf16.mxu0 %v992
        %4107 = vmatmul.mubr.bf16.gmra.mrb[0].mxu0 %v991
        %v4108 = vpop.f32.mrb[0].mxu0
        %v4109 = vadd.f32 %v3916, %v4108
        %v4110 = vpop.f32.mrb[0].mxu0
        %v4111 = vadd.f32 %v3918, %v4110
        %v4112 = vpop.f32.mrb[0].mxu0
        %v4113 = vadd.f32 %v3920, %v4112
        %v4114 = vpop.f32.mrb[0].mxu0
        %v4115 = vadd.f32 %v3922, %v4114
        %4116 = vmatprep.mubr.bf16.mxu0 %v996
        %4117 = vmatmul.mubr.bf16.gmra.mrb[0].mxu0 %v995
        %v4118 = vpop.f32.mrb[0].mxu0
        %v4119 = vadd.f32 %v3926, %v4118
        %v4120 = vpop.f32.mrb[0].mxu0
        %v4121 = vadd.f32 %v3928, %v4120
        %v4122 = vpop.f32.mrb[0].mxu0
        %v4123 = vadd.f32 %v3930, %v4122
        %v4124 = vpop.f32.mrb[0].mxu0
        %v4125 = vadd.f32 %v3932, %v4124
        %4126 = vmatprep.mubr.bf16.mxu0 %v1000
        %4127 = vmatmul.mubr.bf16.gmra.mrb[0].mxu0 %v999
        %v4128 = vpop.f32.mrb[0].mxu0
        %v4129 = vadd.f32 %v3936, %v4128
        %v4130 = vpop.f32.mrb[0].mxu0
        %v4131 = vadd.f32 %v3938, %v4130
        %v4132 = vpop.f32.mrb[0].mxu0
        %v4133 = vadd.f32 %v3940, %v4132
        %v4134 = vpop.f32.mrb[0].mxu0
        %v4135 = vadd.f32 %v3942, %v4134
        %4136 = vmatprep.mubr.bf16.mxu0 %v1004
        %4137 = vmatmul.mubr.bf16.gmra.mrb[0].mxu0 %v1003
        %v4138 = vpop.f32.mrb[0].mxu0
        %v4139 = vadd.f32 %v3946, %v4138
        %v4140 = vpop.f32.mrb[0].mxu0
        %v4141 = vadd.f32 %v3948, %v4140
        %v4142 = vpop.f32.mrb[0].mxu0
        %v4143 = vadd.f32 %v3950, %v4142
        %v4144 = vpop.f32.mrb[0].mxu0
        %v4145 = vadd.f32 %v3952, %v4144
        %4146 = vdwg.mxu0
        %4147 = vmatprep.subr.bf16.mxu0 %v2228
        %4148 = vmatpush1.bf16.msra.mxu0 %v2227
        %4149 = vmatprep.subr.bf16.mxu0 %v2240
        %4150 = vmatpush1.bf16.msra.mxu0 %v2239
        %4151 = vmatprep.subr.bf16.mxu0 %v2252
        %4152 = vmatpush1.bf16.msra.mxu0 %v2251
        %4153 = vmatprep.subr.bf16.mxu0 %v2264
        %4154 = vmatpush1.bf16.msra.mxu0 %v2263
        %4155 = vmatprep.subr.bf16.mxu0 %v2276
        %4156 = vmatpush1.bf16.msra.mxu0 %v2275
        %4157 = vmatprep.subr.bf16.mxu0 %v2288
        %4158 = vmatpush1.bf16.msra.mxu0 %v2287
        %4159 = vmatprep.subr.bf16.mxu0 %v2300
        %4160 = vmatpush1.bf16.msra.mxu0 %v2299
        %4161 = vmatprep.subr.bf16.mxu0 %v2312
        %4162 = vmatpush1.bf16.msra.mxu0 %v2311
        %4163 = vmatprep.subr.bf16.mxu0 %v2324
        %4164 = vmatpush1.bf16.msra.mxu0 %v2323
        %4165 = vmatprep.subr.bf16.mxu0 %v2336
        %4166 = vmatpush1.bf16.msra.mxu0 %v2335
        %4167 = vmatprep.subr.bf16.mxu0 %v2348
        %4168 = vmatpush1.bf16.msra.mxu0 %v2347
        %4169 = vmatprep.subr.bf16.mxu0 %v2360
        %4170 = vmatpush1.bf16.msra.mxu0 %v2359
        %4171 = vmatprep.subr.bf16.mxu0 %v2372
        %4172 = vmatpush1.bf16.msra.mxu0 %v2371
        %4173 = vmatprep.subr.bf16.mxu0 %v2384
        %4174 = vmatpush1.bf16.msra.mxu0 %v2383
        %4175 = vmatprep.subr.bf16.mxu0 %v2396
        %4176 = vmatpush1.bf16.msra.mxu0 %v2395
        %4177 = vmatprep.subr.bf16.mxu0 %v2408
        %4178 = vmatpush1.bf16.msra.mxu0 %v2407
        %4179 = vmatprep.mubr.bf16.mxu0 %v942
        %4180 = vmatmul.mubr.bf16.gmra.mrb[0].mxu0 %v941
        %v4181 = vpop.f32.mrb[0].mxu0
        %v4182 = vadd.f32 %v716, %v4181
        %v4183 = vpop.f32.mrb[0].mxu0
        %v4184 = vadd.f32 %v720, %v4183
        %v4185 = vpop.f32.mrb[0].mxu0
        %v4186 = vadd.f32 %v716, %v4185
        %v4187 = vpop.f32.mrb[0].mxu0
        %v4188 = vadd.f32 %v720, %v4187
        %4189 = vmatprep.mubr.bf16.mxu0 %v946
        %4190 = vmatmul.mubr.bf16.gmra.mrb[0].mxu0 %v945
        %v4191 = vpop.f32.mrb[0].mxu0
        %v4192 = vadd.f32 %v716, %v4191
        %v4193 = vpop.f32.mrb[0].mxu0
        %v4194 = vadd.f32 %v720, %v4193
        %v4195 = vpop.f32.mrb[0].mxu0
        %v4196 = vadd.f32 %v716, %v4195
        %v4197 = vpop.f32.mrb[0].mxu0
        %v4198 = vadd.f32 %v720, %v4197
        %4199 = vmatprep.mubr.bf16.mxu0 %v950
        %4200 = vmatmul.mubr.bf16.gmra.mrb[0].mxu0 %v949
        %v4201 = vpop.f32.mrb[0].mxu0
        %v4202 = vadd.f32 %v716, %v4201
        %v4203 = vpop.f32.mrb[0].mxu0
        %v4204 = vadd.f32 %v720, %v4203
        %v4205 = vpop.f32.mrb[0].mxu0
        %v4206 = vadd.f32 %v716, %v4205
        %v4207 = vpop.f32.mrb[0].mxu0
        %v4208 = vadd.f32 %v720, %v4207
        %4209 = vmatprep.mubr.bf16.mxu0 %v954
        %4210 = vmatmul.mubr.bf16.gmra.mrb[0].mxu0 %v953
        %v4211 = vpop.f32.mrb[0].mxu0
        %v4212 = vadd.f32 %v716, %v4211
        %v4213 = vpop.f32.mrb[0].mxu0
        %v4214 = vadd.f32 %v720, %v4213
        %v4215 = vpop.f32.mrb[0].mxu0
        %v4216 = vadd.f32 %v716, %v4215
        %v4217 = vpop.f32.mrb[0].mxu0
        %v4218 = vadd.f32 %v720, %v4217
        %4219 = vmatprep.mubr.bf16.mxu0 %v958
        %4220 = vmatmul.mubr.bf16.gmra.mrb[0].mxu0 %v957
        %v4221 = vpop.f32.mrb[0].mxu0
        %v4222 = vadd.f32 %v716, %v4221
        %v4223 = vpop.f32.mrb[0].mxu0
        %v4224 = vadd.f32 %v720, %v4223
        %v4225 = vpop.f32.mrb[0].mxu0
        %v4226 = vadd.f32 %v716, %v4225
        %v4227 = vpop.f32.mrb[0].mxu0
        %v4228 = vadd.f32 %v720, %v4227
        %4229 = vmatprep.mubr.bf16.mxu0 %v962
        %4230 = vmatmul.mubr.bf16.gmra.mrb[0].mxu0 %v961
        %v4231 = vpop.f32.mrb[0].mxu0
        %v4232 = vadd.f32 %v716, %v4231
        %v4233 = vpop.f32.mrb[0].mxu0
        %v4234 = vadd.f32 %v720, %v4233
        %v4235 = vpop.f32.mrb[0].mxu0
        %v4236 = vadd.f32 %v716, %v4235
        %v4237 = vpop.f32.mrb[0].mxu0
        %v4238 = vadd.f32 %v720, %v4237
        %4239 = vmatprep.mubr.bf16.mxu0 %v966
        %4240 = vmatmul.mubr.bf16.gmra.mrb[0].mxu0 %v965
        %v4241 = vpop.f32.mrb[0].mxu0
        %v4242 = vadd.f32 %v716, %v4241
        %v4243 = vpop.f32.mrb[0].mxu0
        %v4244 = vadd.f32 %v720, %v4243
        %v4245 = vpop.f32.mrb[0].mxu0
        %v4246 = vadd.f32 %v716, %v4245
        %v4247 = vpop.f32.mrb[0].mxu0
        %v4248 = vadd.f32 %v720, %v4247
        %4249 = vmatprep.mubr.bf16.mxu0 %v970
        %4250 = vmatmul.mubr.bf16.gmra.mrb[0].mxu0 %v969
        %v4251 = vpop.f32.mrb[0].mxu0
        %v4252 = vadd.f32 %v716, %v4251
        %v4253 = vpop.f32.mrb[0].mxu0
        %v4254 = vadd.f32 %v720, %v4253
        %v4255 = vpop.f32.mrb[0].mxu0
        %v4256 = vadd.f32 %v716, %v4255
        %v4257 = vpop.f32.mrb[0].mxu0
        %v4258 = vadd.f32 %v720, %v4257
        %4259 = vmatprep.mubr.bf16.mxu0 %v974
        %4260 = vmatmul.mubr.bf16.gmra.mrb[0].mxu0 %v973
        %v4261 = vpop.f32.mrb[0].mxu0
        %v4262 = vadd.f32 %v716, %v4261
        %v4263 = vpop.f32.mrb[0].mxu0
        %v4264 = vadd.f32 %v720, %v4263
        %v4265 = vpop.f32.mrb[0].mxu0
        %v4266 = vadd.f32 %v716, %v4265
        %v4267 = vpop.f32.mrb[0].mxu0
        %v4268 = vadd.f32 %v720, %v4267
        %4269 = vmatprep.mubr.bf16.mxu0 %v978
        %4270 = vmatmul.mubr.bf16.gmra.mrb[0].mxu0 %v977
        %v4271 = vpop.f32.mrb[0].mxu0
        %v4272 = vadd.f32 %v716, %v4271
        %v4273 = vpop.f32.mrb[0].mxu0
        %v4274 = vadd.f32 %v720, %v4273
        %v4275 = vpop.f32.mrb[0].mxu0
        %v4276 = vadd.f32 %v716, %v4275
        %v4277 = vpop.f32.mrb[0].mxu0
        %v4278 = vadd.f32 %v720, %v4277
        %4279 = vmatprep.mubr.bf16.mxu0 %v982
        %4280 = vmatmul.mubr.bf16.gmra.mrb[0].mxu0 %v981
        %v4281 = vpop.f32.mrb[0].mxu0
        %v4282 = vadd.f32 %v716, %v4281
        %v4283 = vpop.f32.mrb[0].mxu0
        %v4284 = vadd.f32 %v720, %v4283
        %v4285 = vpop.f32.mrb[0].mxu0
        %v4286 = vadd.f32 %v716, %v4285
        %v4287 = vpop.f32.mrb[0].mxu0
        %v4288 = vadd.f32 %v720, %v4287
        %4289 = vmatprep.mubr.bf16.mxu0 %v986
        %4290 = vmatmul.mubr.bf16.gmra.mrb[0].mxu0 %v985
        %v4291 = vpop.f32.mrb[0].mxu0
        %v4292 = vadd.f32 %v716, %v4291
        %v4293 = vpop.f32.mrb[0].mxu0
        %v4294 = vadd.f32 %v720, %v4293
        %v4295 = vpop.f32.mrb[0].mxu0
        %v4296 = vadd.f32 %v716, %v4295
        %v4297 = vpop.f32.mrb[0].mxu0
        %v4298 = vadd.f32 %v720, %v4297
        %4299 = vmatprep.mubr.bf16.mxu0 %v990
        %4300 = vmatmul.mubr.bf16.gmra.mrb[0].mxu0 %v989
        %v4301 = vpop.f32.mrb[0].mxu0
        %v4302 = vadd.f32 %v716, %v4301
        %v4303 = vpop.f32.mrb[0].mxu0
        %v4304 = vadd.f32 %v720, %v4303
        %v4305 = vpop.f32.mrb[0].mxu0
        %v4306 = vadd.f32 %v716, %v4305
        %v4307 = vpop.f32.mrb[0].mxu0
        %v4308 = vadd.f32 %v720, %v4307
        %4309 = vmatprep.mubr.bf16.mxu0 %v994
        %4310 = vmatmul.mubr.bf16.gmra.mrb[0].mxu0 %v993
        %v4311 = vpop.f32.mrb[0].mxu0
        %v4312 = vadd.f32 %v716, %v4311
        %v4313 = vpop.f32.mrb[0].mxu0
        %v4314 = vadd.f32 %v720, %v4313
        %v4315 = vpop.f32.mrb[0].mxu0
        %v4316 = vadd.f32 %v716, %v4315
        %v4317 = vpop.f32.mrb[0].mxu0
        %v4318 = vadd.f32 %v720, %v4317
        %4319 = vmatprep.mubr.bf16.mxu0 %v998
        %4320 = vmatmul.mubr.bf16.gmra.mrb[0].mxu0 %v997
        %v4321 = vpop.f32.mrb[0].mxu0
        %v4322 = vadd.f32 %v716, %v4321
        %v4323 = vpop.f32.mrb[0].mxu0
        %v4324 = vadd.f32 %v720, %v4323
        %v4325 = vpop.f32.mrb[0].mxu0
        %v4326 = vadd.f32 %v716, %v4325
        %v4327 = vpop.f32.mrb[0].mxu0
        %v4328 = vadd.f32 %v720, %v4327
        %4329 = vmatprep.mubr.bf16.mxu0 %v1002
        %4330 = vmatmul.mubr.bf16.gmra.mrb[0].mxu0 %v1001
        %v4331 = vpop.f32.mrb[0].mxu0
        %v4332 = vadd.f32 %v716, %v4331
        %v4333 = vpop.f32.mrb[0].mxu0
        %v4334 = vadd.f32 %v720, %v4333
        %v4335 = vpop.f32.mrb[0].mxu0
        %v4336 = vadd.f32 %v716, %v4335
        %v4337 = vpop.f32.mrb[0].mxu0
        %v4338 = vadd.f32 %v720, %v4337
        %4339 = vdwg.mxu0
        %4340 = vmatprep.subr.bf16.mxu0 %v2420
        %4341 = vmatpush1.bf16.msra.mxu0 %v2419
        %4342 = vmatprep.subr.bf16.mxu0 %v2432
        %4343 = vmatpush1.bf16.msra.mxu0 %v2431
        %4344 = vmatprep.subr.bf16.mxu0 %v2444
        %4345 = vmatpush1.bf16.msra.mxu0 %v2443
        %4346 = vmatprep.subr.bf16.mxu0 %v2456
        %4347 = vmatpush1.bf16.msra.mxu0 %v2455
        %4348 = vmatprep.subr.bf16.mxu0 %v2468
        %4349 = vmatpush1.bf16.msra.mxu0 %v2467
        %4350 = vmatprep.subr.bf16.mxu0 %v2480
        %4351 = vmatpush1.bf16.msra.mxu0 %v2479
        %4352 = vmatprep.subr.bf16.mxu0 %v2492
        %4353 = vmatpush1.bf16.msra.mxu0 %v2491
        %4354 = vmatprep.subr.bf16.mxu0 %v2504
        %4355 = vmatpush1.bf16.msra.mxu0 %v2503
        %4356 = vmatprep.subr.bf16.mxu0 %v2516
        %4357 = vmatpush1.bf16.msra.mxu0 %v2515
        %4358 = vmatprep.subr.bf16.mxu0 %v2528
        %4359 = vmatpush1.bf16.msra.mxu0 %v2527
        %4360 = vmatprep.subr.bf16.mxu0 %v2540
        %4361 = vmatpush1.bf16.msra.mxu0 %v2539
        %4362 = vmatprep.subr.bf16.mxu0 %v2552
        %4363 = vmatpush1.bf16.msra.mxu0 %v2551
        %4364 = vmatprep.subr.bf16.mxu0 %v2564
        %4365 = vmatpush1.bf16.msra.mxu0 %v2563
        %4366 = vmatprep.subr.bf16.mxu0 %v2576
        %4367 = vmatpush1.bf16.msra.mxu0 %v2575
        %4368 = vmatprep.subr.bf16.mxu0 %v2588
        %4369 = vmatpush1.bf16.msra.mxu0 %v2587
        %4370 = vmatprep.subr.bf16.mxu0 %v2600
        %4371 = vmatpush1.bf16.msra.mxu0 %v2599
        %4372 = vmatprep.mubr.bf16.mxu0 %v944
        %4373 = vmatmul.mubr.bf16.gmra.mrb[0].mxu0 %v943
        %v4374 = vpop.f32.mrb[0].mxu0
        %v4375 = vadd.f32 %v4182, %v4374
        %v4376 = vpop.f32.mrb[0].mxu0
        %v4377 = vadd.f32 %v4184, %v4376
        %v4378 = vpop.f32.mrb[0].mxu0
        %v4379 = vadd.f32 %v4186, %v4378
        %v4380 = vpop.f32.mrb[0].mxu0
        %v4381 = vadd.f32 %v4188, %v4380
        %4382 = vmatprep.mubr.bf16.mxu0 %v948
        %4383 = vmatmul.mubr.bf16.gmra.mrb[0].mxu0 %v947
        %v4384 = vpop.f32.mrb[0].mxu0
        %v4385 = vadd.f32 %v4192, %v4384
        %v4386 = vpop.f32.mrb[0].mxu0
        %v4387 = vadd.f32 %v4194, %v4386
        %v4388 = vpop.f32.mrb[0].mxu0
        %v4389 = vadd.f32 %v4196, %v4388
        %v4390 = vpop.f32.mrb[0].mxu0
        %v4391 = vadd.f32 %v4198, %v4390
        %4392 = vmatprep.mubr.bf16.mxu0 %v952
        %4393 = vmatmul.mubr.bf16.gmra.mrb[0].mxu0 %v951
        %v4394 = vpop.f32.mrb[0].mxu0
        %v4395 = vadd.f32 %v4202, %v4394
        %v4396 = vpop.f32.mrb[0].mxu0
        %v4397 = vadd.f32 %v4204, %v4396
        %v4398 = vpop.f32.mrb[0].mxu0
        %v4399 = vadd.f32 %v4206, %v4398
        %v4400 = vpop.f32.mrb[0].mxu0
        %v4401 = vadd.f32 %v4208, %v4400
        %4402 = vmatprep.mubr.bf16.mxu0 %v956
        %4403 = vmatmul.mubr.bf16.gmra.mrb[0].mxu0 %v955
        %v4404 = vpop.f32.mrb[0].mxu0
        %v4405 = vadd.f32 %v4212, %v4404
        %v4406 = vpop.f32.mrb[0].mxu0
        %v4407 = vadd.f32 %v4214, %v4406
        %v4408 = vpop.f32.mrb[0].mxu0
        %v4409 = vadd.f32 %v4216, %v4408
        %v4410 = vpop.f32.mrb[0].mxu0
        %v4411 = vadd.f32 %v4218, %v4410
        %4412 = vmatprep.mubr.bf16.mxu0 %v960
        %4413 = vmatmul.mubr.bf16.gmra.mrb[0].mxu0 %v959
        %v4414 = vpop.f32.mrb[0].mxu0
        %v4415 = vadd.f32 %v4222, %v4414
        %v4416 = vpop.f32.mrb[0].mxu0
        %v4417 = vadd.f32 %v4224, %v4416
        %v4418 = vpop.f32.mrb[0].mxu0
        %v4419 = vadd.f32 %v4226, %v4418
        %v4420 = vpop.f32.mrb[0].mxu0
        %v4421 = vadd.f32 %v4228, %v4420
        %4422 = vmatprep.mubr.bf16.mxu0 %v964
        %4423 = vmatmul.mubr.bf16.gmra.mrb[0].mxu0 %v963
        %v4424 = vpop.f32.mrb[0].mxu0
        %v4425 = vadd.f32 %v4232, %v4424
        %v4426 = vpop.f32.mrb[0].mxu0
        %v4427 = vadd.f32 %v4234, %v4426
        %v4428 = vpop.f32.mrb[0].mxu0
        %v4429 = vadd.f32 %v4236, %v4428
        %v4430 = vpop.f32.mrb[0].mxu0
        %v4431 = vadd.f32 %v4238, %v4430
        %4432 = vmatprep.mubr.bf16.mxu0 %v968
        %4433 = vmatmul.mubr.bf16.gmra.mrb[0].mxu0 %v967
        %v4434 = vpop.f32.mrb[0].mxu0
        %v4435 = vadd.f32 %v4242, %v4434
        %v4436 = vpop.f32.mrb[0].mxu0
        %v4437 = vadd.f32 %v4244, %v4436
        %v4438 = vpop.f32.mrb[0].mxu0
        %v4439 = vadd.f32 %v4246, %v4438
        %v4440 = vpop.f32.mrb[0].mxu0
        %v4441 = vadd.f32 %v4248, %v4440
        %4442 = vmatprep.mubr.bf16.mxu0 %v972
        %4443 = vmatmul.mubr.bf16.gmra.mrb[0].mxu0 %v971
        %v4444 = vpop.f32.mrb[0].mxu0
        %v4445 = vadd.f32 %v4252, %v4444
        %v4446 = vpop.f32.mrb[0].mxu0
        %v4447 = vadd.f32 %v4254, %v4446
        %v4448 = vpop.f32.mrb[0].mxu0
        %v4449 = vadd.f32 %v4256, %v4448
        %v4450 = vpop.f32.mrb[0].mxu0
        %v4451 = vadd.f32 %v4258, %v4450
        %4452 = vmatprep.mubr.bf16.mxu0 %v976
        %4453 = vmatmul.mubr.bf16.gmra.mrb[0].mxu0 %v975
        %v4454 = vpop.f32.mrb[0].mxu0
        %v4455 = vadd.f32 %v4262, %v4454
        %v4456 = vpop.f32.mrb[0].mxu0
        %v4457 = vadd.f32 %v4264, %v4456
        %v4458 = vpop.f32.mrb[0].mxu0
        %v4459 = vadd.f32 %v4266, %v4458
        %v4460 = vpop.f32.mrb[0].mxu0
        %v4461 = vadd.f32 %v4268, %v4460
        %4462 = vmatprep.mubr.bf16.mxu0 %v980
        %4463 = vmatmul.mubr.bf16.gmra.mrb[0].mxu0 %v979
        %v4464 = vpop.f32.mrb[0].mxu0
        %v4465 = vadd.f32 %v4272, %v4464
        %v4466 = vpop.f32.mrb[0].mxu0
        %v4467 = vadd.f32 %v4274, %v4466
        %v4468 = vpop.f32.mrb[0].mxu0
        %v4469 = vadd.f32 %v4276, %v4468
        %v4470 = vpop.f32.mrb[0].mxu0
        %v4471 = vadd.f32 %v4278, %v4470
        %4472 = vmatprep.mubr.bf16.mxu0 %v984
        %4473 = vmatmul.mubr.bf16.gmra.mrb[0].mxu0 %v983
        %v4474 = vpop.f32.mrb[0].mxu0
        %v4475 = vadd.f32 %v4282, %v4474
        %v4476 = vpop.f32.mrb[0].mxu0
        %v4477 = vadd.f32 %v4284, %v4476
        %v4478 = vpop.f32.mrb[0].mxu0
        %v4479 = vadd.f32 %v4286, %v4478
        %v4480 = vpop.f32.mrb[0].mxu0
        %v4481 = vadd.f32 %v4288, %v4480
        %4482 = vmatprep.mubr.bf16.mxu0 %v988
        %4483 = vmatmul.mubr.bf16.gmra.mrb[0].mxu0 %v987
        %v4484 = vpop.f32.mrb[0].mxu0
        %v4485 = vadd.f32 %v4292, %v4484
        %v4486 = vpop.f32.mrb[0].mxu0
        %v4487 = vadd.f32 %v4294, %v4486
        %v4488 = vpop.f32.mrb[0].mxu0
        %v4489 = vadd.f32 %v4296, %v4488
        %v4490 = vpop.f32.mrb[0].mxu0
        %v4491 = vadd.f32 %v4298, %v4490
        %4492 = vmatprep.mubr.bf16.mxu0 %v992
        %4493 = vmatmul.mubr.bf16.gmra.mrb[0].mxu0 %v991
        %v4494 = vpop.f32.mrb[0].mxu0
        %v4495 = vadd.f32 %v4302, %v4494
        %v4496 = vpop.f32.mrb[0].mxu0
        %v4497 = vadd.f32 %v4304, %v4496
        %v4498 = vpop.f32.mrb[0].mxu0
        %v4499 = vadd.f32 %v4306, %v4498
        %v4500 = vpop.f32.mrb[0].mxu0
        %v4501 = vadd.f32 %v4308, %v4500
        %4502 = vmatprep.mubr.bf16.mxu0 %v996
        %4503 = vmatmul.mubr.bf16.gmra.mrb[0].mxu0 %v995
        %v4504 = vpop.f32.mrb[0].mxu0
        %v4505 = vadd.f32 %v4312, %v4504
        %v4506 = vpop.f32.mrb[0].mxu0
        %v4507 = vadd.f32 %v4314, %v4506
        %v4508 = vpop.f32.mrb[0].mxu0
        %v4509 = vadd.f32 %v4316, %v4508
        %v4510 = vpop.f32.mrb[0].mxu0
        %v4511 = vadd.f32 %v4318, %v4510
        %4512 = vmatprep.mubr.bf16.mxu0 %v1000
        %4513 = vmatmul.mubr.bf16.gmra.mrb[0].mxu0 %v999
        %v4514 = vpop.f32.mrb[0].mxu0
        %v4515 = vadd.f32 %v4322, %v4514
        %v4516 = vpop.f32.mrb[0].mxu0
        %v4517 = vadd.f32 %v4324, %v4516
        %v4518 = vpop.f32.mrb[0].mxu0
        %v4519 = vadd.f32 %v4326, %v4518
        %v4520 = vpop.f32.mrb[0].mxu0
        %v4521 = vadd.f32 %v4328, %v4520
        %4522 = vmatprep.mubr.bf16.mxu0 %v1004
        %4523 = vmatmul.mubr.bf16.gmra.mrb[0].mxu0 %v1003
        %v4524 = vpop.f32.mrb[0].mxu0
        %v4525 = vadd.f32 %v4332, %v4524
        %v4526 = vpop.f32.mrb[0].mxu0
        %v4527 = vadd.f32 %v4334, %v4526
        %v4528 = vpop.f32.mrb[0].mxu0
        %v4529 = vadd.f32 %v4336, %v4528
        %v4530 = vpop.f32.mrb[0].mxu0
        %v4531 = vadd.f32 %v4338, %v4530
        %4532 = vdwg.mxu0
        %4533 = vmatprep.subr.bf16.mxu0 %v2230
        %4534 = vmatpush1.bf16.msra.mxu0 %v2229
        %4535 = vmatprep.subr.bf16.mxu0 %v2242
        %4536 = vmatpush1.bf16.msra.mxu0 %v2241
        %4537 = vmatprep.subr.bf16.mxu0 %v2254
        %4538 = vmatpush1.bf16.msra.mxu0 %v2253
        %4539 = vmatprep.subr.bf16.mxu0 %v2266
        %4540 = vmatpush1.bf16.msra.mxu0 %v2265
        %4541 = vmatprep.subr.bf16.mxu0 %v2278
        %4542 = vmatpush1.bf16.msra.mxu0 %v2277
        %4543 = vmatprep.subr.bf16.mxu0 %v2290
        %4544 = vmatpush1.bf16.msra.mxu0 %v2289
        %4545 = vmatprep.subr.bf16.mxu0 %v2302
        %4546 = vmatpush1.bf16.msra.mxu0 %v2301
        %4547 = vmatprep.subr.bf16.mxu0 %v2314
        %4548 = vmatpush1.bf16.msra.mxu0 %v2313
        %4549 = vmatprep.subr.bf16.mxu0 %v2326
        %4550 = vmatpush1.bf16.msra.mxu0 %v2325
        %4551 = vmatprep.subr.bf16.mxu0 %v2338
        %4552 = vmatpush1.bf16.msra.mxu0 %v2337
        %4553 = vmatprep.subr.bf16.mxu0 %v2350
        %4554 = vmatpush1.bf16.msra.mxu0 %v2349
        %4555 = vmatprep.subr.bf16.mxu0 %v2362
        %4556 = vmatpush1.bf16.msra.mxu0 %v2361
        %4557 = vmatprep.subr.bf16.mxu0 %v2374
        %4558 = vmatpush1.bf16.msra.mxu0 %v2373
        %4559 = vmatprep.subr.bf16.mxu0 %v2386
        %4560 = vmatpush1.bf16.msra.mxu0 %v2385
        %4561 = vmatprep.subr.bf16.mxu0 %v2398
        %4562 = vmatpush1.bf16.msra.mxu0 %v2397
        %4563 = vmatprep.subr.bf16.mxu0 %v2410
        %4564 = vmatpush1.bf16.msra.mxu0 %v2409
        %4565 = vmatprep.mubr.bf16.mxu0 %v942
        %4566 = vmatmul.mubr.bf16.gmra.mrb[0].mxu0 %v941
        %v4567 = vpop.f32.mrb[0].mxu0
        %v4568 = vadd.f32 %v724, %v4567
        %v4569 = vpop.f32.mrb[0].mxu0
        %v4570 = vadd.f32 %v728, %v4569
        %v4571 = vpop.f32.mrb[0].mxu0
        %v4572 = vadd.f32 %v724, %v4571
        %v4573 = vpop.f32.mrb[0].mxu0
        %v4574 = vadd.f32 %v728, %v4573
        %4575 = vmatprep.mubr.bf16.mxu0 %v946
        %4576 = vmatmul.mubr.bf16.gmra.mrb[0].mxu0 %v945
        %v4577 = vpop.f32.mrb[0].mxu0
        %v4578 = vadd.f32 %v724, %v4577
        %v4579 = vpop.f32.mrb[0].mxu0
        %v4580 = vadd.f32 %v728, %v4579
        %v4581 = vpop.f32.mrb[0].mxu0
        %v4582 = vadd.f32 %v724, %v4581
        %v4583 = vpop.f32.mrb[0].mxu0
        %v4584 = vadd.f32 %v728, %v4583
        %4585 = vmatprep.mubr.bf16.mxu0 %v950
        %4586 = vmatmul.mubr.bf16.gmra.mrb[0].mxu0 %v949
        %v4587 = vpop.f32.mrb[0].mxu0
        %v4588 = vadd.f32 %v724, %v4587
        %v4589 = vpop.f32.mrb[0].mxu0
        %v4590 = vadd.f32 %v728, %v4589
        %v4591 = vpop.f32.mrb[0].mxu0
        %v4592 = vadd.f32 %v724, %v4591
        %v4593 = vpop.f32.mrb[0].mxu0
        %v4594 = vadd.f32 %v728, %v4593
        %4595 = vmatprep.mubr.bf16.mxu0 %v954
        %4596 = vmatmul.mubr.bf16.gmra.mrb[0].mxu0 %v953
        %v4597 = vpop.f32.mrb[0].mxu0
        %v4598 = vadd.f32 %v724, %v4597
        %v4599 = vpop.f32.mrb[0].mxu0
        %v4600 = vadd.f32 %v728, %v4599
        %v4601 = vpop.f32.mrb[0].mxu0
        %v4602 = vadd.f32 %v724, %v4601
        %v4603 = vpop.f32.mrb[0].mxu0
        %v4604 = vadd.f32 %v728, %v4603
        %4605 = vmatprep.mubr.bf16.mxu0 %v958
        %4606 = vmatmul.mubr.bf16.gmra.mrb[0].mxu0 %v957
        %v4607 = vpop.f32.mrb[0].mxu0
        %v4608 = vadd.f32 %v724, %v4607
        %v4609 = vpop.f32.mrb[0].mxu0
        %v4610 = vadd.f32 %v728, %v4609
        %v4611 = vpop.f32.mrb[0].mxu0
        %v4612 = vadd.f32 %v724, %v4611
        %v4613 = vpop.f32.mrb[0].mxu0
        %v4614 = vadd.f32 %v728, %v4613
        %4615 = vmatprep.mubr.bf16.mxu0 %v962
        %4616 = vmatmul.mubr.bf16.gmra.mrb[0].mxu0 %v961
        %v4617 = vpop.f32.mrb[0].mxu0
        %v4618 = vadd.f32 %v724, %v4617
        %v4619 = vpop.f32.mrb[0].mxu0
        %v4620 = vadd.f32 %v728, %v4619
        %v4621 = vpop.f32.mrb[0].mxu0
        %v4622 = vadd.f32 %v724, %v4621
        %v4623 = vpop.f32.mrb[0].mxu0
        %v4624 = vadd.f32 %v728, %v4623
        %4625 = vmatprep.mubr.bf16.mxu0 %v966
        %4626 = vmatmul.mubr.bf16.gmra.mrb[0].mxu0 %v965
        %v4627 = vpop.f32.mrb[0].mxu0
        %v4628 = vadd.f32 %v724, %v4627
        %v4629 = vpop.f32.mrb[0].mxu0
        %v4630 = vadd.f32 %v728, %v4629
        %v4631 = vpop.f32.mrb[0].mxu0
        %v4632 = vadd.f32 %v724, %v4631
        %v4633 = vpop.f32.mrb[0].mxu0
        %v4634 = vadd.f32 %v728, %v4633
        %4635 = vmatprep.mubr.bf16.mxu0 %v970
        %4636 = vmatmul.mubr.bf16.gmra.mrb[0].mxu0 %v969
        %v4637 = vpop.f32.mrb[0].mxu0
        %v4638 = vadd.f32 %v724, %v4637
        %v4639 = vpop.f32.mrb[0].mxu0
        %v4640 = vadd.f32 %v728, %v4639
        %v4641 = vpop.f32.mrb[0].mxu0
        %v4642 = vadd.f32 %v724, %v4641
        %v4643 = vpop.f32.mrb[0].mxu0
        %v4644 = vadd.f32 %v728, %v4643
        %4645 = vmatprep.mubr.bf16.mxu0 %v974
        %4646 = vmatmul.mubr.bf16.gmra.mrb[0].mxu0 %v973
        %v4647 = vpop.f32.mrb[0].mxu0
        %v4648 = vadd.f32 %v724, %v4647
        %v4649 = vpop.f32.mrb[0].mxu0
        %v4650 = vadd.f32 %v728, %v4649
        %v4651 = vpop.f32.mrb[0].mxu0
        %v4652 = vadd.f32 %v724, %v4651
        %v4653 = vpop.f32.mrb[0].mxu0
        %v4654 = vadd.f32 %v728, %v4653
        %4655 = vmatprep.mubr.bf16.mxu0 %v978
        %4656 = vmatmul.mubr.bf16.gmra.mrb[0].mxu0 %v977
        %v4657 = vpop.f32.mrb[0].mxu0
        %v4658 = vadd.f32 %v724, %v4657
        %v4659 = vpop.f32.mrb[0].mxu0
        %v4660 = vadd.f32 %v728, %v4659
        %v4661 = vpop.f32.mrb[0].mxu0
        %v4662 = vadd.f32 %v724, %v4661
        %v4663 = vpop.f32.mrb[0].mxu0
        %v4664 = vadd.f32 %v728, %v4663
        %4665 = vmatprep.mubr.bf16.mxu0 %v982
        %4666 = vmatmul.mubr.bf16.gmra.mrb[0].mxu0 %v981
        %v4667 = vpop.f32.mrb[0].mxu0
        %v4668 = vadd.f32 %v724, %v4667
        %v4669 = vpop.f32.mrb[0].mxu0
        %v4670 = vadd.f32 %v728, %v4669
        %v4671 = vpop.f32.mrb[0].mxu0
        %v4672 = vadd.f32 %v724, %v4671
        %v4673 = vpop.f32.mrb[0].mxu0
        %v4674 = vadd.f32 %v728, %v4673
        %4675 = vmatprep.mubr.bf16.mxu0 %v986
        %4676 = vmatmul.mubr.bf16.gmra.mrb[0].mxu0 %v985
        %v4677 = vpop.f32.mrb[0].mxu0
        %v4678 = vadd.f32 %v724, %v4677
        %v4679 = vpop.f32.mrb[0].mxu0
        %v4680 = vadd.f32 %v728, %v4679
        %v4681 = vpop.f32.mrb[0].mxu0
        %v4682 = vadd.f32 %v724, %v4681
        %v4683 = vpop.f32.mrb[0].mxu0
        %v4684 = vadd.f32 %v728, %v4683
        %4685 = vmatprep.mubr.bf16.mxu0 %v990
        %4686 = vmatmul.mubr.bf16.gmra.mrb[0].mxu0 %v989
        %v4687 = vpop.f32.mrb[0].mxu0
        %v4688 = vadd.f32 %v724, %v4687
        %v4689 = vpop.f32.mrb[0].mxu0
        %v4690 = vadd.f32 %v728, %v4689
        %v4691 = vpop.f32.mrb[0].mxu0
        %v4692 = vadd.f32 %v724, %v4691
        %v4693 = vpop.f32.mrb[0].mxu0
        %v4694 = vadd.f32 %v728, %v4693
        %4695 = vmatprep.mubr.bf16.mxu0 %v994
        %4696 = vmatmul.mubr.bf16.gmra.mrb[0].mxu0 %v993
        %v4697 = vpop.f32.mrb[0].mxu0
        %v4698 = vadd.f32 %v724, %v4697
        %v4699 = vpop.f32.mrb[0].mxu0
        %v4700 = vadd.f32 %v728, %v4699
        %v4701 = vpop.f32.mrb[0].mxu0
        %v4702 = vadd.f32 %v724, %v4701
        %v4703 = vpop.f32.mrb[0].mxu0
        %v4704 = vadd.f32 %v728, %v4703
        %4705 = vmatprep.mubr.bf16.mxu0 %v998
        %4706 = vmatmul.mubr.bf16.gmra.mrb[0].mxu0 %v997
        %v4707 = vpop.f32.mrb[0].mxu0
        %v4708 = vadd.f32 %v724, %v4707
        %v4709 = vpop.f32.mrb[0].mxu0
        %v4710 = vadd.f32 %v728, %v4709
        %v4711 = vpop.f32.mrb[0].mxu0
        %v4712 = vadd.f32 %v724, %v4711
        %v4713 = vpop.f32.mrb[0].mxu0
        %v4714 = vadd.f32 %v728, %v4713
        %4715 = vmatprep.mubr.bf16.mxu0 %v1002
        %4716 = vmatmul.mubr.bf16.gmra.mrb[0].mxu0 %v1001
        %v4717 = vpop.f32.mrb[0].mxu0
        %v4718 = vadd.f32 %v724, %v4717
        %v4719 = vpop.f32.mrb[0].mxu0
        %v4720 = vadd.f32 %v728, %v4719
        %v4721 = vpop.f32.mrb[0].mxu0
        %v4722 = vadd.f32 %v724, %v4721
        %v4723 = vpop.f32.mrb[0].mxu0
        %v4724 = vadd.f32 %v728, %v4723
        %4725 = vdwg.mxu0
        %4726 = vmatprep.subr.bf16.mxu0 %v2422
        %4727 = vmatpush1.bf16.msra.mxu0 %v2421
        %4728 = vmatprep.subr.bf16.mxu0 %v2434
        %4729 = vmatpush1.bf16.msra.mxu0 %v2433
        %4730 = vmatprep.subr.bf16.mxu0 %v2446
        %4731 = vmatpush1.bf16.msra.mxu0 %v2445
        %4732 = vmatprep.subr.bf16.mxu0 %v2458
        %4733 = vmatpush1.bf16.msra.mxu0 %v2457
        %4734 = vmatprep.subr.bf16.mxu0 %v2470
        %4735 = vmatpush1.bf16.msra.mxu0 %v2469
        %4736 = vmatprep.subr.bf16.mxu0 %v2482
        %4737 = vmatpush1.bf16.msra.mxu0 %v2481
        %4738 = vmatprep.subr.bf16.mxu0 %v2494
        %4739 = vmatpush1.bf16.msra.mxu0 %v2493
        %4740 = vmatprep.subr.bf16.mxu0 %v2506
        %4741 = vmatpush1.bf16.msra.mxu0 %v2505
        %4742 = vmatprep.subr.bf16.mxu0 %v2518
        %4743 = vmatpush1.bf16.msra.mxu0 %v2517
        %4744 = vmatprep.subr.bf16.mxu0 %v2530
        %4745 = vmatpush1.bf16.msra.mxu0 %v2529
        %4746 = vmatprep.subr.bf16.mxu0 %v2542
        %4747 = vmatpush1.bf16.msra.mxu0 %v2541
        %4748 = vmatprep.subr.bf16.mxu0 %v2554
        %4749 = vmatpush1.bf16.msra.mxu0 %v2553
        %4750 = vmatprep.subr.bf16.mxu0 %v2566
        %4751 = vmatpush1.bf16.msra.mxu0 %v2565
        %4752 = vmatprep.subr.bf16.mxu0 %v2578
        %4753 = vmatpush1.bf16.msra.mxu0 %v2577
        %4754 = vmatprep.subr.bf16.mxu0 %v2590
        %4755 = vmatpush1.bf16.msra.mxu0 %v2589
        %4756 = vmatprep.subr.bf16.mxu0 %v2602
        %4757 = vmatpush1.bf16.msra.mxu0 %v2601
        %4758 = vmatprep.mubr.bf16.mxu0 %v944
        %4759 = vmatmul.mubr.bf16.gmra.mrb[0].mxu0 %v943
        %v4760 = vpop.f32.mrb[0].mxu0
        %v4761 = vadd.f32 %v4568, %v4760
        %v4762 = vpop.f32.mrb[0].mxu0
        %v4763 = vadd.f32 %v4570, %v4762
        %v4764 = vpop.f32.mrb[0].mxu0
        %v4765 = vadd.f32 %v4572, %v4764
        %v4766 = vpop.f32.mrb[0].mxu0
        %v4767 = vadd.f32 %v4574, %v4766
        %4768 = vmatprep.mubr.bf16.mxu0 %v948
        %4769 = vmatmul.mubr.bf16.gmra.mrb[0].mxu0 %v947
        %v4770 = vpop.f32.mrb[0].mxu0
        %v4771 = vadd.f32 %v4578, %v4770
        %v4772 = vpop.f32.mrb[0].mxu0
        %v4773 = vadd.f32 %v4580, %v4772
        %v4774 = vpop.f32.mrb[0].mxu0
        %v4775 = vadd.f32 %v4582, %v4774
        %v4776 = vpop.f32.mrb[0].mxu0
        %v4777 = vadd.f32 %v4584, %v4776
        %4778 = vmatprep.mubr.bf16.mxu0 %v952
        %4779 = vmatmul.mubr.bf16.gmra.mrb[0].mxu0 %v951
        %v4780 = vpop.f32.mrb[0].mxu0
        %v4781 = vadd.f32 %v4588, %v4780
        %v4782 = vpop.f32.mrb[0].mxu0
        %v4783 = vadd.f32 %v4590, %v4782
        %v4784 = vpop.f32.mrb[0].mxu0
        %v4785 = vadd.f32 %v4592, %v4784
        %v4786 = vpop.f32.mrb[0].mxu0
        %v4787 = vadd.f32 %v4594, %v4786
        %4788 = vmatprep.mubr.bf16.mxu0 %v956
        %4789 = vmatmul.mubr.bf16.gmra.mrb[0].mxu0 %v955
        %v4790 = vpop.f32.mrb[0].mxu0
        %v4791 = vadd.f32 %v4598, %v4790
        %v4792 = vpop.f32.mrb[0].mxu0
        %v4793 = vadd.f32 %v4600, %v4792
        %v4794 = vpop.f32.mrb[0].mxu0
        %v4795 = vadd.f32 %v4602, %v4794
        %v4796 = vpop.f32.mrb[0].mxu0
        %v4797 = vadd.f32 %v4604, %v4796
        %4798 = vmatprep.mubr.bf16.mxu0 %v960
        %4799 = vmatmul.mubr.bf16.gmra.mrb[0].mxu0 %v959
        %v4800 = vpop.f32.mrb[0].mxu0
        %v4801 = vadd.f32 %v4608, %v4800
        %v4802 = vpop.f32.mrb[0].mxu0
        %v4803 = vadd.f32 %v4610, %v4802
        %v4804 = vpop.f32.mrb[0].mxu0
        %v4805 = vadd.f32 %v4612, %v4804
        %v4806 = vpop.f32.mrb[0].mxu0
        %v4807 = vadd.f32 %v4614, %v4806
        %4808 = vmatprep.mubr.bf16.mxu0 %v964
        %4809 = vmatmul.mubr.bf16.gmra.mrb[0].mxu0 %v963
        %v4810 = vpop.f32.mrb[0].mxu0
        %v4811 = vadd.f32 %v4618, %v4810
        %v4812 = vpop.f32.mrb[0].mxu0
        %v4813 = vadd.f32 %v4620, %v4812
        %v4814 = vpop.f32.mrb[0].mxu0
        %v4815 = vadd.f32 %v4622, %v4814
        %v4816 = vpop.f32.mrb[0].mxu0
        %v4817 = vadd.f32 %v4624, %v4816
        %4818 = vmatprep.mubr.bf16.mxu0 %v968
        %4819 = vmatmul.mubr.bf16.gmra.mrb[0].mxu0 %v967
        %v4820 = vpop.f32.mrb[0].mxu0
        %v4821 = vadd.f32 %v4628, %v4820
        %v4822 = vpop.f32.mrb[0].mxu0
        %v4823 = vadd.f32 %v4630, %v4822
        %v4824 = vpop.f32.mrb[0].mxu0
        %v4825 = vadd.f32 %v4632, %v4824
        %v4826 = vpop.f32.mrb[0].mxu0
        %v4827 = vadd.f32 %v4634, %v4826
        %4828 = vmatprep.mubr.bf16.mxu0 %v972
        %4829 = vmatmul.mubr.bf16.gmra.mrb[0].mxu0 %v971
        %v4830 = vpop.f32.mrb[0].mxu0
        %v4831 = vadd.f32 %v4638, %v4830
        %v4832 = vpop.f32.mrb[0].mxu0
        %v4833 = vadd.f32 %v4640, %v4832
        %v4834 = vpop.f32.mrb[0].mxu0
        %v4835 = vadd.f32 %v4642, %v4834
        %v4836 = vpop.f32.mrb[0].mxu0
        %v4837 = vadd.f32 %v4644, %v4836
        %4838 = vmatprep.mubr.bf16.mxu0 %v976
        %4839 = vmatmul.mubr.bf16.gmra.mrb[0].mxu0 %v975
        %v4840 = vpop.f32.mrb[0].mxu0
        %v4841 = vadd.f32 %v4648, %v4840
        %v4842 = vpop.f32.mrb[0].mxu0
        %v4843 = vadd.f32 %v4650, %v4842
        %v4844 = vpop.f32.mrb[0].mxu0
        %v4845 = vadd.f32 %v4652, %v4844
        %v4846 = vpop.f32.mrb[0].mxu0
        %v4847 = vadd.f32 %v4654, %v4846
        %4848 = vmatprep.mubr.bf16.mxu0 %v980
        %4849 = vmatmul.mubr.bf16.gmra.mrb[0].mxu0 %v979
        %v4850 = vpop.f32.mrb[0].mxu0
        %v4851 = vadd.f32 %v4658, %v4850
        %v4852 = vpop.f32.mrb[0].mxu0
        %v4853 = vadd.f32 %v4660, %v4852
        %v4854 = vpop.f32.mrb[0].mxu0
        %v4855 = vadd.f32 %v4662, %v4854
        %v4856 = vpop.f32.mrb[0].mxu0
        %v4857 = vadd.f32 %v4664, %v4856
        %4858 = vmatprep.mubr.bf16.mxu0 %v984
        %4859 = vmatmul.mubr.bf16.gmra.mrb[0].mxu0 %v983
        %v4860 = vpop.f32.mrb[0].mxu0
        %v4861 = vadd.f32 %v4668, %v4860
        %v4862 = vpop.f32.mrb[0].mxu0
        %v4863 = vadd.f32 %v4670, %v4862
        %v4864 = vpop.f32.mrb[0].mxu0
        %v4865 = vadd.f32 %v4672, %v4864
        %v4866 = vpop.f32.mrb[0].mxu0
        %v4867 = vadd.f32 %v4674, %v4866
        %4868 = vmatprep.mubr.bf16.mxu0 %v988
        %4869 = vmatmul.mubr.bf16.gmra.mrb[0].mxu0 %v987
        %v4870 = vpop.f32.mrb[0].mxu0
        %v4871 = vadd.f32 %v4678, %v4870
        %v4872 = vpop.f32.mrb[0].mxu0
        %v4873 = vadd.f32 %v4680, %v4872
        %v4874 = vpop.f32.mrb[0].mxu0
        %v4875 = vadd.f32 %v4682, %v4874
        %v4876 = vpop.f32.mrb[0].mxu0
        %v4877 = vadd.f32 %v4684, %v4876
        %4878 = vmatprep.mubr.bf16.mxu0 %v992
        %4879 = vmatmul.mubr.bf16.gmra.mrb[0].mxu0 %v991
        %v4880 = vpop.f32.mrb[0].mxu0
        %v4881 = vadd.f32 %v4688, %v4880
        %v4882 = vpop.f32.mrb[0].mxu0
        %v4883 = vadd.f32 %v4690, %v4882
        %v4884 = vpop.f32.mrb[0].mxu0
        %v4885 = vadd.f32 %v4692, %v4884
        %v4886 = vpop.f32.mrb[0].mxu0
        %v4887 = vadd.f32 %v4694, %v4886
        %4888 = vmatprep.mubr.bf16.mxu0 %v996
        %4889 = vmatmul.mubr.bf16.gmra.mrb[0].mxu0 %v995
        %v4890 = vpop.f32.mrb[0].mxu0
        %v4891 = vadd.f32 %v4698, %v4890
        %v4892 = vpop.f32.mrb[0].mxu0
        %v4893 = vadd.f32 %v4700, %v4892
        %v4894 = vpop.f32.mrb[0].mxu0
        %v4895 = vadd.f32 %v4702, %v4894
        %v4896 = vpop.f32.mrb[0].mxu0
        %v4897 = vadd.f32 %v4704, %v4896
        %4898 = vmatprep.mubr.bf16.mxu0 %v1000
        %4899 = vmatmul.mubr.bf16.gmra.mrb[0].mxu0 %v999
        %v4900 = vpop.f32.mrb[0].mxu0
        %v4901 = vadd.f32 %v4708, %v4900
        %v4902 = vpop.f32.mrb[0].mxu0
        %v4903 = vadd.f32 %v4710, %v4902
        %v4904 = vpop.f32.mrb[0].mxu0
        %v4905 = vadd.f32 %v4712, %v4904
        %v4906 = vpop.f32.mrb[0].mxu0
        %v4907 = vadd.f32 %v4714, %v4906
        %4908 = vmatprep.mubr.bf16.mxu0 %v1004
        %4909 = vmatmul.mubr.bf16.gmra.mrb[0].mxu0 %v1003
        %v4910 = vpop.f32.mrb[0].mxu0
        %v4911 = vadd.f32 %v4718, %v4910
        %v4912 = vpop.f32.mrb[0].mxu0
        %v4913 = vadd.f32 %v4720, %v4912
        %v4914 = vpop.f32.mrb[0].mxu0
        %v4915 = vadd.f32 %v4722, %v4914
        %v4916 = vpop.f32.mrb[0].mxu0
        %v4917 = vadd.f32 %v4724, %v4916
        %4918 = vdwg.mxu0
        %4919 = vmatprep.subr.bf16.mxu0 %v2232
        %4920 = vmatpush1.bf16.msra.mxu0 %v2231
        %4921 = vmatprep.subr.bf16.mxu0 %v2244
        %4922 = vmatpush1.bf16.msra.mxu0 %v2243
        %4923 = vmatprep.subr.bf16.mxu0 %v2256
        %4924 = vmatpush1.bf16.msra.mxu0 %v2255
        %4925 = vmatprep.subr.bf16.mxu0 %v2268
        %4926 = vmatpush1.bf16.msra.mxu0 %v2267
        %4927 = vmatprep.subr.bf16.mxu0 %v2280
        %4928 = vmatpush1.bf16.msra.mxu0 %v2279
        %4929 = vmatprep.subr.bf16.mxu0 %v2292
        %4930 = vmatpush1.bf16.msra.mxu0 %v2291
        %4931 = vmatprep.subr.bf16.mxu0 %v2304
        %4932 = vmatpush1.bf16.msra.mxu0 %v2303
        %4933 = vmatprep.subr.bf16.mxu0 %v2316
        %4934 = vmatpush1.bf16.msra.mxu0 %v2315
        %4935 = vmatprep.subr.bf16.mxu0 %v2328
        %4936 = vmatpush1.bf16.msra.mxu0 %v2327
        %4937 = vmatprep.subr.bf16.mxu0 %v2340
        %4938 = vmatpush1.bf16.msra.mxu0 %v2339
        %4939 = vmatprep.subr.bf16.mxu0 %v2352
        %4940 = vmatpush1.bf16.msra.mxu0 %v2351
        %4941 = vmatprep.subr.bf16.mxu0 %v2364
        %4942 = vmatpush1.bf16.msra.mxu0 %v2363
        %4943 = vmatprep.subr.bf16.mxu0 %v2376
        %4944 = vmatpush1.bf16.msra.mxu0 %v2375
        %4945 = vmatprep.subr.bf16.mxu0 %v2388
        %4946 = vmatpush1.bf16.msra.mxu0 %v2387
        %4947 = vmatprep.subr.bf16.mxu0 %v2400
        %4948 = vmatpush1.bf16.msra.mxu0 %v2399
        %4949 = vmatprep.subr.bf16.mxu0 %v2412
        %4950 = vmatpush1.bf16.msra.mxu0 %v2411
        %4951 = vmatprep.mubr.bf16.mxu0 %v942
        %4952 = vmatmul.mubr.bf16.gmra.mrb[0].mxu0 %v941
        %v4953 = vpop.f32.mrb[0].mxu0
        %v4954 = vadd.f32 %v732, %v4953
        %v4955 = vpop.f32.mrb[0].mxu0
        %v4956 = vadd.f32 %v736, %v4955
        %v4957 = vpop.f32.mrb[0].mxu0
        %v4958 = vadd.f32 %v732, %v4957
        %v4959 = vpop.f32.mrb[0].mxu0
        %v4960 = vadd.f32 %v736, %v4959
        %4961 = vmatprep.mubr.bf16.mxu0 %v946
        %4962 = vmatmul.mubr.bf16.gmra.mrb[0].mxu0 %v945
        %v4963 = vpop.f32.mrb[0].mxu0
        %v4964 = vadd.f32 %v732, %v4963
        %v4965 = vpop.f32.mrb[0].mxu0
        %v4966 = vadd.f32 %v736, %v4965
        %v4967 = vpop.f32.mrb[0].mxu0
        %v4968 = vadd.f32 %v732, %v4967
        %v4969 = vpop.f32.mrb[0].mxu0
        %v4970 = vadd.f32 %v736, %v4969
        %4971 = vmatprep.mubr.bf16.mxu0 %v950
        %4972 = vmatmul.mubr.bf16.gmra.mrb[0].mxu0 %v949
        %v4973 = vpop.f32.mrb[0].mxu0
        %v4974 = vadd.f32 %v732, %v4973
        %v4975 = vpop.f32.mrb[0].mxu0
        %v4976 = vadd.f32 %v736, %v4975
        %v4977 = vpop.f32.mrb[0].mxu0
        %v4978 = vadd.f32 %v732, %v4977
        %v4979 = vpop.f32.mrb[0].mxu0
        %v4980 = vadd.f32 %v736, %v4979
        %4981 = vmatprep.mubr.bf16.mxu0 %v954
        %4982 = vmatmul.mubr.bf16.gmra.mrb[0].mxu0 %v953
        %v4983 = vpop.f32.mrb[0].mxu0
        %v4984 = vadd.f32 %v732, %v4983
        %v4985 = vpop.f32.mrb[0].mxu0
        %v4986 = vadd.f32 %v736, %v4985
        %v4987 = vpop.f32.mrb[0].mxu0
        %v4988 = vadd.f32 %v732, %v4987
        %v4989 = vpop.f32.mrb[0].mxu0
        %v4990 = vadd.f32 %v736, %v4989
        %4991 = vmatprep.mubr.bf16.mxu0 %v958
        %4992 = vmatmul.mubr.bf16.gmra.mrb[0].mxu0 %v957
        %v4993 = vpop.f32.mrb[0].mxu0
        %v4994 = vadd.f32 %v732, %v4993
        %v4995 = vpop.f32.mrb[0].mxu0
        %v4996 = vadd.f32 %v736, %v4995
        %v4997 = vpop.f32.mrb[0].mxu0
        %v4998 = vadd.f32 %v732, %v4997
        %v4999 = vpop.f32.mrb[0].mxu0
        %v5000 = vadd.f32 %v736, %v4999
        %5001 = vmatprep.mubr.bf16.mxu0 %v962
        %5002 = vmatmul.mubr.bf16.gmra.mrb[0].mxu0 %v961
        %v5003 = vpop.f32.mrb[0].mxu0
        %v5004 = vadd.f32 %v732, %v5003
        %v5005 = vpop.f32.mrb[0].mxu0
        %v5006 = vadd.f32 %v736, %v5005
        %v5007 = vpop.f32.mrb[0].mxu0
        %v5008 = vadd.f32 %v732, %v5007
        %v5009 = vpop.f32.mrb[0].mxu0
        %v5010 = vadd.f32 %v736, %v5009
        %5011 = vmatprep.mubr.bf16.mxu0 %v966
        %5012 = vmatmul.mubr.bf16.gmra.mrb[0].mxu0 %v965
        %v5013 = vpop.f32.mrb[0].mxu0
        %v5014 = vadd.f32 %v732, %v5013
        %v5015 = vpop.f32.mrb[0].mxu0
        %v5016 = vadd.f32 %v736, %v5015
        %v5017 = vpop.f32.mrb[0].mxu0
        %v5018 = vadd.f32 %v732, %v5017
        %v5019 = vpop.f32.mrb[0].mxu0
        %v5020 = vadd.f32 %v736, %v5019
        %5021 = vmatprep.mubr.bf16.mxu0 %v970
        %5022 = vmatmul.mubr.bf16.gmra.mrb[0].mxu0 %v969
        %v5023 = vpop.f32.mrb[0].mxu0
        %v5024 = vadd.f32 %v732, %v5023
        %v5025 = vpop.f32.mrb[0].mxu0
        %v5026 = vadd.f32 %v736, %v5025
        %v5027 = vpop.f32.mrb[0].mxu0
        %v5028 = vadd.f32 %v732, %v5027
        %v5029 = vpop.f32.mrb[0].mxu0
        %v5030 = vadd.f32 %v736, %v5029
        %5031 = vmatprep.mubr.bf16.mxu0 %v974
        %5032 = vmatmul.mubr.bf16.gmra.mrb[0].mxu0 %v973
        %v5033 = vpop.f32.mrb[0].mxu0
        %v5034 = vadd.f32 %v732, %v5033
        %v5035 = vpop.f32.mrb[0].mxu0
        %v5036 = vadd.f32 %v736, %v5035
        %v5037 = vpop.f32.mrb[0].mxu0
        %v5038 = vadd.f32 %v732, %v5037
        %v5039 = vpop.f32.mrb[0].mxu0
        %v5040 = vadd.f32 %v736, %v5039
        %5041 = vmatprep.mubr.bf16.mxu0 %v978
        %5042 = vmatmul.mubr.bf16.gmra.mrb[0].mxu0 %v977
        %v5043 = vpop.f32.mrb[0].mxu0
        %v5044 = vadd.f32 %v732, %v5043
        %v5045 = vpop.f32.mrb[0].mxu0
        %v5046 = vadd.f32 %v736, %v5045
        %v5047 = vpop.f32.mrb[0].mxu0
        %v5048 = vadd.f32 %v732, %v5047
        %v5049 = vpop.f32.mrb[0].mxu0
        %v5050 = vadd.f32 %v736, %v5049
        %5051 = vmatprep.mubr.bf16.mxu0 %v982
        %5052 = vmatmul.mubr.bf16.gmra.mrb[0].mxu0 %v981
        %v5053 = vpop.f32.mrb[0].mxu0
        %v5054 = vadd.f32 %v732, %v5053
        %v5055 = vpop.f32.mrb[0].mxu0
        %v5056 = vadd.f32 %v736, %v5055
        %v5057 = vpop.f32.mrb[0].mxu0
        %v5058 = vadd.f32 %v732, %v5057
        %v5059 = vpop.f32.mrb[0].mxu0
        %v5060 = vadd.f32 %v736, %v5059
        %5061 = vmatprep.mubr.bf16.mxu0 %v986
        %5062 = vmatmul.mubr.bf16.gmra.mrb[0].mxu0 %v985
        %v5063 = vpop.f32.mrb[0].mxu0
        %v5064 = vadd.f32 %v732, %v5063
        %v5065 = vpop.f32.mrb[0].mxu0
        %v5066 = vadd.f32 %v736, %v5065
        %v5067 = vpop.f32.mrb[0].mxu0
        %v5068 = vadd.f32 %v732, %v5067
        %v5069 = vpop.f32.mrb[0].mxu0
        %v5070 = vadd.f32 %v736, %v5069
        %5071 = vmatprep.mubr.bf16.mxu0 %v990
        %5072 = vmatmul.mubr.bf16.gmra.mrb[0].mxu0 %v989
        %v5073 = vpop.f32.mrb[0].mxu0
        %v5074 = vadd.f32 %v732, %v5073
        %v5075 = vpop.f32.mrb[0].mxu0
        %v5076 = vadd.f32 %v736, %v5075
        %v5077 = vpop.f32.mrb[0].mxu0
        %v5078 = vadd.f32 %v732, %v5077
        %v5079 = vpop.f32.mrb[0].mxu0
        %v5080 = vadd.f32 %v736, %v5079
        %5081 = vmatprep.mubr.bf16.mxu0 %v994
        %5082 = vmatmul.mubr.bf16.gmra.mrb[0].mxu0 %v993
        %v5083 = vpop.f32.mrb[0].mxu0
        %v5084 = vadd.f32 %v732, %v5083
        %v5085 = vpop.f32.mrb[0].mxu0
        %v5086 = vadd.f32 %v736, %v5085
        %v5087 = vpop.f32.mrb[0].mxu0
        %v5088 = vadd.f32 %v732, %v5087
        %v5089 = vpop.f32.mrb[0].mxu0
        %v5090 = vadd.f32 %v736, %v5089
        %5091 = vmatprep.mubr.bf16.mxu0 %v998
        %5092 = vmatmul.mubr.bf16.gmra.mrb[0].mxu0 %v997
        %v5093 = vpop.f32.mrb[0].mxu0
        %v5094 = vadd.f32 %v732, %v5093
        %v5095 = vpop.f32.mrb[0].mxu0
        %v5096 = vadd.f32 %v736, %v5095
        %v5097 = vpop.f32.mrb[0].mxu0
        %v5098 = vadd.f32 %v732, %v5097
        %v5099 = vpop.f32.mrb[0].mxu0
        %v5100 = vadd.f32 %v736, %v5099
        %5101 = vmatprep.mubr.bf16.mxu0 %v1002
        %5102 = vmatmul.mubr.bf16.gmra.mrb[0].mxu0 %v1001
        %v5103 = vpop.f32.mrb[0].mxu0
        %v5104 = vadd.f32 %v732, %v5103
        %v5105 = vpop.f32.mrb[0].mxu0
        %v5106 = vadd.f32 %v736, %v5105
        %v5107 = vpop.f32.mrb[0].mxu0
        %v5108 = vadd.f32 %v732, %v5107
        %v5109 = vpop.f32.mrb[0].mxu0
        %v5110 = vadd.f32 %v736, %v5109
        %5111 = vdwg.mxu0
        %5112 = vmatprep.subr.bf16.mxu0 %v2424
        %5113 = vmatpush1.bf16.msra.mxu0 %v2423
        %5114 = vmatprep.subr.bf16.mxu0 %v2436
        %5115 = vmatpush1.bf16.msra.mxu0 %v2435
        %5116 = vmatprep.subr.bf16.mxu0 %v2448
        %5117 = vmatpush1.bf16.msra.mxu0 %v2447
        %5118 = vmatprep.subr.bf16.mxu0 %v2460
        %5119 = vmatpush1.bf16.msra.mxu0 %v2459
        %5120 = vmatprep.subr.bf16.mxu0 %v2472
        %5121 = vmatpush1.bf16.msra.mxu0 %v2471
        %5122 = vmatprep.subr.bf16.mxu0 %v2484
        %5123 = vmatpush1.bf16.msra.mxu0 %v2483
        %5124 = vmatprep.subr.bf16.mxu0 %v2496
        %5125 = vmatpush1.bf16.msra.mxu0 %v2495
        %5126 = vmatprep.subr.bf16.mxu0 %v2508
        %5127 = vmatpush1.bf16.msra.mxu0 %v2507
        %5128 = vmatprep.subr.bf16.mxu0 %v2520
        %5129 = vmatpush1.bf16.msra.mxu0 %v2519
        %5130 = vmatprep.subr.bf16.mxu0 %v2532
        %5131 = vmatpush1.bf16.msra.mxu0 %v2531
        %5132 = vmatprep.subr.bf16.mxu0 %v2544
        %5133 = vmatpush1.bf16.msra.mxu0 %v2543
        %5134 = vmatprep.subr.bf16.mxu0 %v2556
        %5135 = vmatpush1.bf16.msra.mxu0 %v2555
        %5136 = vmatprep.subr.bf16.mxu0 %v2568
        %5137 = vmatpush1.bf16.msra.mxu0 %v2567
        %5138 = vmatprep.subr.bf16.mxu0 %v2580
        %5139 = vmatpush1.bf16.msra.mxu0 %v2579
        %5140 = vmatprep.subr.bf16.mxu0 %v2592
        %5141 = vmatpush1.bf16.msra.mxu0 %v2591
        %5142 = vmatprep.subr.bf16.mxu0 %v2604
        %5143 = vmatpush1.bf16.msra.mxu0 %v2603
        %5144 = vmatprep.mubr.bf16.mxu0 %v944
        %5145 = vmatmul.mubr.bf16.gmra.mrb[0].mxu0 %v943
        %v5146 = vpop.f32.mrb[0].mxu0
        %v5147 = vadd.f32 %v4954, %v5146
        %v5148 = vpop.f32.mrb[0].mxu0
        %v5149 = vadd.f32 %v4956, %v5148
        %v5150 = vpop.f32.mrb[0].mxu0
        %v5151 = vadd.f32 %v4958, %v5150
        %v5152 = vpop.f32.mrb[0].mxu0
        %v5153 = vadd.f32 %v4960, %v5152
        %5154 = vmatprep.mubr.bf16.mxu0 %v948
        %5155 = vmatmul.mubr.bf16.gmra.mrb[0].mxu0 %v947
        %v5156 = vpop.f32.mrb[0].mxu0
        %v5157 = vadd.f32 %v4964, %v5156
        %v5158 = vpop.f32.mrb[0].mxu0
        %v5159 = vadd.f32 %v4966, %v5158
        %v5160 = vpop.f32.mrb[0].mxu0
        %v5161 = vadd.f32 %v4968, %v5160
        %v5162 = vpop.f32.mrb[0].mxu0
        %v5163 = vadd.f32 %v4970, %v5162
        %5164 = vmatprep.mubr.bf16.mxu0 %v952
        %5165 = vmatmul.mubr.bf16.gmra.mrb[0].mxu0 %v951
        %v5166 = vpop.f32.mrb[0].mxu0
        %v5167 = vadd.f32 %v4974, %v5166
        %v5168 = vpop.f32.mrb[0].mxu0
        %v5169 = vadd.f32 %v4976, %v5168
        %v5170 = vpop.f32.mrb[0].mxu0
        %v5171 = vadd.f32 %v4978, %v5170
        %v5172 = vpop.f32.mrb[0].mxu0
        %v5173 = vadd.f32 %v4980, %v5172
        %5174 = vmatprep.mubr.bf16.mxu0 %v956
        %5175 = vmatmul.mubr.bf16.gmra.mrb[0].mxu0 %v955
        %v5176 = vpop.f32.mrb[0].mxu0
        %v5177 = vadd.f32 %v4984, %v5176
        %v5178 = vpop.f32.mrb[0].mxu0
        %v5179 = vadd.f32 %v4986, %v5178
        %v5180 = vpop.f32.mrb[0].mxu0
        %v5181 = vadd.f32 %v4988, %v5180
        %v5182 = vpop.f32.mrb[0].mxu0
        %v5183 = vadd.f32 %v4990, %v5182
        %5184 = vmatprep.mubr.bf16.mxu0 %v960
        %5185 = vmatmul.mubr.bf16.gmra.mrb[0].mxu0 %v959
        %v5186 = vpop.f32.mrb[0].mxu0
        %v5187 = vadd.f32 %v4994, %v5186
        %v5188 = vpop.f32.mrb[0].mxu0
        %v5189 = vadd.f32 %v4996, %v5188
        %v5190 = vpop.f32.mrb[0].mxu0
        %v5191 = vadd.f32 %v4998, %v5190
        %v5192 = vpop.f32.mrb[0].mxu0
        %v5193 = vadd.f32 %v5000, %v5192
        %5194 = vmatprep.mubr.bf16.mxu0 %v964
        %5195 = vmatmul.mubr.bf16.gmra.mrb[0].mxu0 %v963
        %v5196 = vpop.f32.mrb[0].mxu0
        %v5197 = vadd.f32 %v5004, %v5196
        %v5198 = vpop.f32.mrb[0].mxu0
        %v5199 = vadd.f32 %v5006, %v5198
        %v5200 = vpop.f32.mrb[0].mxu0
        %v5201 = vadd.f32 %v5008, %v5200
        %v5202 = vpop.f32.mrb[0].mxu0
        %v5203 = vadd.f32 %v5010, %v5202
        %5204 = vmatprep.mubr.bf16.mxu0 %v968
        %5205 = vmatmul.mubr.bf16.gmra.mrb[0].mxu0 %v967
        %v5206 = vpop.f32.mrb[0].mxu0
        %v5207 = vadd.f32 %v5014, %v5206
        %v5208 = vpop.f32.mrb[0].mxu0
        %v5209 = vadd.f32 %v5016, %v5208
        %v5210 = vpop.f32.mrb[0].mxu0
        %v5211 = vadd.f32 %v5018, %v5210
        %v5212 = vpop.f32.mrb[0].mxu0
        %v5213 = vadd.f32 %v5020, %v5212
        %5214 = vmatprep.mubr.bf16.mxu0 %v972
        %5215 = vmatmul.mubr.bf16.gmra.mrb[0].mxu0 %v971
        %v5216 = vpop.f32.mrb[0].mxu0
        %v5217 = vadd.f32 %v5024, %v5216
        %v5218 = vpop.f32.mrb[0].mxu0
        %v5219 = vadd.f32 %v5026, %v5218
        %v5220 = vpop.f32.mrb[0].mxu0
        %v5221 = vadd.f32 %v5028, %v5220
        %v5222 = vpop.f32.mrb[0].mxu0
        %v5223 = vadd.f32 %v5030, %v5222
        %5224 = vmatprep.mubr.bf16.mxu0 %v976
        %5225 = vmatmul.mubr.bf16.gmra.mrb[0].mxu0 %v975
        %v5226 = vpop.f32.mrb[0].mxu0
        %v5227 = vadd.f32 %v5034, %v5226
        %v5228 = vpop.f32.mrb[0].mxu0
        %v5229 = vadd.f32 %v5036, %v5228
        %v5230 = vpop.f32.mrb[0].mxu0
        %v5231 = vadd.f32 %v5038, %v5230
        %v5232 = vpop.f32.mrb[0].mxu0
        %v5233 = vadd.f32 %v5040, %v5232
        %5234 = vmatprep.mubr.bf16.mxu0 %v980
        %5235 = vmatmul.mubr.bf16.gmra.mrb[0].mxu0 %v979
        %v5236 = vpop.f32.mrb[0].mxu0
        %v5237 = vadd.f32 %v5044, %v5236
        %v5238 = vpop.f32.mrb[0].mxu0
        %v5239 = vadd.f32 %v5046, %v5238
        %v5240 = vpop.f32.mrb[0].mxu0
        %v5241 = vadd.f32 %v5048, %v5240
        %v5242 = vpop.f32.mrb[0].mxu0
        %v5243 = vadd.f32 %v5050, %v5242
        %5244 = vmatprep.mubr.bf16.mxu0 %v984
        %5245 = vmatmul.mubr.bf16.gmra.mrb[0].mxu0 %v983
        %v5246 = vpop.f32.mrb[0].mxu0
        %v5247 = vadd.f32 %v5054, %v5246
        %v5248 = vpop.f32.mrb[0].mxu0
        %v5249 = vadd.f32 %v5056, %v5248
        %v5250 = vpop.f32.mrb[0].mxu0
        %v5251 = vadd.f32 %v5058, %v5250
        %v5252 = vpop.f32.mrb[0].mxu0
        %v5253 = vadd.f32 %v5060, %v5252
        %5254 = vmatprep.mubr.bf16.mxu0 %v988
        %5255 = vmatmul.mubr.bf16.gmra.mrb[0].mxu0 %v987
        %v5256 = vpop.f32.mrb[0].mxu0
        %v5257 = vadd.f32 %v5064, %v5256
        %v5258 = vpop.f32.mrb[0].mxu0
        %v5259 = vadd.f32 %v5066, %v5258
        %v5260 = vpop.f32.mrb[0].mxu0
        %v5261 = vadd.f32 %v5068, %v5260
        %v5262 = vpop.f32.mrb[0].mxu0
        %v5263 = vadd.f32 %v5070, %v5262
        %5264 = vmatprep.mubr.bf16.mxu0 %v992
        %5265 = vmatmul.mubr.bf16.gmra.mrb[0].mxu0 %v991
        %v5266 = vpop.f32.mrb[0].mxu0
        %v5267 = vadd.f32 %v5074, %v5266
        %v5268 = vpop.f32.mrb[0].mxu0
        %v5269 = vadd.f32 %v5076, %v5268
        %v5270 = vpop.f32.mrb[0].mxu0
        %v5271 = vadd.f32 %v5078, %v5270
        %v5272 = vpop.f32.mrb[0].mxu0
        %v5273 = vadd.f32 %v5080, %v5272
        %5274 = vmatprep.mubr.bf16.mxu0 %v996
        %5275 = vmatmul.mubr.bf16.gmra.mrb[0].mxu0 %v995
        %v5276 = vpop.f32.mrb[0].mxu0
        %v5277 = vadd.f32 %v5084, %v5276
        %v5278 = vpop.f32.mrb[0].mxu0
        %v5279 = vadd.f32 %v5086, %v5278
        %v5280 = vpop.f32.mrb[0].mxu0
        %v5281 = vadd.f32 %v5088, %v5280
        %v5282 = vpop.f32.mrb[0].mxu0
        %v5283 = vadd.f32 %v5090, %v5282
        %5284 = vmatprep.mubr.bf16.mxu0 %v1000
        %5285 = vmatmul.mubr.bf16.gmra.mrb[0].mxu0 %v999
        %v5286 = vpop.f32.mrb[0].mxu0
        %v5287 = vadd.f32 %v5094, %v5286
        %v5288 = vpop.f32.mrb[0].mxu0
        %v5289 = vadd.f32 %v5096, %v5288
        %v5290 = vpop.f32.mrb[0].mxu0
        %v5291 = vadd.f32 %v5098, %v5290
        %v5292 = vpop.f32.mrb[0].mxu0
        %v5293 = vadd.f32 %v5100, %v5292
        %5294 = vmatprep.mubr.bf16.mxu0 %v1004
        %5295 = vmatmul.mubr.bf16.gmra.mrb[0].mxu0 %v1003
        %v5296 = vpop.f32.mrb[0].mxu0
        %v5297 = vadd.f32 %v5104, %v5296
        %v5298 = vpop.f32.mrb[0].mxu0
        %v5299 = vadd.f32 %v5106, %v5298
        %v5300 = vpop.f32.mrb[0].mxu0
        %v5301 = vadd.f32 %v5108, %v5300
        %v5302 = vpop.f32.mrb[0].mxu0
        %v5303 = vadd.f32 %v5110, %v5302
        %5304 = vdwg.mxu0
        %v5305 = vpack.c.bf16 %v3221, %v3217
        %v5306 = vpack.c.bf16 %v3223, %v3219
        %v5307 = vpack.c.bf16 %v3607, %v3603
        %v5308 = vpack.c.bf16 %v3609, %v3605
        %v5309 = vpack.c.bf16 %v3993, %v3989
        %v5310 = vpack.c.bf16 %v3995, %v3991
        %v5311 = vpack.c.bf16 %v4379, %v4375
        %v5312 = vpack.c.bf16 %v4381, %v4377
        %v5313 = vpack.c.bf16 %v4765, %v4761
        %v5314 = vpack.c.bf16 %v4767, %v4763
        %v5315 = vpack.c.bf16 %v5151, %v5147
        %v5316 = vpack.c.bf16 %v5153, %v5149
        %v5317 = vpack.c.bf16 %v3231, %v3227
        %v5318 = vpack.c.bf16 %v3233, %v3229
        %v5319 = vpack.c.bf16 %v3617, %v3613
        %v5320 = vpack.c.bf16 %v3619, %v3615
        %v5321 = vpack.c.bf16 %v4003, %v3999
        %v5322 = vpack.c.bf16 %v4005, %v4001
        %v5323 = vpack.c.bf16 %v4389, %v4385
        %v5324 = vpack.c.bf16 %v4391, %v4387
        %v5325 = vpack.c.bf16 %v4775, %v4771
        %v5326 = vpack.c.bf16 %v4777, %v4773
        %v5327 = vpack.c.bf16 %v5161, %v5157
        %v5328 = vpack.c.bf16 %v5163, %v5159
        %v5329 = vpack.c.bf16 %v3241, %v3237
        %v5330 = vpack.c.bf16 %v3243, %v3239
        %v5331 = vpack.c.bf16 %v3627, %v3623
        %v5332 = vpack.c.bf16 %v3629, %v3625
        %v5333 = vpack.c.bf16 %v4013, %v4009
        %v5334 = vpack.c.bf16 %v4015, %v4011
        %v5335 = vpack.c.bf16 %v4399, %v4395
        %v5336 = vpack.c.bf16 %v4401, %v4397
        %v5337 = vpack.c.bf16 %v4785, %v4781
        %v5338 = vpack.c.bf16 %v4787, %v4783
        %v5339 = vpack.c.bf16 %v5171, %v5167
        %v5340 = vpack.c.bf16 %v5173, %v5169
        %v5341 = vpack.c.bf16 %v3251, %v3247
        %v5342 = vpack.c.bf16 %v3253, %v3249
        %v5343 = vpack.c.bf16 %v3637, %v3633
        %v5344 = vpack.c.bf16 %v3639, %v3635
        %v5345 = vpack.c.bf16 %v4023, %v4019
        %v5346 = vpack.c.bf16 %v4025, %v4021
        %v5347 = vpack.c.bf16 %v4409, %v4405
        %v5348 = vpack.c.bf16 %v4411, %v4407
        %v5349 = vpack.c.bf16 %v4795, %v4791
        %v5350 = vpack.c.bf16 %v4797, %v4793
        %v5351 = vpack.c.bf16 %v5181, %v5177
        %v5352 = vpack.c.bf16 %v5183, %v5179
        %v5353 = vpack.c.bf16 %v3261, %v3257
        %v5354 = vpack.c.bf16 %v3263, %v3259
        %v5355 = vpack.c.bf16 %v3647, %v3643
        %v5356 = vpack.c.bf16 %v3649, %v3645
        %v5357 = vpack.c.bf16 %v4033, %v4029
        %v5358 = vpack.c.bf16 %v4035, %v4031
        %v5359 = vpack.c.bf16 %v4419, %v4415
        %v5360 = vpack.c.bf16 %v4421, %v4417
        %v5361 = vpack.c.bf16 %v4805, %v4801
        %v5362 = vpack.c.bf16 %v4807, %v4803
        %v5363 = vpack.c.bf16 %v5191, %v5187
        %v5364 = vpack.c.bf16 %v5193, %v5189
        %v5365 = vpack.c.bf16 %v3271, %v3267
        %v5366 = vpack.c.bf16 %v3273, %v3269
        %v5367 = vpack.c.bf16 %v3657, %v3653
        %v5368 = vpack.c.bf16 %v3659, %v3655
        %v5369 = vpack.c.bf16 %v4043, %v4039
        %v5370 = vpack.c.bf16 %v4045, %v4041
        %v5371 = vpack.c.bf16 %v4429, %v4425
        %v5372 = vpack.c.bf16 %v4431, %v4427
        %v5373 = vpack.c.bf16 %v4815, %v4811
        %v5374 = vpack.c.bf16 %v4817, %v4813
        %v5375 = vpack.c.bf16 %v5201, %v5197
        %v5376 = vpack.c.bf16 %v5203, %v5199
        %v5377 = vpack.c.bf16 %v3281, %v3277
        %v5378 = vpack.c.bf16 %v3283, %v3279
        %v5379 = vpack.c.bf16 %v3667, %v3663
        %v5380 = vpack.c.bf16 %v3669, %v3665
        %v5381 = vpack.c.bf16 %v4053, %v4049
        %v5382 = vpack.c.bf16 %v4055, %v4051
        %v5383 = vpack.c.bf16 %v4439, %v4435
        %v5384 = vpack.c.bf16 %v4441, %v4437
        %v5385 = vpack.c.bf16 %v4825, %v4821
        %v5386 = vpack.c.bf16 %v4827, %v4823
        %v5387 = vpack.c.bf16 %v5211, %v5207
        %v5388 = vpack.c.bf16 %v5213, %v5209
        %v5389 = vpack.c.bf16 %v3291, %v3287
        %v5390 = vpack.c.bf16 %v3293, %v3289
        %v5391 = vpack.c.bf16 %v3677, %v3673
        %v5392 = vpack.c.bf16 %v3679, %v3675
        %v5393 = vpack.c.bf16 %v4063, %v4059
        %v5394 = vpack.c.bf16 %v4065, %v4061
        %v5395 = vpack.c.bf16 %v4449, %v4445
        %v5396 = vpack.c.bf16 %v4451, %v4447
        %v5397 = vpack.c.bf16 %v4835, %v4831
        %v5398 = vpack.c.bf16 %v4837, %v4833
        %v5399 = vpack.c.bf16 %v5221, %v5217
        %v5400 = vpack.c.bf16 %v5223, %v5219
        %v5401 = vpack.c.bf16 %v3301, %v3297
        %v5402 = vpack.c.bf16 %v3303, %v3299
        %v5403 = vpack.c.bf16 %v3687, %v3683
        %v5404 = vpack.c.bf16 %v3689, %v3685
        %v5405 = vpack.c.bf16 %v4073, %v4069
        %v5406 = vpack.c.bf16 %v4075, %v4071
        %v5407 = vpack.c.bf16 %v4459, %v4455
        %v5408 = vpack.c.bf16 %v4461, %v4457
        %v5409 = vpack.c.bf16 %v4845, %v4841
        %v5410 = vpack.c.bf16 %v4847, %v4843
        %v5411 = vpack.c.bf16 %v5231, %v5227
        %v5412 = vpack.c.bf16 %v5233, %v5229
        %v5413 = vpack.c.bf16 %v3311, %v3307
        %v5414 = vpack.c.bf16 %v3313, %v3309
        %v5415 = vpack.c.bf16 %v3697, %v3693
        %v5416 = vpack.c.bf16 %v3699, %v3695
        %v5417 = vpack.c.bf16 %v4083, %v4079
        %v5418 = vpack.c.bf16 %v4085, %v4081
        %v5419 = vpack.c.bf16 %v4469, %v4465
        %v5420 = vpack.c.bf16 %v4471, %v4467
        %v5421 = vpack.c.bf16 %v4855, %v4851
        %v5422 = vpack.c.bf16 %v4857, %v4853
        %v5423 = vpack.c.bf16 %v5241, %v5237
        %v5424 = vpack.c.bf16 %v5243, %v5239
        %v5425 = vpack.c.bf16 %v3321, %v3317
        %v5426 = vpack.c.bf16 %v3323, %v3319
        %v5427 = vpack.c.bf16 %v3707, %v3703
        %v5428 = vpack.c.bf16 %v3709, %v3705
        %v5429 = vpack.c.bf16 %v4093, %v4089
        %v5430 = vpack.c.bf16 %v4095, %v4091
        %v5431 = vpack.c.bf16 %v4479, %v4475
        %v5432 = vpack.c.bf16 %v4481, %v4477
        %v5433 = vpack.c.bf16 %v4865, %v4861
        %v5434 = vpack.c.bf16 %v4867, %v4863
        %v5435 = vpack.c.bf16 %v5251, %v5247
        %v5436 = vpack.c.bf16 %v5253, %v5249
        %v5437 = vpack.c.bf16 %v3331, %v3327
        %v5438 = vpack.c.bf16 %v3333, %v3329
        %v5439 = vpack.c.bf16 %v3717, %v3713
        %v5440 = vpack.c.bf16 %v3719, %v3715
        %v5441 = vpack.c.bf16 %v4103, %v4099
        %v5442 = vpack.c.bf16 %v4105, %v4101
        %v5443 = vpack.c.bf16 %v4489, %v4485
        %v5444 = vpack.c.bf16 %v4491, %v4487
        %v5445 = vpack.c.bf16 %v4875, %v4871
        %v5446 = vpack.c.bf16 %v4877, %v4873
        %v5447 = vpack.c.bf16 %v5261, %v5257
        %v5448 = vpack.c.bf16 %v5263, %v5259
        %v5449 = vpack.c.bf16 %v3341, %v3337
        %v5450 = vpack.c.bf16 %v3343, %v3339
        %v5451 = vpack.c.bf16 %v3727, %v3723
        %v5452 = vpack.c.bf16 %v3729, %v3725
        %v5453 = vpack.c.bf16 %v4113, %v4109
        %v5454 = vpack.c.bf16 %v4115, %v4111
        %v5455 = vpack.c.bf16 %v4499, %v4495
        %v5456 = vpack.c.bf16 %v4501, %v4497
        %v5457 = vpack.c.bf16 %v4885, %v4881
        %v5458 = vpack.c.bf16 %v4887, %v4883
        %v5459 = vpack.c.bf16 %v5271, %v5267
        %v5460 = vpack.c.bf16 %v5273, %v5269
        %v5461 = vpack.c.bf16 %v3351, %v3347
        %v5462 = vpack.c.bf16 %v3353, %v3349
        %v5463 = vpack.c.bf16 %v3737, %v3733
        %v5464 = vpack.c.bf16 %v3739, %v3735
        %v5465 = vpack.c.bf16 %v4123, %v4119
        %v5466 = vpack.c.bf16 %v4125, %v4121
        %v5467 = vpack.c.bf16 %v4509, %v4505
        %v5468 = vpack.c.bf16 %v4511, %v4507
        %v5469 = vpack.c.bf16 %v4895, %v4891
        %v5470 = vpack.c.bf16 %v4897, %v4893
        %v5471 = vpack.c.bf16 %v5281, %v5277
        %v5472 = vpack.c.bf16 %v5283, %v5279
        %v5473 = vpack.c.bf16 %v3361, %v3357
        %v5474 = vpack.c.bf16 %v3363, %v3359
        %v5475 = vpack.c.bf16 %v3747, %v3743
        %v5476 = vpack.c.bf16 %v3749, %v3745
        %v5477 = vpack.c.bf16 %v4133, %v4129
        %v5478 = vpack.c.bf16 %v4135, %v4131
        %v5479 = vpack.c.bf16 %v4519, %v4515
        %v5480 = vpack.c.bf16 %v4521, %v4517
        %v5481 = vpack.c.bf16 %v4905, %v4901
        %v5482 = vpack.c.bf16 %v4907, %v4903
        %v5483 = vpack.c.bf16 %v5291, %v5287
        %v5484 = vpack.c.bf16 %v5293, %v5289
        %v5485 = vpack.c.bf16 %v3371, %v3367
        %v5486 = vpack.c.bf16 %v3373, %v3369
        %v5487 = vpack.c.bf16 %v3757, %v3753
        %v5488 = vpack.c.bf16 %v3759, %v3755
        %v5489 = vpack.c.bf16 %v4143, %v4139
        %v5490 = vpack.c.bf16 %v4145, %v4141
        %v5491 = vpack.c.bf16 %v4529, %v4525
        %v5492 = vpack.c.bf16 %v4531, %v4527
        %v5493 = vpack.c.bf16 %v4915, %v4911
        %v5494 = vpack.c.bf16 %v4917, %v4913
        %v5495 = vpack.c.bf16 %v5301, %v5297
        %v5496 = vpack.c.bf16 %v5303, %v5299
        %v5689 = vunpack.c.l.b16 %v5305
        %v5690 = vunpack.c.l.b16 %v5306
        %v5691 = vunpack.c.l.b16 %v5307
        %v5692 = vunpack.c.l.b16 %v5308
        %v5693 = vunpack.c.l.b16 %v5309
        %v5694 = vunpack.c.l.b16 %v5310
        %v5695 = vunpack.c.l.b16 %v5311
        %v5696 = vunpack.c.l.b16 %v5312
        %v5697 = vunpack.c.l.b16 %v5313
        %v5698 = vunpack.c.l.b16 %v5314
        %v5699 = vunpack.c.l.b16 %v5315
        %v5700 = vunpack.c.l.b16 %v5316
        %v5701 = vunpack.c.h.b16 %v5305
        %v5702 = vunpack.c.h.b16 %v5306
        %v5703 = vunpack.c.h.b16 %v5307
        %v5704 = vunpack.c.h.b16 %v5308
        %v5705 = vunpack.c.h.b16 %v5309
        %v5706 = vunpack.c.h.b16 %v5310
        %v5707 = vunpack.c.h.b16 %v5311
        %v5708 = vunpack.c.h.b16 %v5312
        %v5709 = vunpack.c.h.b16 %v5313
        %v5710 = vunpack.c.h.b16 %v5314
        %v5711 = vunpack.c.h.b16 %v5315
        %v5712 = vunpack.c.h.b16 %v5316
        %v5713 = vunpack.c.l.b16 %v5317
        %v5714 = vunpack.c.l.b16 %v5318
        %v5715 = vunpack.c.l.b16 %v5319
        %v5716 = vunpack.c.l.b16 %v5320
        %v5717 = vunpack.c.l.b16 %v5321
        %v5718 = vunpack.c.l.b16 %v5322
        %v5719 = vunpack.c.l.b16 %v5323
        %v5720 = vunpack.c.l.b16 %v5324
        %v5721 = vunpack.c.l.b16 %v5325
        %v5722 = vunpack.c.l.b16 %v5326
        %v5723 = vunpack.c.l.b16 %v5327
        %v5724 = vunpack.c.l.b16 %v5328
        %v5725 = vunpack.c.h.b16 %v5317
        %v5726 = vunpack.c.h.b16 %v5318
        %v5727 = vunpack.c.h.b16 %v5319
        %v5728 = vunpack.c.h.b16 %v5320
        %v5729 = vunpack.c.h.b16 %v5321
        %v5730 = vunpack.c.h.b16 %v5322
        %v5731 = vunpack.c.h.b16 %v5323
        %v5732 = vunpack.c.h.b16 %v5324
        %v5733 = vunpack.c.h.b16 %v5325
        %v5734 = vunpack.c.h.b16 %v5326
        %v5735 = vunpack.c.h.b16 %v5327
        %v5736 = vunpack.c.h.b16 %v5328
        %v5737 = vunpack.c.l.b16 %v5329
        %v5738 = vunpack.c.l.b16 %v5330
        %v5739 = vunpack.c.l.b16 %v5331
        %v5740 = vunpack.c.l.b16 %v5332
        %v5741 = vunpack.c.l.b16 %v5333
        %v5742 = vunpack.c.l.b16 %v5334
        %v5743 = vunpack.c.l.b16 %v5335
        %v5744 = vunpack.c.l.b16 %v5336
        %v5745 = vunpack.c.l.b16 %v5337
        %v5746 = vunpack.c.l.b16 %v5338
        %v5747 = vunpack.c.l.b16 %v5339
        %v5748 = vunpack.c.l.b16 %v5340
        %v5749 = vunpack.c.h.b16 %v5329
        %v5750 = vunpack.c.h.b16 %v5330
        %v5751 = vunpack.c.h.b16 %v5331
        %v5752 = vunpack.c.h.b16 %v5332
        %v5753 = vunpack.c.h.b16 %v5333
        %v5754 = vunpack.c.h.b16 %v5334
        %v5755 = vunpack.c.h.b16 %v5335
        %v5756 = vunpack.c.h.b16 %v5336
        %v5757 = vunpack.c.h.b16 %v5337
        %v5758 = vunpack.c.h.b16 %v5338
        %v5759 = vunpack.c.h.b16 %v5339
        %v5760 = vunpack.c.h.b16 %v5340
        %v5761 = vunpack.c.l.b16 %v5341
        %v5762 = vunpack.c.l.b16 %v5342
        %v5763 = vunpack.c.l.b16 %v5343
        %v5764 = vunpack.c.l.b16 %v5344
        %v5765 = vunpack.c.l.b16 %v5345
        %v5766 = vunpack.c.l.b16 %v5346
        %v5767 = vunpack.c.l.b16 %v5347
        %v5768 = vunpack.c.l.b16 %v5348
        %v5769 = vunpack.c.l.b16 %v5349
        %v5770 = vunpack.c.l.b16 %v5350
        %v5771 = vunpack.c.l.b16 %v5351
        %v5772 = vunpack.c.l.b16 %v5352
        %v5773 = vunpack.c.h.b16 %v5341
        %v5774 = vunpack.c.h.b16 %v5342
        %v5775 = vunpack.c.h.b16 %v5343
        %v5776 = vunpack.c.h.b16 %v5344
        %v5777 = vunpack.c.h.b16 %v5345
        %v5778 = vunpack.c.h.b16 %v5346
        %v5779 = vunpack.c.h.b16 %v5347
        %v5780 = vunpack.c.h.b16 %v5348
        %v5781 = vunpack.c.h.b16 %v5349
        %v5782 = vunpack.c.h.b16 %v5350
        %v5783 = vunpack.c.h.b16 %v5351
        %v5784 = vunpack.c.h.b16 %v5352
        %v5785 = vunpack.c.l.b16 %v5353
        %v5786 = vunpack.c.l.b16 %v5354
        %v5787 = vunpack.c.l.b16 %v5355
        %v5788 = vunpack.c.l.b16 %v5356
        %v5789 = vunpack.c.l.b16 %v5357
        %v5790 = vunpack.c.l.b16 %v5358
        %v5791 = vunpack.c.l.b16 %v5359
        %v5792 = vunpack.c.l.b16 %v5360
        %v5793 = vunpack.c.l.b16 %v5361
        %v5794 = vunpack.c.l.b16 %v5362
        %v5795 = vunpack.c.l.b16 %v5363
        %v5796 = vunpack.c.l.b16 %v5364
        %v5797 = vunpack.c.h.b16 %v5353
        %v5798 = vunpack.c.h.b16 %v5354
        %v5799 = vunpack.c.h.b16 %v5355
        %v5800 = vunpack.c.h.b16 %v5356
        %v5801 = vunpack.c.h.b16 %v5357
        %v5802 = vunpack.c.h.b16 %v5358
        %v5803 = vunpack.c.h.b16 %v5359
        %v5804 = vunpack.c.h.b16 %v5360
        %v5805 = vunpack.c.h.b16 %v5361
        %v5806 = vunpack.c.h.b16 %v5362
        %v5807 = vunpack.c.h.b16 %v5363
        %v5808 = vunpack.c.h.b16 %v5364
        %v5809 = vunpack.c.l.b16 %v5365
        %v5810 = vunpack.c.l.b16 %v5366
        %v5811 = vunpack.c.l.b16 %v5367
        %v5812 = vunpack.c.l.b16 %v5368
        %v5813 = vunpack.c.l.b16 %v5369
        %v5814 = vunpack.c.l.b16 %v5370
        %v5815 = vunpack.c.l.b16 %v5371
        %v5816 = vunpack.c.l.b16 %v5372
        %v5817 = vunpack.c.l.b16 %v5373
        %v5818 = vunpack.c.l.b16 %v5374
        %v5819 = vunpack.c.l.b16 %v5375
        %v5820 = vunpack.c.l.b16 %v5376
        %v5821 = vunpack.c.h.b16 %v5365
        %v5822 = vunpack.c.h.b16 %v5366
        %v5823 = vunpack.c.h.b16 %v5367
        %v5824 = vunpack.c.h.b16 %v5368
        %v5825 = vunpack.c.h.b16 %v5369
        %v5826 = vunpack.c.h.b16 %v5370
        %v5827 = vunpack.c.h.b16 %v5371
        %v5828 = vunpack.c.h.b16 %v5372
        %v5829 = vunpack.c.h.b16 %v5373
        %v5830 = vunpack.c.h.b16 %v5374
        %v5831 = vunpack.c.h.b16 %v5375
        %v5832 = vunpack.c.h.b16 %v5376
        %v5833 = vunpack.c.l.b16 %v5377
        %v5834 = vunpack.c.l.b16 %v5378
        %v5835 = vunpack.c.l.b16 %v5379
        %v5836 = vunpack.c.l.b16 %v5380
        %v5837 = vunpack.c.l.b16 %v5381
        %v5838 = vunpack.c.l.b16 %v5382
        %v5839 = vunpack.c.l.b16 %v5383
        %v5840 = vunpack.c.l.b16 %v5384
        %v5841 = vunpack.c.l.b16 %v5385
        %v5842 = vunpack.c.l.b16 %v5386
        %v5843 = vunpack.c.l.b16 %v5387
        %v5844 = vunpack.c.l.b16 %v5388
        %v5845 = vunpack.c.h.b16 %v5377
        %v5846 = vunpack.c.h.b16 %v5378
        %v5847 = vunpack.c.h.b16 %v5379
        %v5848 = vunpack.c.h.b16 %v5380
        %v5849 = vunpack.c.h.b16 %v5381
        %v5850 = vunpack.c.h.b16 %v5382
        %v5851 = vunpack.c.h.b16 %v5383
        %v5852 = vunpack.c.h.b16 %v5384
        %v5853 = vunpack.c.h.b16 %v5385
        %v5854 = vunpack.c.h.b16 %v5386
        %v5855 = vunpack.c.h.b16 %v5387
        %v5856 = vunpack.c.h.b16 %v5388
        %v5857 = vunpack.c.l.b16 %v5389
        %v5858 = vunpack.c.l.b16 %v5390
        %v5859 = vunpack.c.l.b16 %v5391
        %v5860 = vunpack.c.l.b16 %v5392
        %v5861 = vunpack.c.l.b16 %v5393
        %v5862 = vunpack.c.l.b16 %v5394
        %v5863 = vunpack.c.l.b16 %v5395
        %v5864 = vunpack.c.l.b16 %v5396
        %v5865 = vunpack.c.l.b16 %v5397
        %v5866 = vunpack.c.l.b16 %v5398
        %v5867 = vunpack.c.l.b16 %v5399
        %v5868 = vunpack.c.l.b16 %v5400
        %v5869 = vunpack.c.h.b16 %v5389
        %v5870 = vunpack.c.h.b16 %v5390
        %v5871 = vunpack.c.h.b16 %v5391
        %v5872 = vunpack.c.h.b16 %v5392
        %v5873 = vunpack.c.h.b16 %v5393
        %v5874 = vunpack.c.h.b16 %v5394
        %v5875 = vunpack.c.h.b16 %v5395
        %v5876 = vunpack.c.h.b16 %v5396
        %v5877 = vunpack.c.h.b16 %v5397
        %v5878 = vunpack.c.h.b16 %v5398
        %v5879 = vunpack.c.h.b16 %v5399
        %v5880 = vunpack.c.h.b16 %v5400
        %v5881 = vunpack.c.l.b16 %v5401
        %v5882 = vunpack.c.l.b16 %v5402
        %v5883 = vunpack.c.l.b16 %v5403
        %v5884 = vunpack.c.l.b16 %v5404
        %v5885 = vunpack.c.l.b16 %v5405
        %v5886 = vunpack.c.l.b16 %v5406
        %v5887 = vunpack.c.l.b16 %v5407
        %v5888 = vunpack.c.l.b16 %v5408
        %v5889 = vunpack.c.l.b16 %v5409
        %v5890 = vunpack.c.l.b16 %v5410
        %v5891 = vunpack.c.l.b16 %v5411
        %v5892 = vunpack.c.l.b16 %v5412
        %v5893 = vunpack.c.h.b16 %v5401
        %v5894 = vunpack.c.h.b16 %v5402
        %v5895 = vunpack.c.h.b16 %v5403
        %v5896 = vunpack.c.h.b16 %v5404
        %v5897 = vunpack.c.h.b16 %v5405
        %v5898 = vunpack.c.h.b16 %v5406
        %v5899 = vunpack.c.h.b16 %v5407
        %v5900 = vunpack.c.h.b16 %v5408
        %v5901 = vunpack.c.h.b16 %v5409
        %v5902 = vunpack.c.h.b16 %v5410
        %v5903 = vunpack.c.h.b16 %v5411
        %v5904 = vunpack.c.h.b16 %v5412
        %v5905 = vunpack.c.l.b16 %v5413
        %v5906 = vunpack.c.l.b16 %v5414
        %v5907 = vunpack.c.l.b16 %v5415
        %v5908 = vunpack.c.l.b16 %v5416
        %v5909 = vunpack.c.l.b16 %v5417
        %v5910 = vunpack.c.l.b16 %v5418
        %v5911 = vunpack.c.l.b16 %v5419
        %v5912 = vunpack.c.l.b16 %v5420
        %v5913 = vunpack.c.l.b16 %v5421
        %v5914 = vunpack.c.l.b16 %v5422
        %v5915 = vunpack.c.l.b16 %v5423
        %v5916 = vunpack.c.l.b16 %v5424
        %v5917 = vunpack.c.h.b16 %v5413
        %v5918 = vunpack.c.h.b16 %v5414
        %v5919 = vunpack.c.h.b16 %v5415
        %v5920 = vunpack.c.h.b16 %v5416
        %v5921 = vunpack.c.h.b16 %v5417
        %v5922 = vunpack.c.h.b16 %v5418
        %v5923 = vunpack.c.h.b16 %v5419
        %v5924 = vunpack.c.h.b16 %v5420
        %v5925 = vunpack.c.h.b16 %v5421
        %v5926 = vunpack.c.h.b16 %v5422
        %v5927 = vunpack.c.h.b16 %v5423
        %v5928 = vunpack.c.h.b16 %v5424
        %v5929 = vunpack.c.l.b16 %v5425
        %v5930 = vunpack.c.l.b16 %v5426
        %v5931 = vunpack.c.l.b16 %v5427
        %v5932 = vunpack.c.l.b16 %v5428
        %v5933 = vunpack.c.l.b16 %v5429
        %v5934 = vunpack.c.l.b16 %v5430
        %v5935 = vunpack.c.l.b16 %v5431
        %v5936 = vunpack.c.l.b16 %v5432
        %v5937 = vunpack.c.l.b16 %v5433
        %v5938 = vunpack.c.l.b16 %v5434
        %v5939 = vunpack.c.l.b16 %v5435
        %v5940 = vunpack.c.l.b16 %v5436
        %v5941 = vunpack.c.h.b16 %v5425
        %v5942 = vunpack.c.h.b16 %v5426
        %v5943 = vunpack.c.h.b16 %v5427
        %v5944 = vunpack.c.h.b16 %v5428
        %v5945 = vunpack.c.h.b16 %v5429
        %v5946 = vunpack.c.h.b16 %v5430
        %v5947 = vunpack.c.h.b16 %v5431
        %v5948 = vunpack.c.h.b16 %v5432
        %v5949 = vunpack.c.h.b16 %v5433
        %v5950 = vunpack.c.h.b16 %v5434
        %v5951 = vunpack.c.h.b16 %v5435
        %v5952 = vunpack.c.h.b16 %v5436
        %v5953 = vunpack.c.l.b16 %v5437
        %v5954 = vunpack.c.l.b16 %v5438
        %v5955 = vunpack.c.l.b16 %v5439
        %v5956 = vunpack.c.l.b16 %v5440
        %v5957 = vunpack.c.l.b16 %v5441
        %v5958 = vunpack.c.l.b16 %v5442
        %v5959 = vunpack.c.l.b16 %v5443
        %v5960 = vunpack.c.l.b16 %v5444
        %v5961 = vunpack.c.l.b16 %v5445
        %v5962 = vunpack.c.l.b16 %v5446
        %v5963 = vunpack.c.l.b16 %v5447
        %v5964 = vunpack.c.l.b16 %v5448
        %v5965 = vunpack.c.h.b16 %v5437
        %v5966 = vunpack.c.h.b16 %v5438
        %v5967 = vunpack.c.h.b16 %v5439
        %v5968 = vunpack.c.h.b16 %v5440
        %v5969 = vunpack.c.h.b16 %v5441
        %v5970 = vunpack.c.h.b16 %v5442
        %v5971 = vunpack.c.h.b16 %v5443
        %v5972 = vunpack.c.h.b16 %v5444
        %v5973 = vunpack.c.h.b16 %v5445
        %v5974 = vunpack.c.h.b16 %v5446
        %v5975 = vunpack.c.h.b16 %v5447
        %v5976 = vunpack.c.h.b16 %v5448
        %v5977 = vunpack.c.l.b16 %v5449
        %v5978 = vunpack.c.l.b16 %v5450
        %v5979 = vunpack.c.l.b16 %v5451
        %v5980 = vunpack.c.l.b16 %v5452
        %v5981 = vunpack.c.l.b16 %v5453
        %v5982 = vunpack.c.l.b16 %v5454
        %v5983 = vunpack.c.l.b16 %v5455
        %v5984 = vunpack.c.l.b16 %v5456
        %v5985 = vunpack.c.l.b16 %v5457
        %v5986 = vunpack.c.l.b16 %v5458
        %v5987 = vunpack.c.l.b16 %v5459
        %v5988 = vunpack.c.l.b16 %v5460
        %v5989 = vunpack.c.h.b16 %v5449
        %v5990 = vunpack.c.h.b16 %v5450
        %v5991 = vunpack.c.h.b16 %v5451
        %v5992 = vunpack.c.h.b16 %v5452
        %v5993 = vunpack.c.h.b16 %v5453
        %v5994 = vunpack.c.h.b16 %v5454
        %v5995 = vunpack.c.h.b16 %v5455
        %v5996 = vunpack.c.h.b16 %v5456
        %v5997 = vunpack.c.h.b16 %v5457
        %v5998 = vunpack.c.h.b16 %v5458
        %v5999 = vunpack.c.h.b16 %v5459
        %v6000 = vunpack.c.h.b16 %v5460
        %v6001 = vunpack.c.l.b16 %v5461
        %v6002 = vunpack.c.l.b16 %v5462
        %v6003 = vunpack.c.l.b16 %v5463
        %v6004 = vunpack.c.l.b16 %v5464
        %v6005 = vunpack.c.l.b16 %v5465
        %v6006 = vunpack.c.l.b16 %v5466
        %v6007 = vunpack.c.l.b16 %v5467
        %v6008 = vunpack.c.l.b16 %v5468
        %v6009 = vunpack.c.l.b16 %v5469
        %v6010 = vunpack.c.l.b16 %v5470
        %v6011 = vunpack.c.l.b16 %v5471
        %v6012 = vunpack.c.l.b16 %v5472
        %v6013 = vunpack.c.h.b16 %v5461
        %v6014 = vunpack.c.h.b16 %v5462
        %v6015 = vunpack.c.h.b16 %v5463
        %v6016 = vunpack.c.h.b16 %v5464
        %v6017 = vunpack.c.h.b16 %v5465
        %v6018 = vunpack.c.h.b16 %v5466
        %v6019 = vunpack.c.h.b16 %v5467
        %v6020 = vunpack.c.h.b16 %v5468
        %v6021 = vunpack.c.h.b16 %v5469
        %v6022 = vunpack.c.h.b16 %v5470
        %v6023 = vunpack.c.h.b16 %v5471
        %v6024 = vunpack.c.h.b16 %v5472
        %v6025 = vunpack.c.l.b16 %v5473
        %v6026 = vunpack.c.l.b16 %v5474
        %v6027 = vunpack.c.l.b16 %v5475
        %v6028 = vunpack.c.l.b16 %v5476
        %v6029 = vunpack.c.l.b16 %v5477
        %v6030 = vunpack.c.l.b16 %v5478
        %v6031 = vunpack.c.l.b16 %v5479
        %v6032 = vunpack.c.l.b16 %v5480
        %v6033 = vunpack.c.l.b16 %v5481
        %v6034 = vunpack.c.l.b16 %v5482
        %v6035 = vunpack.c.l.b16 %v5483
        %v6036 = vunpack.c.l.b16 %v5484
        %v6037 = vunpack.c.h.b16 %v5473
        %v6038 = vunpack.c.h.b16 %v5474
        %v6039 = vunpack.c.h.b16 %v5475
        %v6040 = vunpack.c.h.b16 %v5476
        %v6041 = vunpack.c.h.b16 %v5477
        %v6042 = vunpack.c.h.b16 %v5478
        %v6043 = vunpack.c.h.b16 %v5479
        %v6044 = vunpack.c.h.b16 %v5480
        %v6045 = vunpack.c.h.b16 %v5481
        %v6046 = vunpack.c.h.b16 %v5482
        %v6047 = vunpack.c.h.b16 %v5483
        %v6048 = vunpack.c.h.b16 %v5484
        %v6049 = vunpack.c.l.b16 %v5485
        %v6050 = vunpack.c.l.b16 %v5486
        %v6051 = vunpack.c.l.b16 %v5487
        %v6052 = vunpack.c.l.b16 %v5488
        %v6053 = vunpack.c.l.b16 %v5489
        %v6054 = vunpack.c.l.b16 %v5490
        %v6055 = vunpack.c.l.b16 %v5491
        %v6056 = vunpack.c.l.b16 %v5492
        %v6057 = vunpack.c.l.b16 %v5493
        %v6058 = vunpack.c.l.b16 %v5494
        %v6059 = vunpack.c.l.b16 %v5495
        %v6060 = vunpack.c.l.b16 %v5496
        %v6061 = vunpack.c.h.b16 %v5485
        %v6062 = vunpack.c.h.b16 %v5486
        %v6063 = vunpack.c.h.b16 %v5487
        %v6064 = vunpack.c.h.b16 %v5488
        %v6065 = vunpack.c.h.b16 %v5489
        %v6066 = vunpack.c.h.b16 %v5490
        %v6067 = vunpack.c.h.b16 %v5491
        %v6068 = vunpack.c.h.b16 %v5492
        %v6069 = vunpack.c.h.b16 %v5493
        %v6070 = vunpack.c.h.b16 %v5494
        %v6071 = vunpack.c.h.b16 %v5495
        %v6072 = vunpack.c.h.b16 %v5496
        %v6073 = vpack.c.b16 %v5690, %v5689
        %v6074 = vpack.c.b16 %v5692, %v5691
        %v6075 = vpack.c.b16 %v5694, %v5693
        %v6076 = vpack.c.b16 %v5696, %v5695
        %v6077 = vpack.c.b16 %v5698, %v5697
        %v6078 = vpack.c.b16 %v5700, %v5699
        %v6079 = vpack.c.b16 %v5702, %v5701
        %v6080 = vpack.c.b16 %v5704, %v5703
        %v6081 = vpack.c.b16 %v5706, %v5705
        %v6082 = vpack.c.b16 %v5708, %v5707
        %v6083 = vpack.c.b16 %v5710, %v5709
        %v6084 = vpack.c.b16 %v5712, %v5711
        %v6085 = vpack.c.b16 %v5714, %v5713
        %v6086 = vpack.c.b16 %v5716, %v5715
        %v6087 = vpack.c.b16 %v5718, %v5717
        %v6088 = vpack.c.b16 %v5720, %v5719
        %v6089 = vpack.c.b16 %v5722, %v5721
        %v6090 = vpack.c.b16 %v5724, %v5723
        %v6091 = vpack.c.b16 %v5726, %v5725
        %v6092 = vpack.c.b16 %v5728, %v5727
        %v6093 = vpack.c.b16 %v5730, %v5729
        %v6094 = vpack.c.b16 %v5732, %v5731
        %v6095 = vpack.c.b16 %v5734, %v5733
        %v6096 = vpack.c.b16 %v5736, %v5735
        %v6097 = vpack.c.b16 %v5738, %v5737
        %v6098 = vpack.c.b16 %v5740, %v5739
        %v6099 = vpack.c.b16 %v5742, %v5741
        %v6100 = vpack.c.b16 %v5744, %v5743
        %v6101 = vpack.c.b16 %v5746, %v5745
        %v6102 = vpack.c.b16 %v5748, %v5747
        %v6103 = vpack.c.b16 %v5750, %v5749
        %v6104 = vpack.c.b16 %v5752, %v5751
        %v6105 = vpack.c.b16 %v5754, %v5753
        %v6106 = vpack.c.b16 %v5756, %v5755
        %v6107 = vpack.c.b16 %v5758, %v5757
        %v6108 = vpack.c.b16 %v5760, %v5759
        %v6109 = vpack.c.b16 %v5762, %v5761
        %v6110 = vpack.c.b16 %v5764, %v5763
        %v6111 = vpack.c.b16 %v5766, %v5765
        %v6112 = vpack.c.b16 %v5768, %v5767
        %v6113 = vpack.c.b16 %v5770, %v5769
        %v6114 = vpack.c.b16 %v5772, %v5771
        %v6115 = vpack.c.b16 %v5774, %v5773
        %v6116 = vpack.c.b16 %v5776, %v5775
        %v6117 = vpack.c.b16 %v5778, %v5777
        %v6118 = vpack.c.b16 %v5780, %v5779
        %v6119 = vpack.c.b16 %v5782, %v5781
        %v6120 = vpack.c.b16 %v5784, %v5783
        %v6121 = vpack.c.b16 %v5786, %v5785
        %v6122 = vpack.c.b16 %v5788, %v5787
        %v6123 = vpack.c.b16 %v5790, %v5789
        %v6124 = vpack.c.b16 %v5792, %v5791
        %v6125 = vpack.c.b16 %v5794, %v5793
        %v6126 = vpack.c.b16 %v5796, %v5795
        %v6127 = vpack.c.b16 %v5798, %v5797
        %v6128 = vpack.c.b16 %v5800, %v5799
        %v6129 = vpack.c.b16 %v5802, %v5801
        %v6130 = vpack.c.b16 %v5804, %v5803
        %v6131 = vpack.c.b16 %v5806, %v5805
        %v6132 = vpack.c.b16 %v5808, %v5807
        %v6133 = vpack.c.b16 %v5810, %v5809
        %v6134 = vpack.c.b16 %v5812, %v5811
        %v6135 = vpack.c.b16 %v5814, %v5813
        %v6136 = vpack.c.b16 %v5816, %v5815
        %v6137 = vpack.c.b16 %v5818, %v5817
        %v6138 = vpack.c.b16 %v5820, %v5819
        %v6139 = vpack.c.b16 %v5822, %v5821
        %v6140 = vpack.c.b16 %v5824, %v5823
        %v6141 = vpack.c.b16 %v5826, %v5825
        %v6142 = vpack.c.b16 %v5828, %v5827
        %v6143 = vpack.c.b16 %v5830, %v5829
        %v6144 = vpack.c.b16 %v5832, %v5831
        %v6145 = vpack.c.b16 %v5834, %v5833
        %v6146 = vpack.c.b16 %v5836, %v5835
        %v6147 = vpack.c.b16 %v5838, %v5837
        %v6148 = vpack.c.b16 %v5840, %v5839
        %v6149 = vpack.c.b16 %v5842, %v5841
        %v6150 = vpack.c.b16 %v5844, %v5843
        %v6151 = vpack.c.b16 %v5846, %v5845
        %v6152 = vpack.c.b16 %v5848, %v5847
        %v6153 = vpack.c.b16 %v5850, %v5849
        %v6154 = vpack.c.b16 %v5852, %v5851
        %v6155 = vpack.c.b16 %v5854, %v5853
        %v6156 = vpack.c.b16 %v5856, %v5855
        %v6157 = vpack.c.b16 %v5858, %v5857
        %v6158 = vpack.c.b16 %v5860, %v5859
        %v6159 = vpack.c.b16 %v5862, %v5861
        %v6160 = vpack.c.b16 %v5864, %v5863
        %v6161 = vpack.c.b16 %v5866, %v5865
        %v6162 = vpack.c.b16 %v5868, %v5867
        %v6163 = vpack.c.b16 %v5870, %v5869
        %v6164 = vpack.c.b16 %v5872, %v5871
        %v6165 = vpack.c.b16 %v5874, %v5873
        %v6166 = vpack.c.b16 %v5876, %v5875
        %v6167 = vpack.c.b16 %v5878, %v5877
        %v6168 = vpack.c.b16 %v5880, %v5879
        %v6169 = vpack.c.b16 %v5882, %v5881
        %v6170 = vpack.c.b16 %v5884, %v5883
        %v6171 = vpack.c.b16 %v5886, %v5885
        %v6172 = vpack.c.b16 %v5888, %v5887
        %v6173 = vpack.c.b16 %v5890, %v5889
        %v6174 = vpack.c.b16 %v5892, %v5891
        %v6175 = vpack.c.b16 %v5894, %v5893
        %v6176 = vpack.c.b16 %v5896, %v5895
        %v6177 = vpack.c.b16 %v5898, %v5897
        %v6178 = vpack.c.b16 %v5900, %v5899
        %v6179 = vpack.c.b16 %v5902, %v5901
        %v6180 = vpack.c.b16 %v5904, %v5903
        %v6181 = vpack.c.b16 %v5906, %v5905
        %v6182 = vpack.c.b16 %v5908, %v5907
        %v6183 = vpack.c.b16 %v5910, %v5909
        %v6184 = vpack.c.b16 %v5912, %v5911
        %v6185 = vpack.c.b16 %v5914, %v5913
        %v6186 = vpack.c.b16 %v5916, %v5915
        %v6187 = vpack.c.b16 %v5918, %v5917
        %v6188 = vpack.c.b16 %v5920, %v5919
        %v6189 = vpack.c.b16 %v5922, %v5921
        %v6190 = vpack.c.b16 %v5924, %v5923
        %v6191 = vpack.c.b16 %v5926, %v5925
        %v6192 = vpack.c.b16 %v5928, %v5927
        %v6193 = vpack.c.b16 %v5930, %v5929
        %v6194 = vpack.c.b16 %v5932, %v5931
        %v6195 = vpack.c.b16 %v5934, %v5933
        %v6196 = vpack.c.b16 %v5936, %v5935
        %v6197 = vpack.c.b16 %v5938, %v5937
        %v6198 = vpack.c.b16 %v5940, %v5939
        %v6199 = vpack.c.b16 %v5942, %v5941
        %v6200 = vpack.c.b16 %v5944, %v5943
        %v6201 = vpack.c.b16 %v5946, %v5945
        %v6202 = vpack.c.b16 %v5948, %v5947
        %v6203 = vpack.c.b16 %v5950, %v5949
        %v6204 = vpack.c.b16 %v5952, %v5951
        %v6205 = vpack.c.b16 %v5954, %v5953
        %v6206 = vpack.c.b16 %v5956, %v5955
        %v6207 = vpack.c.b16 %v5958, %v5957
        %v6208 = vpack.c.b16 %v5960, %v5959
        %v6209 = vpack.c.b16 %v5962, %v5961
        %v6210 = vpack.c.b16 %v5964, %v5963
        %v6211 = vpack.c.b16 %v5966, %v5965
        %v6212 = vpack.c.b16 %v5968, %v5967
        %v6213 = vpack.c.b16 %v5970, %v5969
        %v6214 = vpack.c.b16 %v5972, %v5971
        %v6215 = vpack.c.b16 %v5974, %v5973
        %v6216 = vpack.c.b16 %v5976, %v5975
        %v6217 = vpack.c.b16 %v5978, %v5977
        %v6218 = vpack.c.b16 %v5980, %v5979
        %v6219 = vpack.c.b16 %v5982, %v5981
        %v6220 = vpack.c.b16 %v5984, %v5983
        %v6221 = vpack.c.b16 %v5986, %v5985
        %v6222 = vpack.c.b16 %v5988, %v5987
        %v6223 = vpack.c.b16 %v5990, %v5989
        %v6224 = vpack.c.b16 %v5992, %v5991
        %v6225 = vpack.c.b16 %v5994, %v5993
        %v6226 = vpack.c.b16 %v5996, %v5995
        %v6227 = vpack.c.b16 %v5998, %v5997
        %v6228 = vpack.c.b16 %v6000, %v5999
        %v6229 = vpack.c.b16 %v6002, %v6001
        %v6230 = vpack.c.b16 %v6004, %v6003
        %v6231 = vpack.c.b16 %v6006, %v6005
        %v6232 = vpack.c.b16 %v6008, %v6007
        %v6233 = vpack.c.b16 %v6010, %v6009
        %v6234 = vpack.c.b16 %v6012, %v6011
        %v6235 = vpack.c.b16 %v6014, %v6013
        %v6236 = vpack.c.b16 %v6016, %v6015
        %v6237 = vpack.c.b16 %v6018, %v6017
        %v6238 = vpack.c.b16 %v6020, %v6019
        %v6239 = vpack.c.b16 %v6022, %v6021
        %v6240 = vpack.c.b16 %v6024, %v6023
        %v6241 = vpack.c.b16 %v6026, %v6025
        %v6242 = vpack.c.b16 %v6028, %v6027
        %v6243 = vpack.c.b16 %v6030, %v6029
        %v6244 = vpack.c.b16 %v6032, %v6031
        %v6245 = vpack.c.b16 %v6034, %v6033
        %v6246 = vpack.c.b16 %v6036, %v6035
        %v6247 = vpack.c.b16 %v6038, %v6037
        %v6248 = vpack.c.b16 %v6040, %v6039
        %v6249 = vpack.c.b16 %v6042, %v6041
        %v6250 = vpack.c.b16 %v6044, %v6043
        %v6251 = vpack.c.b16 %v6046, %v6045
        %v6252 = vpack.c.b16 %v6048, %v6047
        %v6253 = vpack.c.b16 %v6050, %v6049
        %v6254 = vpack.c.b16 %v6052, %v6051
        %v6255 = vpack.c.b16 %v6054, %v6053
        %v6256 = vpack.c.b16 %v6056, %v6055
        %v6257 = vpack.c.b16 %v6058, %v6057
        %v6258 = vpack.c.b16 %v6060, %v6059
        %v6259 = vpack.c.b16 %v6062, %v6061
        %v6260 = vpack.c.b16 %v6064, %v6063
        %v6261 = vpack.c.b16 %v6066, %v6065
        %v6262 = vpack.c.b16 %v6068, %v6067
        %v6263 = vpack.c.b16 %v6070, %v6069
        %v6264 = vpack.c.b16 %v6072, %v6071
        %6457 = vst [vmem:[%s234] sm:$0xff] %v6073
        %6458 = vst [vmem:[%s234 + $0x8] sm:$0xff] %v6074
        %6459 = vst [vmem:[%s234 + $0x10] sm:$0xff] %v6075
        %6460 = vst [vmem:[%s234 + $0x18] sm:$0xff] %v6076
        %6461 = vst [vmem:[%s234 + $0x20] sm:$0xff] %v6077
        %6462 = vst [vmem:[%s234 + $0x28] sm:$0xff] %v6078
        %6463 = vst [vmem:[%s234 + $0x30] sm:$0xff] %v6079
        %6464 = vst [vmem:[%s234 + $0x38] sm:$0xff] %v6080
        %6465 = vst [vmem:[%s234 + $0x40] sm:$0xff] %v6081
        %6466 = vst [vmem:[%s234 + $0x48] sm:$0xff] %v6082
        %6467 = vst [vmem:[%s234 + $0x50] sm:$0xff] %v6083
        %6468 = vst [vmem:[%s234 + $0x58] sm:$0xff] %v6084
        %6469 = vst [vmem:[%s234 + $0x60] sm:$0xff] %v6085
        %6470 = vst [vmem:[%s234 + $0x68] sm:$0xff] %v6086
        %6471 = vst [vmem:[%s234 + $0x70] sm:$0xff] %v6087
        %6472 = vst [vmem:[%s234 + $0x78] sm:$0xff] %v6088
        %6473 = vst [vmem:[%s234 + $0x80] sm:$0xff] %v6089
        %6474 = vst [vmem:[%s234 + $0x88] sm:$0xff] %v6090
        %6475 = vst [vmem:[%s234 + $0x90] sm:$0xff] %v6091
        %6476 = vst [vmem:[%s234 + $0x98] sm:$0xff] %v6092
        %6477 = vst [vmem:[%s234 + $0xa0] sm:$0xff] %v6093
        %6478 = vst [vmem:[%s234 + $0xa8] sm:$0xff] %v6094
        %6479 = vst [vmem:[%s234 + $0xb0] sm:$0xff] %v6095
        %6480 = vst [vmem:[%s234 + $0xb8] sm:$0xff] %v6096
        %6481 = vst [vmem:[%s234 + $0xc0] sm:$0xff] %v6097
        %6482 = vst [vmem:[%s234 + $0xc8] sm:$0xff] %v6098
        %6483 = vst [vmem:[%s234 + $0xd0] sm:$0xff] %v6099
        %6484 = vst [vmem:[%s234 + $0xd8] sm:$0xff] %v6100
        %6485 = vst [vmem:[%s234 + $0xe0] sm:$0xff] %v6101
        %6486 = vst [vmem:[%s234 + $0xe8] sm:$0xff] %v6102
        %6487 = vst [vmem:[%s234 + $0xf0] sm:$0xff] %v6103
        %6488 = vst [vmem:[%s234 + $0xf8] sm:$0xff] %v6104
        %6489 = vst [vmem:[%s234 + $0x100] sm:$0xff] %v6105
        %6490 = vst [vmem:[%s234 + $0x108] sm:$0xff] %v6106
        %6491 = vst [vmem:[%s234 + $0x110] sm:$0xff] %v6107
        %6492 = vst [vmem:[%s234 + $0x118] sm:$0xff] %v6108
        %6493 = vst [vmem:[%s234 + $0x120] sm:$0xff] %v6109
        %6494 = vst [vmem:[%s234 + $0x128] sm:$0xff] %v6110
        %6495 = vst [vmem:[%s234 + $0x130] sm:$0xff] %v6111
        %6496 = vst [vmem:[%s234 + $0x138] sm:$0xff] %v6112
        %6497 = vst [vmem:[%s234 + $0x140] sm:$0xff] %v6113
        %6498 = vst [vmem:[%s234 + $0x148] sm:$0xff] %v6114
        %6499 = vst [vmem:[%s234 + $0x150] sm:$0xff] %v6115
        %6500 = vst [vmem:[%s234 + $0x158] sm:$0xff] %v6116
        %6501 = vst [vmem:[%s234 + $0x160] sm:$0xff] %v6117
        %6502 = vst [vmem:[%s234 + $0x168] sm:$0xff] %v6118
        %6503 = vst [vmem:[%s234 + $0x170] sm:$0xff] %v6119
        %6504 = vst [vmem:[%s234 + $0x178] sm:$0xff] %v6120
        %6505 = vst [vmem:[%s234 + $0x180] sm:$0xff] %v6121
        %6506 = vst [vmem:[%s234 + $0x188] sm:$0xff] %v6122
        %6507 = vst [vmem:[%s234 + $0x190] sm:$0xff] %v6123
        %6508 = vst [vmem:[%s234 + $0x198] sm:$0xff] %v6124
        %6509 = vst [vmem:[%s234 + $0x1a0] sm:$0xff] %v6125
        %6510 = vst [vmem:[%s234 + $0x1a8] sm:$0xff] %v6126
        %6511 = vst [vmem:[%s234 + $0x1b0] sm:$0xff] %v6127
        %6512 = vst [vmem:[%s234 + $0x1b8] sm:$0xff] %v6128
        %6513 = vst [vmem:[%s234 + $0x1c0] sm:$0xff] %v6129
        %6514 = vst [vmem:[%s234 + $0x1c8] sm:$0xff] %v6130
        %6515 = vst [vmem:[%s234 + $0x1d0] sm:$0xff] %v6131
        %6516 = vst [vmem:[%s234 + $0x1d8] sm:$0xff] %v6132
        %6517 = vst [vmem:[%s234 + $0x1e0] sm:$0xff] %v6133
        %6518 = vst [vmem:[%s234 + $0x1e8] sm:$0xff] %v6134
        %6519 = vst [vmem:[%s234 + $0x1f0] sm:$0xff] %v6135
        %6520 = vst [vmem:[%s234 + $0x1f8] sm:$0xff] %v6136
        %6521 = vst [vmem:[%s234 + $0x200] sm:$0xff] %v6137
        %6522 = vst [vmem:[%s234 + $0x208] sm:$0xff] %v6138
        %6523 = vst [vmem:[%s234 + $0x210] sm:$0xff] %v6139
        %6524 = vst [vmem:[%s234 + $0x218] sm:$0xff] %v6140
        %6525 = vst [vmem:[%s234 + $0x220] sm:$0xff] %v6141
        %6526 = vst [vmem:[%s234 + $0x228] sm:$0xff] %v6142
        %6527 = vst [vmem:[%s234 + $0x230] sm:$0xff] %v6143
        %6528 = vst [vmem:[%s234 + $0x238] sm:$0xff] %v6144
        %6529 = vst [vmem:[%s234 + $0x240] sm:$0xff] %v6145
        %6530 = vst [vmem:[%s234 + $0x248] sm:$0xff] %v6146
        %6531 = vst [vmem:[%s234 + $0x250] sm:$0xff] %v6147
        %6532 = vst [vmem:[%s234 + $0x258] sm:$0xff] %v6148
        %6533 = vst [vmem:[%s234 + $0x260] sm:$0xff] %v6149
        %6534 = vst [vmem:[%s234 + $0x268] sm:$0xff] %v6150
        %6535 = vst [vmem:[%s234 + $0x270] sm:$0xff] %v6151
        %6536 = vst [vmem:[%s234 + $0x278] sm:$0xff] %v6152
        %6537 = vst [vmem:[%s234 + $0x280] sm:$0xff] %v6153
        %6538 = vst [vmem:[%s234 + $0x288] sm:$0xff] %v6154
        %6539 = vst [vmem:[%s234 + $0x290] sm:$0xff] %v6155
        %6540 = vst [vmem:[%s234 + $0x298] sm:$0xff] %v6156
        %6541 = vst [vmem:[%s234 + $0x2a0] sm:$0xff] %v6157
        %6542 = vst [vmem:[%s234 + $0x2a8] sm:$0xff] %v6158
        %6543 = vst [vmem:[%s234 + $0x2b0] sm:$0xff] %v6159
        %6544 = vst [vmem:[%s234 + $0x2b8] sm:$0xff] %v6160
        %6545 = vst [vmem:[%s234 + $0x2c0] sm:$0xff] %v6161
        %6546 = vst [vmem:[%s234 + $0x2c8] sm:$0xff] %v6162
        %6547 = vst [vmem:[%s234 + $0x2d0] sm:$0xff] %v6163
        %6548 = vst [vmem:[%s234 + $0x2d8] sm:$0xff] %v6164
        %6549 = vst [vmem:[%s234 + $0x2e0] sm:$0xff] %v6165
        %6550 = vst [vmem:[%s234 + $0x2e8] sm:$0xff] %v6166
        %6551 = vst [vmem:[%s234 + $0x2f0] sm:$0xff] %v6167
        %6552 = vst [vmem:[%s234 + $0x2f8] sm:$0xff] %v6168
        %6553 = vst [vmem:[%s234 + $0x300] sm:$0xff] %v6169
        %6554 = vst [vmem:[%s234 + $0x308] sm:$0xff] %v6170
        %6555 = vst [vmem:[%s234 + $0x310] sm:$0xff] %v6171
        %6556 = vst [vmem:[%s234 + $0x318] sm:$0xff] %v6172
        %6557 = vst [vmem:[%s234 + $0x320] sm:$0xff] %v6173
        %6558 = vst [vmem:[%s234 + $0x328] sm:$0xff] %v6174
        %6559 = vst [vmem:[%s234 + $0x330] sm:$0xff] %v6175
        %6560 = vst [vmem:[%s234 + $0x338] sm:$0xff] %v6176
        %6561 = vst [vmem:[%s234 + $0x340] sm:$0xff] %v6177
        %6562 = vst [vmem:[%s234 + $0x348] sm:$0xff] %v6178
        %6563 = vst [vmem:[%s234 + $0x350] sm:$0xff] %v6179
        %6564 = vst [vmem:[%s234 + $0x358] sm:$0xff] %v6180
        %6565 = vst [vmem:[%s234 + $0x360] sm:$0xff] %v6181
        %6566 = vst [vmem:[%s234 + $0x368] sm:$0xff] %v6182
        %6567 = vst [vmem:[%s234 + $0x370] sm:$0xff] %v6183
        %6568 = vst [vmem:[%s234 + $0x378] sm:$0xff] %v6184
        %6569 = vst [vmem:[%s234 + $0x380] sm:$0xff] %v6185
        %6570 = vst [vmem:[%s234 + $0x388] sm:$0xff] %v6186
        %6571 = vst [vmem:[%s234 + $0x390] sm:$0xff] %v6187
        %6572 = vst [vmem:[%s234 + $0x398] sm:$0xff] %v6188
        %6573 = vst [vmem:[%s234 + $0x3a0] sm:$0xff] %v6189
        %6574 = vst [vmem:[%s234 + $0x3a8] sm:$0xff] %v6190
        %6575 = vst [vmem:[%s234 + $0x3b0] sm:$0xff] %v6191
        %6576 = vst [vmem:[%s234 + $0x3b8] sm:$0xff] %v6192
        %6577 = vst [vmem:[%s234 + $0x3c0] sm:$0xff] %v6193
        %6578 = vst [vmem:[%s234 + $0x3c8] sm:$0xff] %v6194
        %6579 = vst [vmem:[%s234 + $0x3d0] sm:$0xff] %v6195
        %6580 = vst [vmem:[%s234 + $0x3d8] sm:$0xff] %v6196
        %6581 = vst [vmem:[%s234 + $0x3e0] sm:$0xff] %v6197
        %6582 = vst [vmem:[%s234 + $0x3e8] sm:$0xff] %v6198
        %6583 = vst [vmem:[%s234 + $0x3f0] sm:$0xff] %v6199
        %6584 = vst [vmem:[%s234 + $0x3f8] sm:$0xff] %v6200
        %6585 = vst [vmem:[%s234 + $0x400] sm:$0xff] %v6201
        %6586 = vst [vmem:[%s234 + $0x408] sm:$0xff] %v6202
        %6587 = vst [vmem:[%s234 + $0x410] sm:$0xff] %v6203
        %6588 = vst [vmem:[%s234 + $0x418] sm:$0xff] %v6204
        %6589 = vst [vmem:[%s234 + $0x420] sm:$0xff] %v6205
        %6590 = vst [vmem:[%s234 + $0x428] sm:$0xff] %v6206
        %6591 = vst [vmem:[%s234 + $0x430] sm:$0xff] %v6207
        %6592 = vst [vmem:[%s234 + $0x438] sm:$0xff] %v6208
        %6593 = vst [vmem:[%s234 + $0x440] sm:$0xff] %v6209
        %6594 = vst [vmem:[%s234 + $0x448] sm:$0xff] %v6210
        %6595 = vst [vmem:[%s234 + $0x450] sm:$0xff] %v6211
        %6596 = vst [vmem:[%s234 + $0x458] sm:$0xff] %v6212
        %6597 = vst [vmem:[%s234 + $0x460] sm:$0xff] %v6213
        %6598 = vst [vmem:[%s234 + $0x468] sm:$0xff] %v6214
        %6599 = vst [vmem:[%s234 + $0x470] sm:$0xff] %v6215
        %6600 = vst [vmem:[%s234 + $0x478] sm:$0xff] %v6216
        %6601 = vst [vmem:[%s234 + $0x480] sm:$0xff] %v6217
        %6602 = vst [vmem:[%s234 + $0x488] sm:$0xff] %v6218
        %6603 = vst [vmem:[%s234 + $0x490] sm:$0xff] %v6219
        %6604 = vst [vmem:[%s234 + $0x498] sm:$0xff] %v6220
        %6605 = vst [vmem:[%s234 + $0x4a0] sm:$0xff] %v6221
        %6606 = vst [vmem:[%s234 + $0x4a8] sm:$0xff] %v6222
        %6607 = vst [vmem:[%s234 + $0x4b0] sm:$0xff] %v6223
        %6608 = vst [vmem:[%s234 + $0x4b8] sm:$0xff] %v6224
        %6609 = vst [vmem:[%s234 + $0x4c0] sm:$0xff] %v6225
        %6610 = vst [vmem:[%s234 + $0x4c8] sm:$0xff] %v6226
        %6611 = vst [vmem:[%s234 + $0x4d0] sm:$0xff] %v6227
        %6612 = vst [vmem:[%s234 + $0x4d8] sm:$0xff] %v6228
        %6613 = vst [vmem:[%s234 + $0x4e0] sm:$0xff] %v6229
        %6614 = vst [vmem:[%s234 + $0x4e8] sm:$0xff] %v6230
        %6615 = vst [vmem:[%s234 + $0x4f0] sm:$0xff] %v6231
        %6616 = vst [vmem:[%s234 + $0x4f8] sm:$0xff] %v6232
        %6617 = vst [vmem:[%s234 + $0x500] sm:$0xff] %v6233
        %6618 = vst [vmem:[%s234 + $0x508] sm:$0xff] %v6234
        %6619 = vst [vmem:[%s234 + $0x510] sm:$0xff] %v6235
        %6620 = vst [vmem:[%s234 + $0x518] sm:$0xff] %v6236
        %6621 = vst [vmem:[%s234 + $0x520] sm:$0xff] %v6237
        %6622 = vst [vmem:[%s234 + $0x528] sm:$0xff] %v6238
        %6623 = vst [vmem:[%s234 + $0x530] sm:$0xff] %v6239
        %6624 = vst [vmem:[%s234 + $0x538] sm:$0xff] %v6240
        %6625 = vst [vmem:[%s234 + $0x540] sm:$0xff] %v6241
        %6626 = vst [vmem:[%s234 + $0x548] sm:$0xff] %v6242
        %6627 = vst [vmem:[%s234 + $0x550] sm:$0xff] %v6243
        %6628 = vst [vmem:[%s234 + $0x558] sm:$0xff] %v6244
        %6629 = vst [vmem:[%s234 + $0x560] sm:$0xff] %v6245
        %6630 = vst [vmem:[%s234 + $0x568] sm:$0xff] %v6246
        %6631 = vst [vmem:[%s234 + $0x570] sm:$0xff] %v6247
        %6632 = vst [vmem:[%s234 + $0x578] sm:$0xff] %v6248
        %6633 = vst [vmem:[%s234 + $0x580] sm:$0xff] %v6249
        %6634 = vst [vmem:[%s234 + $0x588] sm:$0xff] %v6250
        %6635 = vst [vmem:[%s234 + $0x590] sm:$0xff] %v6251
        %6636 = vst [vmem:[%s234 + $0x598] sm:$0xff] %v6252
        %6637 = vst [vmem:[%s234 + $0x5a0] sm:$0xff] %v6253
        %6638 = vst [vmem:[%s234 + $0x5a8] sm:$0xff] %v6254
        %6639 = vst [vmem:[%s234 + $0x5b0] sm:$0xff] %v6255
        %6640 = vst [vmem:[%s234 + $0x5b8] sm:$0xff] %v6256
        %6641 = vst [vmem:[%s234 + $0x5c0] sm:$0xff] %v6257
        %6642 = vst [vmem:[%s234 + $0x5c8] sm:$0xff] %v6258
        %6643 = vst [vmem:[%s234 + $0x5d0] sm:$0xff] %v6259
        %6644 = vst [vmem:[%s234 + $0x5d8] sm:$0xff] %v6260
        %6645 = vst [vmem:[%s234 + $0x5e0] sm:$0xff] %v6261
        %6646 = vst [vmem:[%s234 + $0x5e8] sm:$0xff] %v6262
        %6647 = vst [vmem:[%s234 + $0x5f0] sm:$0xff] %v6263
        %6648 = vst [vmem:[%s234 + $0x5f8] sm:$0xff] %v6264
        %s6649 = sand.u32 %s113, 1
        %s6650 = scalar_lea.sflag [#allocation4], %s6649
        %s6651 = sand.u32 %s113, 1
        %s6652 = smul.addr %s6651, 1536
        %s6653 = scalar_lea.vmem [#allocation8], %s6652
        // Predicated region
        $region45: #{tpu_custom_call.1} parent=31 // pred_check
          %p6654 = pneg %p123
        $region46: #{tpu_custom_call.1} parent=31 // pred_check_branch
          %6656 = sbr.rel (%p6654) target = $region48
        $region47: #{tpu_custom_call.1} parent=31 // pred_region
          %s6657 = smul.u32 32, %s26
          %s6659 = ssub.s32 24576, 24576
          %6660 = vsyncadd %s6650, %s6659
          %s6661 = smul.addr %s6657, 12
          %s6662 = smul.addr %s25, 768
          %s6663 = sadd.s32 %s6661, %s6662
          %s6664 = smul.addr %s6663, 64
          %s6665 = scalar_lea.hbm %s3, %s6664
          %s6666 = sshll.u32 %s6653, 4
          %s6667 = int_to_ptr.vmem [resolvable:$true] %s6666
          %6672 = dma.vmem_to_hbm [thread:$0]  %s6667, 24576, %s6665, %s6650, 768, 768, 48
        $region48: #{tpu_custom_call.1} parent=31 // pred_fallthru
          _
      $region32: #{tpu_custom_call.1} parent=5 // pred_fallthru
        _
      %p6673 = scmp.le.s32.totalorder 2, %s16
      // Predicated region
      $region49: #{tpu_custom_call.1} parent=5 // pred_check
        %p6674 = pneg %p6673
      $region50: #{tpu_custom_call.1} parent=5 // pred_check_branch
        %6676 = sbr.rel (%p6674) target = $region52
      $region51: #{tpu_custom_call.1} parent=5 // pred_region
        %s6677 = ssub.s32 %s16, 2
        // Predicated region
        $region53: #{tpu_custom_call.1} parent=51 // pred_check
          %p6678 = pneg %p129
        $region54: #{tpu_custom_call.1} parent=51 // pred_check_branch
          %6680 = sbr.rel (%p6678) target = $region56
        $region55: #{tpu_custom_call.1} parent=51 // pred_region
          %s6681 = sand.u32 %s114, 1
          %s6682 = scalar_lea.sflag [#allocation4], %s6681
          %s6683 = sand.u32 %s114, 1
          %s6684 = smul.addr %s6683, 1536
          %s6685 = scalar_lea.vmem [#allocation8], %s6684
          %6686 = dma.done %s6682, 24576
        $region56: #{tpu_custom_call.1} parent=51 // pred_fallthru
          _
      $region52: #{tpu_custom_call.1} parent=5 // pred_fallthru
        _
    $region6: #{tpu_custom_call.1} parent=1 // loop_footer
      %s20 = sadd.s32 1, %s16
    $region7: #{tpu_custom_call.1} parent=1 // loop_footer_branch
      %15 = sbr.rel target = $region3
    $region8: #{tpu_custom_call.1} parent=1 // loop_exit
      _
    %6687 = vsyncpa [#allocation3], 1
    %s6688 = scalar_lea.sflag [#allocation3], 1
    %6689 = vsyncpa %s6688, 1
    %6690 = vsyncpa [#allocation6], 1
    %6691 = vsyncpa [#allocation4], 1
    %s6692 = scalar_lea.sflag [#allocation4], 1
    %6693 = vsyncpa %s6692, 1

</llo_original>
